<compile_context>
chip_gen: v7x
topology: tpu7x:2x2x1
jax: 0.10.0
libtpu: 0.0.40
codegen_flags: <defaults>
</compile_context>

<pallas_src>
import functools

import jax
import jax.numpy as jnp
from jax.experimental import pallas as pl
from jax.experimental.pallas import tpu as pltpu


def _round_up(v, m):
    return ((v + m - 1) // m) * m


def _pick_tm(m_lay, block_m):
    """Spatial tile: multiple of 16, <= block_m, not (much) larger than M."""
    tm = max(16, (int(block_m) // 16) * 16)
    return min(tm, _round_up(m_lay, 16))


def _device_kind():
    try:
        return jax.devices()[0].device_kind.lower()
    except Exception:  # pragma: no cover
        return ""


def _base_conv_kernel(taps, g, cin_p, tm,
                      x_hbm, w_ref, sc_ref, bi_ref, o_ref,
                      xbuf, sems, *fused):
    """One grid step = one (batch, spatial-tile) block.

    taps: tuple of (plane_index, static row offset) for every (ky, kx) tap.
    g:    K-fusion group size (1 = plain accumulating matmuls, k = kx-row fusion).
    """
    b = pl.program_id(0)
    j = pl.program_id(1)
    nj = pl.num_programs(1)
    slab_rows = xbuf.shape[2]
    cout_p = o_ref.shape[-1]

    def dma(tile, slot):
        # haloed slab of all needed planes for spatial tile `tile`
        return pltpu.make_async_copy(
            x_hbm.at[b, :, pl.ds(tile * tm, slab_rows), :],
            xbuf.at[slot],
            sems.at[slot])

    # Prime the pipeline at the first spatial tile of each batch element.
    @pl.when(j == 0)
    def _():
        dma(0, 0).start()

    slot = j % 2

    # Prefetch the next tile into the other buffer while we compute this one.
    @pl.when(j + 1 < nj)
    def _():
        dma(j + 1, 1 - slot).start()

    dma(j, slot).wait()

    acc = jnp.zeros((tm, cout_p), jnp.float32)
    if g == 1:
        # k*k accumulating matmuls, K = Cin_p (v5e / large Cin path).
        for t, (rp, off) in enumerate(taps):
            tap = xbuf[slot, rp, pl.ds(off, tm), :]
            acc = acc + jnp.dot(tap, w_ref[t], preferred_element_type=jnp.float32)
    else:
        # kx-fused path: assemble (TM, g*Cin_p) in a persistent scratch (no fresh
        # concatenate allocation), K = g*Cin_p per matmul (v6e/v7x, 256-deep MXU).
        fused_ref = fused[0]
        n_groups = len(taps) // g
        for gi in range(n_groups):
            for u in range(g):
                rp, off = taps[gi * g + u]
                fused_ref[:, u * cin_p:(u + 1) * cin_p] = xbuf[slot, rp, pl.ds(off, tm), :]
            acc = acc + jnp.dot(fused_ref[...], w_ref[gi],
                                preferred_element_type=jnp.float32)

    # Folded BatchNorm (+ optional conv bias) and LeakyReLU(0.1), all in f32.
    out = acc * sc_ref[...] + bi_ref[...]
    out = jnp.where(out > 0.0, out, 0.1 * out)
    o_ref[0] = out.astype(o_ref.dtype)


def base_conv_pallas(x_nchw, weight, gamma, beta, mean, var, conv_bias=None, *,
                     stride=1, eps=1e-3, block_m=512, out_dtype=jnp.bfloat16):
    """Forward pass of BaseConv.  weight is PyTorch-layout (Cout, Cin, k, k).

    Note: activations/weights are cast to bf16 for the MXU and the output is stored
    in bf16 by default (pass out_dtype=jnp.float32 for an f32 result); expect ~1e-3
    relative deviation vs. a float32 PyTorch Conv2d.
    """
    N, Cin, H, W = x_nchw.shape
    Cout, Cin_w, kh, kw = weight.shape
    assert Cin_w == Cin, "groups != 1 not supported"
    assert kh == kw and kh % 2 == 1, "odd square kernels only"
    k, s = int(kh), int(stride)
    p = (k - 1) // 2

    kind = _device_kind()
    mxu_depth = 256 if ("v6" in kind or "v7" in kind) else 128

    Cin_p = _round_up(max(Cin, 1), 128)
    Cout_p = _round_up(max(Cout, 1), 128)

    # ---- space-to-depth geometry: plane (rh, rw)[hq, wq] = xpad[hq*s+rh, wq*s+rw] ----
    Hp = _round_up(H + 2 * p, s)
    Wpad = _round_up(W + 2 * p, s)
    Hq, Wq = Hp // s, Wpad // s
    Ho = (H - 1) // s + 1
    Wo = (W - 1) // s + 1
    mr = min(k, s)                      # only residues < mr are ever read
    NP = mr * mr

    # Output laid out as (Ho, Wq) rows (Wq - Wo throwaway columns per row), flattened.
    M_lay = Ho * Wq
    TM = _pick_tm(M_lay, block_m)
    M_pad = _round_up(M_lay, TM)
    n_tiles = M_pad // TM

    q = (k - 1) // s
    max_off = q * Wq + q                # largest static tap offset within a plane
    SLAB = _round_up(TM + max_off, 8)   # haloed slab rows per plane per tile
    Lq = max(Hq * Wq, (n_tiles - 1) * TM + SLAB)

    # Tap (ky, kx) -> (plane index, static row offset) in the plane layout.
    taps = tuple(((ky % s) * mr + (kx % s), (ky // s) * Wq + (kx // s))
                 for ky in range(k) for kx in range(k))

    fuse = (k > 1) and (Cin_p < mxu_depth) and (k * Cin_p <= 4 * mxu_depth)
    g = k if fuse else 1

    # ---- activations: NCHW -> space-to-depth planes (N, NP, Lq, Cin_p), bf16 ----
    x = jnp.transpose(x_nchw, (0, 2, 3, 1)).astype(jnp.bfloat16)        # NHWC
    x = jnp.pad(x, ((0, 0), (p, Hp - H - p), (p, Wpad - W - p), (0, Cin_p - Cin)))
    x = x.reshape(N, Hq, s, Wq, s, Cin_p)
    x = jnp.transpose(x, (0, 2, 4, 1, 3, 5))[:, :mr, :mr]               # (N,mr,mr,Hq,Wq,C)
    x = x.reshape(N, NP, Hq * Wq, Cin_p)
    x = jnp.pad(x, ((0, 0), (0, 0), (0, Lq - Hq * Wq), (0, 0)))

    # ---- weights: (Cout, Cin, k, k) -> (k*k/g, g*Cin_p, Cout_p) bf16 ----
    w = jnp.transpose(weight, (2, 3, 1, 0))                             # (k,k,Cin,Cout)
    w = jnp.pad(w, ((0, 0), (0, 0), (0, Cin_p - Cin), (0, Cout_p - Cout)))
    w = w.reshape((k * k) // g, g * Cin_p, Cout_p).astype(jnp.bfloat16)

    # ---- fold BN (inference, running stats) + optional conv bias ----
    scale = (gamma / jnp.sqrt(var + eps)).astype(jnp.float32)
    bias0 = jnp.zeros((Cout,), jnp.float32) if conv_bias is None else conv_bias.astype(jnp.float32)
    bias = beta.astype(jnp.float32) + scale * (bias0 - mean.astype(jnp.float32))
    scale = jnp.pad(scale, (0, Cout_p - Cout)).reshape(1, Cout_p)
    bias = jnp.pad(bias, (0, Cout_p - Cout)).reshape(1, Cout_p)

    # ---- VMEM budget: per-step footprint (+25-40% margin), generation-aware cap ----
    out_bytes = jnp.dtype(out_dtype).itemsize
    est = (2 * NP * SLAB * Cin_p * 2            # double-buffered activation slab
           + (k * k) * Cin_p * Cout_p * 2       # weights (single-buffered)
           + 4 * Cout_p * 4                     # scale / bias
           + 2 * TM * Cout_p * out_bytes        # double-buffered output block
           + TM * Cout_p * 4                    # f32 accumulator
           + TM * g * Cin_p * 2                 # fused scratch / tap transient
           + 2 * TM * Cin_p * 2)                # transient headroom
    if "v7" in kind:
        cap = 44 * 2 ** 20                      # leave headroom on 64 MiB/TC v7x
    elif "v6" in kind or "v5e" in kind or "v5 lite" in kind or "v5lite" in kind:
        cap = 100 * 2 ** 20                     # 128 MiB physical on v5e/v6e
    else:
        cap = 32 * 2 ** 20
    vmem_limit = int(min(cap, max(16 * 2 ** 20, int(1.4 * est))))

    kernel = functools.partial(_base_conv_kernel, taps, g, Cin_p, TM)
    out_shape = jax.ShapeDtypeStruct((N, M_pad, Cout_p), out_dtype)
    scratch = [pltpu.VMEM((2, NP, SLAB, Cin_p), jnp.bfloat16),
               pltpu.SemaphoreType.DMA((2,))]
    if g > 1:
        scratch.append(pltpu.VMEM((TM, g * Cin_p), jnp.bfloat16))

    def run(single_buffer_invariants):
        pm = {"pipeline_mode": pl.Buffered(1)} if single_buffer_invariants else {}
        in_specs = [
            pl.BlockSpec(memory_space=pl.ANY),                         # raw HBM, manual DMA
            pl.BlockSpec(((k * k) // g, g * Cin_p, Cout_p), lambda b, j: (0, 0, 0), **pm),
            pl.BlockSpec((1, Cout_p), lambda b, j: (0, 0), **pm),
            pl.BlockSpec((1, Cout_p), lambda b, j: (0, 0), **pm),
        ]
        return pl.pallas_call(
            kernel,
            out_shape=out_shape,
            grid=(N, n_tiles),
            in_specs=in_specs,
            out_specs=pl.BlockSpec((1, TM, Cout_p), lambda b, j: (b, j, 0)),
            scratch_shapes=scratch,
            compiler_params=pltpu.CompilerParams(
                dimension_semantics=("parallel", "arbitrary"),
                vmem_limit_bytes=vmem_limit),
        )(x, w, scale, bias)

    try:
        out = run(True)
    except Exception:
        # pl.Buffered(1) single-buffering not supported on this JAX/backend:
        # fall back to default double-buffered invariant operands.
        out = run(False)

    out = out[:, :M_lay, :Cout].reshape(N, Ho, Wq, Cout)[:, :, :Wo, :]
    return jnp.transpose(out, (0, 3, 1, 2))                            # NCHW, out_dtype


def ref_forward(x, weight, gamma, beta, mean, var, conv_bias=None, *,
                stride=1, eps=1e-3):
    """Pure-JAX reference (Conv2d + BatchNorm2d(eval) + LeakyReLU(0.1)).

    Inputs are rounded to bf16 to match the kernel's MXU precision.
    """
    xb = x.astype(jnp.bfloat16).astype(jnp.float32)
    wb = weight.astype(jnp.bfloat16).astype(jnp.float32)
    k = weight.shape[-1]
    p = (k - 1) // 2
    y = jax.lax.conv_general_dilated(
        xb, wb, (stride, stride), ((p, p), (p, p)),
        dimension_numbers=('NCHW', 'OIHW', 'NCHW'),
        precision=jax.lax.Precision.HIGHEST)
    if conv_bias is not None:
        y = y + conv_bias.reshape(1, -1, 1, 1)
    sc = (gamma / jnp.sqrt(var + eps)).reshape(1, -1, 1, 1)
    bi = (beta - (gamma / jnp.sqrt(var + eps)) * mean).reshape(1, -1, 1, 1)
    y = y * sc + bi
    return jnp.where(y > 0, y, 0.1 * y)


if __name__ == "__main__":
    key = jax.random.PRNGKey(0)
    keys = jax.random.split(key, 12)

    N, Cin, H, W = 2, 4, 16, 16

    # ---- Case 1: BaseConv(4, 8, ksize=3, stride=1); block_m=128 -> 3 pipelined tiles ----
    Cout, ksize, stride = 8, 3, 1
    x = jax.random.normal(keys[0], (N, Cin, H, W), jnp.float32)
    weight = 0.2 * jax.random.normal(keys[1], (Cout, Cin, ksize, ksize), jnp.float32)
    gamma = 1.0 + 0.1 * jax.random.normal(keys[2], (Cout,), jnp.float32)
    beta = 0.1 * jax.random.normal(keys[3], (Cout,), jnp.float32)
    mean = 0.1 * jax.random.normal(keys[4], (Cout,), jnp.float32)
    var = jnp.abs(jax.random.normal(keys[5], (Cout,), jnp.float32)) + 0.5

    out = base_conv_pallas(x, weight, gamma, beta, mean, var, stride=stride, block_m=128)
    out = jax.block_until_ready(out)
    ref = ref_forward(x, weight, gamma, beta, mean, var, stride=stride)
    assert out.shape == ref.shape == (N, Cout, H, W), out.shape
    out_f = out.astype(jnp.float32)
    err1 = float(jnp.max(jnp.abs(out_f - ref)))
    # tolerance covers the bf16 output store (<= ~0.4% rel) + accumulation-order noise
    if not bool(jnp.allclose(out_f, ref, atol=2e-2, rtol=2e-2)):
        raise AssertionError(f"case1: Pallas/reference mismatch, max abs err = {err1}")

    # ---- Case 2: BaseConv(4, 16, ksize=1, stride=2) — in-kernel strided path ----
    Cout2, ksize2, stride2 = 16, 1, 2
    weight2 = 0.2 * jax.random.normal(keys[6], (Cout2, Cin, ksize2, ksize2), jnp.float32)
    gamma2 = 1.0 + 0.1 * jax.random.normal(keys[7], (Cout2,), jnp.float32)
    beta2 = 0.1 * jax.random.normal(keys[8], (Cout2,), jnp.float32)
    mean2 = 0.1 * jax.random.normal(keys[9], (Cout2,), jnp.float32)
    var2 = jnp.abs(jax.random.normal(keys[10], (Cout2,), jnp.float32)) + 0.5

    out2 = base_conv_pallas(x, weight2, gamma2, beta2, mean2, var2, stride=stride2)
    out2 = jax.block_until_ready(out2)
    ref2 = ref_forward(x, weight2, gamma2, beta2, mean2, var2, stride=stride2)
    assert out2.shape == ref2.shape == (N, Cout2, H // 2, W // 2), out2.shape
    out2_f = out2.astype(jnp.float32)
    err2 = float(jnp.max(jnp.abs(out2_f - ref2)))
    if not bool(jnp.allclose(out2_f, ref2, atol=2e-2, rtol=2e-2)):
        raise AssertionError(f"case2: Pallas/reference mismatch, max abs err = {err2}")

    print("KERNEL_OK")
</pallas_src>

<mosaic_0001>
module attributes {stable_mosaic.version = 11 : i64} {
  func.func @_base_conv_kernel(%arg0: i32, %arg1: i32, %arg2: memref<2x1x424x128xbf16, #tpu.memory_space<any>>, %arg3: memref<9x128x128xbf16, #tpu.memory_space<vmem>>, %arg4: memref<1x128xf32, #tpu.memory_space<vmem>>, %arg5: memref<1x128xf32, #tpu.memory_space<vmem>>, %arg6: memref<1x128x128xbf16, #tpu.memory_space<vmem>>, %arg7: memref<2x1x168x128xbf16, #tpu.memory_space<vmem>>, %arg8: memref<2x!tpu.dma_semaphore, #tpu.memory_space<semaphore_mem>>) attributes {dimension_semantics = [#tpu.dimension_semantics<parallel>, #tpu.dimension_semantics<arbitrary>], iteration_bounds = array<i64: 2, 3>, scalar_prefetch = 0 : i64, scratch_operands = 2 : i64, tpu.core_type = #tpu.core_type<tc>, window_params = [{}, {pipeline_mode = #tpu.pipeline_mode<synchronous>, transform_indices = @transform_1, window_bounds = array<i64: 9, 128, 128>}, {pipeline_mode = #tpu.pipeline_mode<synchronous>, transform_indices = @transform_2, window_bounds = array<i64: 1, 128>}, {pipeline_mode = #tpu.pipeline_mode<synchronous>, transform_indices = @transform_3, window_bounds = array<i64: 1, 128>}, {transform_indices = @transform_4, window_bounds = array<i64: 1, 128, 128>}]} {
    %c0_i32 = arith.constant 0 : i32
    %0 = arith.cmpi eq, %arg1, %c0_i32 : i32
    %1 = arith.extui %0 : i1 to i32
    %c0_i32_0 = arith.constant 0 : i32
    %2 = arith.cmpi ne, %1, %c0_i32_0 : i32
    scf.if %2 {
      %c0_i32_69 = arith.constant 0 : i32
      %c0_i32_70 = arith.constant 0 : i32
      %c0_i32_71 = arith.constant 0 : i32
      %c0_i32_72 = arith.constant 0 : i32
      %c0_i32_73 = arith.constant 0 : i32
      %103 = tpu.memref_slice %arg2[%arg0, %c0_i32_71, %c0_i32_72, %c0_i32_73] : memref<2x1x424x128xbf16, #tpu.memory_space<any>> -> memref<1x1x168x128xbf16, #tpu.memory_space<any>>
      %104 = tpu.memref_squeeze %103 : memref<1x1x168x128xbf16, #tpu.memory_space<any>> -> memref<1x168x128xbf16, #tpu.memory_space<any>>
      %c0_i32_74 = arith.constant 0 : i32
      %c0_i32_75 = arith.constant 0 : i32
      %c0_i32_76 = arith.constant 0 : i32
      %105 = tpu.memref_slice %arg7[%c0_i32_69, %c0_i32_74, %c0_i32_75, %c0_i32_76] : memref<2x1x168x128xbf16, #tpu.memory_space<vmem>> -> memref<1x1x168x128xbf16, #tpu.memory_space<vmem>>
      %106 = tpu.memref_squeeze %105 : memref<1x1x168x128xbf16, #tpu.memory_space<vmem>> -> memref<1x168x128xbf16, #tpu.memory_space<vmem>>
      %107 = tpu.memref_slice %arg8[%c0_i32_70] : memref<2x!tpu.dma_semaphore, #tpu.memory_space<semaphore_mem>> -> memref<1x!tpu.dma_semaphore, #tpu.memory_space<semaphore_mem>>
      %108 = tpu.memref_squeeze %107 : memref<1x!tpu.dma_semaphore, #tpu.memory_space<semaphore_mem>> -> memref<!tpu.dma_semaphore, #tpu.memory_space<semaphore_mem>>
      tpu.enqueue_dma source(%104 : memref<1x168x128xbf16, #tpu.memory_space<any>>) target(%106 : memref<1x168x128xbf16, #tpu.memory_space<vmem>>) target_semaphore(%108 : memref<!tpu.dma_semaphore, #tpu.memory_space<semaphore_mem>>)
    } else {
    }
    %c2_i32 = arith.constant 2 : i32
    %c0_i32_1 = arith.constant 0 : i32
    %3 = arith.cmpi eq, %c2_i32, %c0_i32_1 : i32
    %c1_i32 = arith.constant 1 : i32
    %4 = arith.select %3, %c1_i32, %c2_i32 : i32
    %5 = arith.remsi %arg1, %4 : i32
    %c0_i32_2 = arith.constant 0 : i32
    %6 = arith.cmpi ne, %5, %c0_i32_2 : i32
    %c0_i32_3 = arith.constant 0 : i32
    %7 = arith.cmpi slt, %5, %c0_i32_3 : i32
    %c0_i32_4 = arith.constant 0 : i32
    %8 = arith.cmpi slt, %4, %c0_i32_4 : i32
    %9 = arith.xori %7, %8 : i1
    %10 = arith.andi %9, %6 : i1
    %11 = arith.addi %5, %4 : i32
    %12 = arith.select %10, %11, %5 : i32
    %c1_i32_5 = arith.constant 1 : i32
    %13 = arith.addi %arg1, %c1_i32_5 : i32
    %c3_i32 = arith.constant 3 : i32
    %14 = arith.cmpi slt, %13, %c3_i32 : i32
    %15 = arith.extui %14 : i1 to i32
    %c0_i32_6 = arith.constant 0 : i32
    %16 = arith.cmpi ne, %15, %c0_i32_6 : i32
    scf.if %16 {
      %c1_i32_69 = arith.constant 1 : i32
      %103 = arith.addi %arg1, %c1_i32_69 : i32
      %c1_i32_70 = arith.constant 1 : i32
      %104 = arith.subi %c1_i32_70, %12 : i32
      %c128_i32_71 = arith.constant 128 : i32
      %105 = arith.muli %103, %c128_i32_71 : i32
      %c0_i32_72 = arith.constant 0 : i32
      %c0_i32_73 = arith.constant 0 : i32
      %106 = tpu.memref_slice %arg2[%arg0, %c0_i32_72, %105, %c0_i32_73] : memref<2x1x424x128xbf16, #tpu.memory_space<any>> -> memref<1x1x168x128xbf16, #tpu.memory_space<any>>
      %107 = tpu.memref_squeeze %106 : memref<1x1x168x128xbf16, #tpu.memory_space<any>> -> memref<1x168x128xbf16, #tpu.memory_space<any>>
      %c0_i32_74 = arith.constant 0 : i32
      %c0_i32_75 = arith.constant 0 : i32
      %c0_i32_76 = arith.constant 0 : i32
      %108 = tpu.memref_slice %arg7[%104, %c0_i32_74, %c0_i32_75, %c0_i32_76] : memref<2x1x168x128xbf16, #tpu.memory_space<vmem>> -> memref<1x1x168x128xbf16, #tpu.memory_space<vmem>>
      %109 = tpu.memref_squeeze %108 : memref<1x1x168x128xbf16, #tpu.memory_space<vmem>> -> memref<1x168x128xbf16, #tpu.memory_space<vmem>>
      %110 = tpu.memref_slice %arg8[%104] : memref<2x!tpu.dma_semaphore, #tpu.memory_space<semaphore_mem>> -> memref<1x!tpu.dma_semaphore, #tpu.memory_space<semaphore_mem>>
      %111 = tpu.memref_squeeze %110 : memref<1x!tpu.dma_semaphore, #tpu.memory_space<semaphore_mem>> -> memref<!tpu.dma_semaphore, #tpu.memory_space<semaphore_mem>>
      tpu.enqueue_dma source(%107 : memref<1x168x128xbf16, #tpu.memory_space<any>>) target(%109 : memref<1x168x128xbf16, #tpu.memory_space<vmem>>) target_semaphore(%111 : memref<!tpu.dma_semaphore, #tpu.memory_space<semaphore_mem>>)
    } else {
    }
    %c128_i32 = arith.constant 128 : i32
    %17 = arith.muli %arg1, %c128_i32 : i32
    %c0_i32_7 = arith.constant 0 : i32
    %c0_i32_8 = arith.constant 0 : i32
    %18 = tpu.memref_slice %arg2[%arg0, %c0_i32_7, %17, %c0_i32_8] : memref<2x1x424x128xbf16, #tpu.memory_space<any>> -> memref<1x1x168x128xbf16, #tpu.memory_space<any>>
    %19 = tpu.memref_squeeze %18 : memref<1x1x168x128xbf16, #tpu.memory_space<any>> -> memref<1x168x128xbf16, #tpu.memory_space<any>>
    %c0_i32_9 = arith.constant 0 : i32
    %c0_i32_10 = arith.constant 0 : i32
    %c0_i32_11 = arith.constant 0 : i32
    %20 = tpu.memref_slice %arg7[%12, %c0_i32_9, %c0_i32_10, %c0_i32_11] : memref<2x1x168x128xbf16, #tpu.memory_space<vmem>> -> memref<1x1x168x128xbf16, #tpu.memory_space<vmem>>
    %21 = tpu.memref_squeeze %20 : memref<1x1x168x128xbf16, #tpu.memory_space<vmem>> -> memref<1x168x128xbf16, #tpu.memory_space<vmem>>
    %22 = tpu.memref_slice %arg8[%12] : memref<2x!tpu.dma_semaphore, #tpu.memory_space<semaphore_mem>> -> memref<1x!tpu.dma_semaphore, #tpu.memory_space<semaphore_mem>>
    %23 = tpu.memref_squeeze %22 : memref<1x!tpu.dma_semaphore, #tpu.memory_space<semaphore_mem>> -> memref<!tpu.dma_semaphore, #tpu.memory_space<semaphore_mem>>
    tpu.wait_dma2 semaphore(%23 : memref<!tpu.dma_semaphore, #tpu.memory_space<semaphore_mem>>) src(%19 : memref<1x168x128xbf16, #tpu.memory_space<any>>) dst(%21 : memref<1x168x128xbf16, #tpu.memory_space<vmem>>)
    %cst = arith.constant 0.000000e+00 : f32
    %24 = vector.broadcast %cst : f32 to vector<128x128xf32>
    %25 = arith.index_cast %12 : i32 to index
    %c0 = arith.constant 0 : index
    %c0_12 = arith.constant 0 : index
    %c0_13 = arith.constant 0 : index
    %26 = vector.load %arg7[%25, %c0, %c0_12, %c0_13] : memref<2x1x168x128xbf16, #tpu.memory_space<vmem>>, vector<1x1x128x128xbf16>
    %27 = vector.shape_cast %26 : vector<1x1x128x128xbf16> to vector<128x128xbf16>
    %c0_14 = arith.constant 0 : index
    %c0_15 = arith.constant 0 : index
    %c0_16 = arith.constant 0 : index
    %28 = vector.load %arg3[%c0_14, %c0_15, %c0_16] : memref<9x128x128xbf16, #tpu.memory_space<vmem>>, vector<1x128x128xbf16>
    %29 = vector.shape_cast %28 : vector<1x128x128xbf16> to vector<128x128xbf16>
    %cst_17 = arith.constant dense<0.000000e+00> : vector<128x128xf32>
    %30 = tpu.matmul %27, %29, %cst_17 {dimension_numbers = #tpu.dot_dimension_numbers<[1], [0], [0], [1], [0, 0, 1, 1], [], []>} : vector<128x128xbf16>, vector<128x128xbf16>, vector<128x128xf32> -> vector<128x128xf32>
    %31 = arith.addf %24, %30 : vector<128x128xf32>
    %32 = arith.index_cast %12 : i32 to index
    %c0_18 = arith.constant 0 : index
    %c1 = arith.constant 1 : index
    %c0_19 = arith.constant 0 : index
    %33 = vector.load %arg7[%32, %c0_18, %c1, %c0_19] : memref<2x1x168x128xbf16, #tpu.memory_space<vmem>>, vector<1x1x128x128xbf16>
    %34 = vector.shape_cast %33 : vector<1x1x128x128xbf16> to vector<128x128xbf16>
    %c1_20 = arith.constant 1 : index
    %c0_21 = arith.constant 0 : index
    %c0_22 = arith.constant 0 : index
    %35 = vector.load %arg3[%c1_20, %c0_21, %c0_22] : memref<9x128x128xbf16, #tpu.memory_space<vmem>>, vector<1x128x128xbf16>
    %36 = vector.shape_cast %35 : vector<1x128x128xbf16> to vector<128x128xbf16>
    %cst_23 = arith.constant dense<0.000000e+00> : vector<128x128xf32>
    %37 = tpu.matmul %34, %36, %cst_23 {dimension_numbers = #tpu.dot_dimension_numbers<[1], [0], [0], [1], [0, 0, 1, 1], [], []>} : vector<128x128xbf16>, vector<128x128xbf16>, vector<128x128xf32> -> vector<128x128xf32>
    %38 = arith.addf %31, %37 : vector<128x128xf32>
    %39 = arith.index_cast %12 : i32 to index
    %c0_24 = arith.constant 0 : index
    %c2 = arith.constant 2 : index
    %c0_25 = arith.constant 0 : index
    %40 = vector.load %arg7[%39, %c0_24, %c2, %c0_25] : memref<2x1x168x128xbf16, #tpu.memory_space<vmem>>, vector<1x1x128x128xbf16>
    %41 = vector.shape_cast %40 : vector<1x1x128x128xbf16> to vector<128x128xbf16>
    %c2_26 = arith.constant 2 : index
    %c0_27 = arith.constant 0 : index
    %c0_28 = arith.constant 0 : index
    %42 = vector.load %arg3[%c2_26, %c0_27, %c0_28] : memref<9x128x128xbf16, #tpu.memory_space<vmem>>, vector<1x128x128xbf16>
    %43 = vector.shape_cast %42 : vector<1x128x128xbf16> to vector<128x128xbf16>
    %cst_29 = arith.constant dense<0.000000e+00> : vector<128x128xf32>
    %44 = tpu.matmul %41, %43, %cst_29 {dimension_numbers = #tpu.dot_dimension_numbers<[1], [0], [0], [1], [0, 0, 1, 1], [], []>} : vector<128x128xbf16>, vector<128x128xbf16>, vector<128x128xf32> -> vector<128x128xf32>
    %45 = arith.addf %38, %44 : vector<128x128xf32>
    %46 = arith.index_cast %12 : i32 to index
    %c0_30 = arith.constant 0 : index
    %c18 = arith.constant 18 : index
    %c0_31 = arith.constant 0 : index
    %47 = vector.load %arg7[%46, %c0_30, %c18, %c0_31] : memref<2x1x168x128xbf16, #tpu.memory_space<vmem>>, vector<1x1x128x128xbf16>
    %48 = vector.shape_cast %47 : vector<1x1x128x128xbf16> to vector<128x128xbf16>
    %c3 = arith.constant 3 : index
    %c0_32 = arith.constant 0 : index
    %c0_33 = arith.constant 0 : index
    %49 = vector.load %arg3[%c3, %c0_32, %c0_33] : memref<9x128x128xbf16, #tpu.memory_space<vmem>>, vector<1x128x128xbf16>
    %50 = vector.shape_cast %49 : vector<1x128x128xbf16> to vector<128x128xbf16>
    %cst_34 = arith.constant dense<0.000000e+00> : vector<128x128xf32>
    %51 = tpu.matmul %48, %50, %cst_34 {dimension_numbers = #tpu.dot_dimension_numbers<[1], [0], [0], [1], [0, 0, 1, 1], [], []>} : vector<128x128xbf16>, vector<128x128xbf16>, vector<128x128xf32> -> vector<128x128xf32>
    %52 = arith.addf %45, %51 : vector<128x128xf32>
    %53 = arith.index_cast %12 : i32 to index
    %c0_35 = arith.constant 0 : index
    %c19 = arith.constant 19 : index
    %c0_36 = arith.constant 0 : index
    %54 = vector.load %arg7[%53, %c0_35, %c19, %c0_36] : memref<2x1x168x128xbf16, #tpu.memory_space<vmem>>, vector<1x1x128x128xbf16>
    %55 = vector.shape_cast %54 : vector<1x1x128x128xbf16> to vector<128x128xbf16>
    %c4 = arith.constant 4 : index
    %c0_37 = arith.constant 0 : index
    %c0_38 = arith.constant 0 : index
    %56 = vector.load %arg3[%c4, %c0_37, %c0_38] : memref<9x128x128xbf16, #tpu.memory_space<vmem>>, vector<1x128x128xbf16>
    %57 = vector.shape_cast %56 : vector<1x128x128xbf16> to vector<128x128xbf16>
    %cst_39 = arith.constant dense<0.000000e+00> : vector<128x128xf32>
    %58 = tpu.matmul %55, %57, %cst_39 {dimension_numbers = #tpu.dot_dimension_numbers<[1], [0], [0], [1], [0, 0, 1, 1], [], []>} : vector<128x128xbf16>, vector<128x128xbf16>, vector<128x128xf32> -> vector<128x128xf32>
    %59 = arith.addf %52, %58 : vector<128x128xf32>
    %60 = arith.index_cast %12 : i32 to index
    %c0_40 = arith.constant 0 : index
    %c20 = arith.constant 20 : index
    %c0_41 = arith.constant 0 : index
    %61 = vector.load %arg7[%60, %c0_40, %c20, %c0_41] : memref<2x1x168x128xbf16, #tpu.memory_space<vmem>>, vector<1x1x128x128xbf16>
    %62 = vector.shape_cast %61 : vector<1x1x128x128xbf16> to vector<128x128xbf16>
    %c5 = arith.constant 5 : index
    %c0_42 = arith.constant 0 : index
    %c0_43 = arith.constant 0 : index
    %63 = vector.load %arg3[%c5, %c0_42, %c0_43] : memref<9x128x128xbf16, #tpu.memory_space<vmem>>, vector<1x128x128xbf16>
    %64 = vector.shape_cast %63 : vector<1x128x128xbf16> to vector<128x128xbf16>
    %cst_44 = arith.constant dense<0.000000e+00> : vector<128x128xf32>
    %65 = tpu.matmul %62, %64, %cst_44 {dimension_numbers = #tpu.dot_dimension_numbers<[1], [0], [0], [1], [0, 0, 1, 1], [], []>} : vector<128x128xbf16>, vector<128x128xbf16>, vector<128x128xf32> -> vector<128x128xf32>
    %66 = arith.addf %59, %65 : vector<128x128xf32>
    %67 = arith.index_cast %12 : i32 to index
    %c0_45 = arith.constant 0 : index
    %c36 = arith.constant 36 : index
    %c0_46 = arith.constant 0 : index
    %68 = vector.load %arg7[%67, %c0_45, %c36, %c0_46] : memref<2x1x168x128xbf16, #tpu.memory_space<vmem>>, vector<1x1x128x128xbf16>
    %69 = vector.shape_cast %68 : vector<1x1x128x128xbf16> to vector<128x128xbf16>
    %c6 = arith.constant 6 : index
    %c0_47 = arith.constant 0 : index
    %c0_48 = arith.constant 0 : index
    %70 = vector.load %arg3[%c6, %c0_47, %c0_48] : memref<9x128x128xbf16, #tpu.memory_space<vmem>>, vector<1x128x128xbf16>
    %71 = vector.shape_cast %70 : vector<1x128x128xbf16> to vector<128x128xbf16>
    %cst_49 = arith.constant dense<0.000000e+00> : vector<128x128xf32>
    %72 = tpu.matmul %69, %71, %cst_49 {dimension_numbers = #tpu.dot_dimension_numbers<[1], [0], [0], [1], [0, 0, 1, 1], [], []>} : vector<128x128xbf16>, vector<128x128xbf16>, vector<128x128xf32> -> vector<128x128xf32>
    %73 = arith.addf %66, %72 : vector<128x128xf32>
    %74 = arith.index_cast %12 : i32 to index
    %c0_50 = arith.constant 0 : index
    %c37 = arith.constant 37 : index
    %c0_51 = arith.constant 0 : index
    %75 = vector.load %arg7[%74, %c0_50, %c37, %c0_51] : memref<2x1x168x128xbf16, #tpu.memory_space<vmem>>, vector<1x1x128x128xbf16>
    %76 = vector.shape_cast %75 : vector<1x1x128x128xbf16> to vector<128x128xbf16>
    %c7 = arith.constant 7 : index
    %c0_52 = arith.constant 0 : index
    %c0_53 = arith.constant 0 : index
    %77 = vector.load %arg3[%c7, %c0_52, %c0_53] : memref<9x128x128xbf16, #tpu.memory_space<vmem>>, vector<1x128x128xbf16>
    %78 = vector.shape_cast %77 : vector<1x128x128xbf16> to vector<128x128xbf16>
    %cst_54 = arith.constant dense<0.000000e+00> : vector<128x128xf32>
    %79 = tpu.matmul %76, %78, %cst_54 {dimension_numbers = #tpu.dot_dimension_numbers<[1], [0], [0], [1], [0, 0, 1, 1], [], []>} : vector<128x128xbf16>, vector<128x128xbf16>, vector<128x128xf32> -> vector<128x128xf32>
    %80 = arith.addf %73, %79 : vector<128x128xf32>
    %81 = arith.index_cast %12 : i32 to index
    %c0_55 = arith.constant 0 : index
    %c38 = arith.constant 38 : index
    %c0_56 = arith.constant 0 : index
    %82 = vector.load %arg7[%81, %c0_55, %c38, %c0_56] : memref<2x1x168x128xbf16, #tpu.memory_space<vmem>>, vector<1x1x128x128xbf16>
    %83 = vector.shape_cast %82 : vector<1x1x128x128xbf16> to vector<128x128xbf16>
    %c8 = arith.constant 8 : index
    %c0_57 = arith.constant 0 : index
    %c0_58 = arith.constant 0 : index
    %84 = vector.load %arg3[%c8, %c0_57, %c0_58] : memref<9x128x128xbf16, #tpu.memory_space<vmem>>, vector<1x128x128xbf16>
    %85 = vector.shape_cast %84 : vector<1x128x128xbf16> to vector<128x128xbf16>
    %cst_59 = arith.constant dense<0.000000e+00> : vector<128x128xf32>
    %86 = tpu.matmul %83, %85, %cst_59 {dimension_numbers = #tpu.dot_dimension_numbers<[1], [0], [0], [1], [0, 0, 1, 1], [], []>} : vector<128x128xbf16>, vector<128x128xbf16>, vector<128x128xf32> -> vector<128x128xf32>
    %87 = arith.addf %80, %86 : vector<128x128xf32>
    %c0_60 = arith.constant 0 : index
    %c0_61 = arith.constant 0 : index
    %88 = vector.load %arg4[%c0_60, %c0_61] : memref<1x128xf32, #tpu.memory_space<vmem>>, vector<1x128xf32>
    %89 = vector.broadcast %88 : vector<1x128xf32> to vector<128x128xf32>
    %90 = arith.mulf %87, %89 : vector<128x128xf32>
    %c0_62 = arith.constant 0 : index
    %c0_63 = arith.constant 0 : index
    %91 = vector.load %arg5[%c0_62, %c0_63] : memref<1x128xf32, #tpu.memory_space<vmem>>, vector<1x128xf32>
    %92 = vector.broadcast %91 : vector<1x128xf32> to vector<128x128xf32>
    %93 = arith.addf %90, %92 : vector<128x128xf32>
    %cst_64 = arith.constant 0.000000e+00 : f32
    %94 = vector.broadcast %cst_64 : f32 to vector<128x128xf32>
    %95 = arith.cmpf ogt, %93, %94 : vector<128x128xf32>
    %cst_65 = arith.constant 1.000000e-01 : f32
    %96 = vector.broadcast %cst_65 : f32 to vector<128x128xf32>
    %97 = arith.mulf %96, %93 : vector<128x128xf32>
    %98 = arith.select %95, %93, %97 : vector<128x128xi1>, vector<128x128xf32>
    %99 = arith.truncf %98 : vector<128x128xf32> to vector<128x128xbf16>
    %c0_66 = arith.constant 0 : index
    %c0_67 = arith.constant 0 : index
    %c0_68 = arith.constant 0 : index
    %100 = vector.load %arg6[%c0_66, %c0_67, %c0_68] : memref<1x128x128xbf16, #tpu.memory_space<vmem>>, vector<1x128x128xbf16>
    %101 = vector.shape_cast %100 : vector<1x128x128xbf16> to vector<128x128xbf16>
    %102 = vector.shape_cast %99 : vector<128x128xbf16> to vector<1x128x128xbf16>
    tpu.vector_store %arg6[%c0_66, %c0_67, %c0_68], %102 {strides = array<i32>} : memref<1x128x128xbf16, #tpu.memory_space<vmem>>, vector<1x128x128xbf16>,
    return
  }
  func.func @transform_1(%arg0: i32, %arg1: i32) -> (i32, i32, i32) {
    %c0_i32 = arith.constant 0 : i32
    %c0_i32_0 = arith.constant 0 : i32
    %c0_i32_1 = arith.constant 0 : i32
    %c0_i32_2 = arith.constant 0 : i32
    return %c0_i32, %c0_i32_0, %c0_i32_1 : i32, i32, i32
  }
  func.func @transform_2(%arg0: i32, %arg1: i32) -> (i32, i32) {
    %c0_i32 = arith.constant 0 : i32
    %c0_i32_0 = arith.constant 0 : i32
    %c0_i32_1 = arith.constant 0 : i32
    return %c0_i32, %c0_i32_0 : i32, i32
  }
  func.func @transform_3(%arg0: i32, %arg1: i32) -> (i32, i32) {
    %c0_i32 = arith.constant 0 : i32
    %c0_i32_0 = arith.constant 0 : i32
    %c0_i32_1 = arith.constant 0 : i32
    return %c0_i32, %c0_i32_0 : i32, i32
  }
  func.func @transform_4(%arg0: i32, %arg1: i32) -> (i32, i32, i32) {
    %c0_i32 = arith.constant 0 : i32
    %c0_i32_0 = arith.constant 0 : i32
    return %arg0, %arg1, %c0_i32 : i32, i32, i32
  }
}

module attributes {stable_mosaic.version = 11 : i64} {
  func.func @_base_conv_kernel(%arg0: i32, %arg1: i32, %arg2: memref<2x1x424x128xbf16, #tpu.memory_space<any>>, %arg3: memref<9x128x128xbf16, #tpu.memory_space<vmem>>, %arg4: memref<1x128xf32, #tpu.memory_space<vmem>>, %arg5: memref<1x128xf32, #tpu.memory_space<vmem>>, %arg6: memref<1x128x128xbf16, #tpu.memory_space<vmem>>, %arg7: memref<2x1x168x128xbf16, #tpu.memory_space<vmem>>, %arg8: memref<2x!tpu.dma_semaphore, #tpu.memory_space<semaphore_mem>>) attributes {dimension_semantics = [#tpu.dimension_semantics<parallel>, #tpu.dimension_semantics<arbitrary>], iteration_bounds = array<i64: 2, 3>, scalar_prefetch = 0 : i64, scratch_operands = 2 : i64, tpu.core_type = #tpu.core_type<tc>, window_params = [{}, {pipeline_mode = #tpu.pipeline_mode<synchronous>, transform_indices = @transform_1, window_bounds = array<i64: 9, 128, 128>}, {pipeline_mode = #tpu.pipeline_mode<synchronous>, transform_indices = @transform_2, window_bounds = array<i64: 1, 128>}, {pipeline_mode = #tpu.pipeline_mode<synchronous>, transform_indices = @transform_3, window_bounds = array<i64: 1, 128>}, {transform_indices = @transform_4, window_bounds = array<i64: 1, 128, 128>}]} {
    %c0_i32 = arith.constant 0 : i32
    %0 = arith.cmpi eq, %arg1, %c0_i32 : i32
    %1 = arith.extui %0 : i1 to i32
    %c0_i32_0 = arith.constant 0 : i32
    %2 = arith.cmpi ne, %1, %c0_i32_0 : i32
    scf.if %2 {
      %c0_i32_69 = arith.constant 0 : i32
      %c0_i32_70 = arith.constant 0 : i32
      %c0_i32_71 = arith.constant 0 : i32
      %c0_i32_72 = arith.constant 0 : i32
      %c0_i32_73 = arith.constant 0 : i32
      %103 = tpu.memref_slice %arg2[%arg0, %c0_i32_71, %c0_i32_72, %c0_i32_73] : memref<2x1x424x128xbf16, #tpu.memory_space<any>> -> memref<1x1x168x128xbf16, #tpu.memory_space<any>>
      %104 = tpu.memref_squeeze %103 : memref<1x1x168x128xbf16, #tpu.memory_space<any>> -> memref<1x168x128xbf16, #tpu.memory_space<any>>
      %c0_i32_74 = arith.constant 0 : i32
      %c0_i32_75 = arith.constant 0 : i32
      %c0_i32_76 = arith.constant 0 : i32
      %105 = tpu.memref_slice %arg7[%c0_i32_69, %c0_i32_74, %c0_i32_75, %c0_i32_76] : memref<2x1x168x128xbf16, #tpu.memory_space<vmem>> -> memref<1x1x168x128xbf16, #tpu.memory_space<vmem>>
      %106 = tpu.memref_squeeze %105 : memref<1x1x168x128xbf16, #tpu.memory_space<vmem>> -> memref<1x168x128xbf16, #tpu.memory_space<vmem>>
      %107 = tpu.memref_slice %arg8[%c0_i32_70] : memref<2x!tpu.dma_semaphore, #tpu.memory_space<semaphore_mem>> -> memref<1x!tpu.dma_semaphore, #tpu.memory_space<semaphore_mem>>
      %108 = tpu.memref_squeeze %107 : memref<1x!tpu.dma_semaphore, #tpu.memory_space<semaphore_mem>> -> memref<!tpu.dma_semaphore, #tpu.memory_space<semaphore_mem>>
      tpu.enqueue_dma source(%104 : memref<1x168x128xbf16, #tpu.memory_space<any>>) target(%106 : memref<1x168x128xbf16, #tpu.memory_space<vmem>>) target_semaphore(%108 : memref<!tpu.dma_semaphore, #tpu.memory_space<semaphore_mem>>)
    } else {
    }
    %c2_i32 = arith.constant 2 : i32
    %c0_i32_1 = arith.constant 0 : i32
    %3 = arith.cmpi eq, %c2_i32, %c0_i32_1 : i32
    %c1_i32 = arith.constant 1 : i32
    %4 = arith.select %3, %c1_i32, %c2_i32 : i32
    %5 = arith.remsi %arg1, %4 : i32
    %c0_i32_2 = arith.constant 0 : i32
    %6 = arith.cmpi ne, %5, %c0_i32_2 : i32
    %c0_i32_3 = arith.constant 0 : i32
    %7 = arith.cmpi slt, %5, %c0_i32_3 : i32
    %c0_i32_4 = arith.constant 0 : i32
    %8 = arith.cmpi slt, %4, %c0_i32_4 : i32
    %9 = arith.xori %7, %8 : i1
    %10 = arith.andi %9, %6 : i1
    %11 = arith.addi %5, %4 : i32
    %12 = arith.select %10, %11, %5 : i32
    %c1_i32_5 = arith.constant 1 : i32
    %13 = arith.addi %arg1, %c1_i32_5 : i32
    %c3_i32 = arith.constant 3 : i32
    %14 = arith.cmpi slt, %13, %c3_i32 : i32
    %15 = arith.extui %14 : i1 to i32
    %c0_i32_6 = arith.constant 0 : i32
    %16 = arith.cmpi ne, %15, %c0_i32_6 : i32
    scf.if %16 {
      %c1_i32_69 = arith.constant 1 : i32
      %103 = arith.addi %arg1, %c1_i32_69 : i32
      %c1_i32_70 = arith.constant 1 : i32
      %104 = arith.subi %c1_i32_70, %12 : i32
      %c128_i32_71 = arith.constant 128 : i32
      %105 = arith.muli %103, %c128_i32_71 : i32
      %c0_i32_72 = arith.constant 0 : i32
      %c0_i32_73 = arith.constant 0 : i32
      %106 = tpu.memref_slice %arg2[%arg0, %c0_i32_72, %105, %c0_i32_73] : memref<2x1x424x128xbf16, #tpu.memory_space<any>> -> memref<1x1x168x128xbf16, #tpu.memory_space<any>>
      %107 = tpu.memref_squeeze %106 : memref<1x1x168x128xbf16, #tpu.memory_space<any>> -> memref<1x168x128xbf16, #tpu.memory_space<any>>
      %c0_i32_74 = arith.constant 0 : i32
      %c0_i32_75 = arith.constant 0 : i32
      %c0_i32_76 = arith.constant 0 : i32
      %108 = tpu.memref_slice %arg7[%104, %c0_i32_74, %c0_i32_75, %c0_i32_76] : memref<2x1x168x128xbf16, #tpu.memory_space<vmem>> -> memref<1x1x168x128xbf16, #tpu.memory_space<vmem>>
      %109 = tpu.memref_squeeze %108 : memref<1x1x168x128xbf16, #tpu.memory_space<vmem>> -> memref<1x168x128xbf16, #tpu.memory_space<vmem>>
      %110 = tpu.memref_slice %arg8[%104] : memref<2x!tpu.dma_semaphore, #tpu.memory_space<semaphore_mem>> -> memref<1x!tpu.dma_semaphore, #tpu.memory_space<semaphore_mem>>
      %111 = tpu.memref_squeeze %110 : memref<1x!tpu.dma_semaphore, #tpu.memory_space<semaphore_mem>> -> memref<!tpu.dma_semaphore, #tpu.memory_space<semaphore_mem>>
      tpu.enqueue_dma source(%107 : memref<1x168x128xbf16, #tpu.memory_space<any>>) target(%109 : memref<1x168x128xbf16, #tpu.memory_space<vmem>>) target_semaphore(%111 : memref<!tpu.dma_semaphore, #tpu.memory_space<semaphore_mem>>)
    } else {
    }
    %c128_i32 = arith.constant 128 : i32
    %17 = arith.muli %arg1, %c128_i32 : i32
    %c0_i32_7 = arith.constant 0 : i32
    %c0_i32_8 = arith.constant 0 : i32
    %18 = tpu.memref_slice %arg2[%arg0, %c0_i32_7, %17, %c0_i32_8] : memref<2x1x424x128xbf16, #tpu.memory_space<any>> -> memref<1x1x168x128xbf16, #tpu.memory_space<any>>
    %19 = tpu.memref_squeeze %18 : memref<1x1x168x128xbf16, #tpu.memory_space<any>> -> memref<1x168x128xbf16, #tpu.memory_space<any>>
    %c0_i32_9 = arith.constant 0 : i32
    %c0_i32_10 = arith.constant 0 : i32
    %c0_i32_11 = arith.constant 0 : i32
    %20 = tpu.memref_slice %arg7[%12, %c0_i32_9, %c0_i32_10, %c0_i32_11] : memref<2x1x168x128xbf16, #tpu.memory_space<vmem>> -> memref<1x1x168x128xbf16, #tpu.memory_space<vmem>>
    %21 = tpu.memref_squeeze %20 : memref<1x1x168x128xbf16, #tpu.memory_space<vmem>> -> memref<1x168x128xbf16, #tpu.memory_space<vmem>>
    %22 = tpu.memref_slice %arg8[%12] : memref<2x!tpu.dma_semaphore, #tpu.memory_space<semaphore_mem>> -> memref<1x!tpu.dma_semaphore, #tpu.memory_space<semaphore_mem>>
    %23 = tpu.memref_squeeze %22 : memref<1x!tpu.dma_semaphore, #tpu.memory_space<semaphore_mem>> -> memref<!tpu.dma_semaphore, #tpu.memory_space<semaphore_mem>>
    tpu.wait_dma2 semaphore(%23 : memref<!tpu.dma_semaphore, #tpu.memory_space<semaphore_mem>>) src(%19 : memref<1x168x128xbf16, #tpu.memory_space<any>>) dst(%21 : memref<1x168x128xbf16, #tpu.memory_space<vmem>>)
    %cst = arith.constant 0.000000e+00 : f32
    %24 = vector.broadcast %cst : f32 to vector<128x128xf32>
    %25 = arith.index_cast %12 : i32 to index
    %c0 = arith.constant 0 : index
    %c0_12 = arith.constant 0 : index
    %c0_13 = arith.constant 0 : index
    %26 = vector.load %arg7[%25, %c0, %c0_12, %c0_13] : memref<2x1x168x128xbf16, #tpu.memory_space<vmem>>, vector<1x1x128x128xbf16>
    %27 = vector.shape_cast %26 : vector<1x1x128x128xbf16> to vector<128x128xbf16>
    %c0_14 = arith.constant 0 : index
    %c0_15 = arith.constant 0 : index
    %c0_16 = arith.constant 0 : index
    %28 = vector.load %arg3[%c0_14, %c0_15, %c0_16] : memref<9x128x128xbf16, #tpu.memory_space<vmem>>, vector<1x128x128xbf16>
    %29 = vector.shape_cast %28 : vector<1x128x128xbf16> to vector<128x128xbf16>
    %cst_17 = arith.constant dense<0.000000e+00> : vector<128x128xf32>
    %30 = tpu.matmul %27, %29, %cst_17 {dimension_numbers = #tpu.dot_dimension_numbers<[1], [0], [0], [1], [0, 0, 1, 1], [], []>} : vector<128x128xbf16>, vector<128x128xbf16>, vector<128x128xf32> -> vector<128x128xf32>
    %31 = arith.addf %24, %30 : vector<128x128xf32>
    %32 = arith.index_cast %12 : i32 to index
    %c0_18 = arith.constant 0 : index
    %c1 = arith.constant 1 : index
    %c0_19 = arith.constant 0 : index
    %33 = vector.load %arg7[%32, %c0_18, %c1, %c0_19] : memref<2x1x168x128xbf16, #tpu.memory_space<vmem>>, vector<1x1x128x128xbf16>
    %34 = vector.shape_cast %33 : vector<1x1x128x128xbf16> to vector<128x128xbf16>
    %c1_20 = arith.constant 1 : index
    %c0_21 = arith.constant 0 : index
    %c0_22 = arith.constant 0 : index
    %35 = vector.load %arg3[%c1_20, %c0_21, %c0_22] : memref<9x128x128xbf16, #tpu.memory_space<vmem>>, vector<1x128x128xbf16>
    %36 = vector.shape_cast %35 : vector<1x128x128xbf16> to vector<128x128xbf16>
    %cst_23 = arith.constant dense<0.000000e+00> : vector<128x128xf32>
    %37 = tpu.matmul %34, %36, %cst_23 {dimension_numbers = #tpu.dot_dimension_numbers<[1], [0], [0], [1], [0, 0, 1, 1], [], []>} : vector<128x128xbf16>, vector<128x128xbf16>, vector<128x128xf32> -> vector<128x128xf32>
    %38 = arith.addf %31, %37 : vector<128x128xf32>
    %39 = arith.index_cast %12 : i32 to index
    %c0_24 = arith.constant 0 : index
    %c2 = arith.constant 2 : index
    %c0_25 = arith.constant 0 : index
    %40 = vector.load %arg7[%39, %c0_24, %c2, %c0_25] : memref<2x1x168x128xbf16, #tpu.memory_space<vmem>>, vector<1x1x128x128xbf16>
    %41 = vector.shape_cast %40 : vector<1x1x128x128xbf16> to vector<128x128xbf16>
    %c2_26 = arith.constant 2 : index
    %c0_27 = arith.constant 0 : index
    %c0_28 = arith.constant 0 : index
    %42 = vector.load %arg3[%c2_26, %c0_27, %c0_28] : memref<9x128x128xbf16, #tpu.memory_space<vmem>>, vector<1x128x128xbf16>
    %43 = vector.shape_cast %42 : vector<1x128x128xbf16> to vector<128x128xbf16>
    %cst_29 = arith.constant dense<0.000000e+00> : vector<128x128xf32>
    %44 = tpu.matmul %41, %43, %cst_29 {dimension_numbers = #tpu.dot_dimension_numbers<[1], [0], [0], [1], [0, 0, 1, 1], [], []>} : vector<128x128xbf16>, vector<128x128xbf16>, vector<128x128xf32> -> vector<128x128xf32>
    %45 = arith.addf %38, %44 : vector<128x128xf32>
    %46 = arith.index_cast %12 : i32 to index
    %c0_30 = arith.constant 0 : index
    %c18 = arith.constant 18 : index
    %c0_31 = arith.constant 0 : index
    %47 = vector.load %arg7[%46, %c0_30, %c18, %c0_31] : memref<2x1x168x128xbf16, #tpu.memory_space<vmem>>, vector<1x1x128x128xbf16>
    %48 = vector.shape_cast %47 : vector<1x1x128x128xbf16> to vector<128x128xbf16>
    %c3 = arith.constant 3 : index
    %c0_32 = arith.constant 0 : index
    %c0_33 = arith.constant 0 : index
    %49 = vector.load %arg3[%c3, %c0_32, %c0_33] : memref<9x128x128xbf16, #tpu.memory_space<vmem>>, vector<1x128x128xbf16>
    %50 = vector.shape_cast %49 : vector<1x128x128xbf16> to vector<128x128xbf16>
    %cst_34 = arith.constant dense<0.000000e+00> : vector<128x128xf32>
    %51 = tpu.matmul %48, %50, %cst_34 {dimension_numbers = #tpu.dot_dimension_numbers<[1], [0], [0], [1], [0, 0, 1, 1], [], []>} : vector<128x128xbf16>, vector<128x128xbf16>, vector<128x128xf32> -> vector<128x128xf32>
    %52 = arith.addf %45, %51 : vector<128x128xf32>
    %53 = arith.index_cast %12 : i32 to index
    %c0_35 = arith.constant 0 : index
    %c19 = arith.constant 19 : index
    %c0_36 = arith.constant 0 : index
    %54 = vector.load %arg7[%53, %c0_35, %c19, %c0_36] : memref<2x1x168x128xbf16, #tpu.memory_space<vmem>>, vector<1x1x128x128xbf16>
    %55 = vector.shape_cast %54 : vector<1x1x128x128xbf16> to vector<128x128xbf16>
    %c4 = arith.constant 4 : index
    %c0_37 = arith.constant 0 : index
    %c0_38 = arith.constant 0 : index
    %56 = vector.load %arg3[%c4, %c0_37, %c0_38] : memref<9x128x128xbf16, #tpu.memory_space<vmem>>, vector<1x128x128xbf16>
    %57 = vector.shape_cast %56 : vector<1x128x128xbf16> to vector<128x128xbf16>
    %cst_39 = arith.constant dense<0.000000e+00> : vector<128x128xf32>
    %58 = tpu.matmul %55, %57, %cst_39 {dimension_numbers = #tpu.dot_dimension_numbers<[1], [0], [0], [1], [0, 0, 1, 1], [], []>} : vector<128x128xbf16>, vector<128x128xbf16>, vector<128x128xf32> -> vector<128x128xf32>
    %59 = arith.addf %52, %58 : vector<128x128xf32>
    %60 = arith.index_cast %12 : i32 to index
    %c0_40 = arith.constant 0 : index
    %c20 = arith.constant 20 : index
    %c0_41 = arith.constant 0 : index
    %61 = vector.load %arg7[%60, %c0_40, %c20, %c0_41] : memref<2x1x168x128xbf16, #tpu.memory_space<vmem>>, vector<1x1x128x128xbf16>
    %62 = vector.shape_cast %61 : vector<1x1x128x128xbf16> to vector<128x128xbf16>
    %c5 = arith.constant 5 : index
    %c0_42 = arith.constant 0 : index
    %c0_43 = arith.constant 0 : index
    %63 = vector.load %arg3[%c5, %c0_42, %c0_43] : memref<9x128x128xbf16, #tpu.memory_space<vmem>>, vector<1x128x128xbf16>
    %64 = vector.shape_cast %63 : vector<1x128x128xbf16> to vector<128x128xbf16>
    %cst_44 = arith.constant dense<0.000000e+00> : vector<128x128xf32>
    %65 = tpu.matmul %62, %64, %cst_44 {dimension_numbers = #tpu.dot_dimension_numbers<[1], [0], [0], [1], [0, 0, 1, 1], [], []>} : vector<128x128xbf16>, vector<128x128xbf16>, vector<128x128xf32> -> vector<128x128xf32>
    %66 = arith.addf %59, %65 : vector<128x128xf32>
    %67 = arith.index_cast %12 : i32 to index
    %c0_45 = arith.constant 0 : index
    %c36 = arith.constant 36 : index
    %c0_46 = arith.constant 0 : index
    %68 = vector.load %arg7[%67, %c0_45, %c36, %c0_46] : memref<2x1x168x128xbf16, #tpu.memory_space<vmem>>, vector<1x1x128x128xbf16>
    %69 = vector.shape_cast %68 : vector<1x1x128x128xbf16> to vector<128x128xbf16>
    %c6 = arith.constant 6 : index
    %c0_47 = arith.constant 0 : index
    %c0_48 = arith.constant 0 : index
    %70 = vector.load %arg3[%c6, %c0_47, %c0_48] : memref<9x128x128xbf16, #tpu.memory_space<vmem>>, vector<1x128x128xbf16>
    %71 = vector.shape_cast %70 : vector<1x128x128xbf16> to vector<128x128xbf16>
    %cst_49 = arith.constant dense<0.000000e+00> : vector<128x128xf32>
    %72 = tpu.matmul %69, %71, %cst_49 {dimension_numbers = #tpu.dot_dimension_numbers<[1], [0], [0], [1], [0, 0, 1, 1], [], []>} : vector<128x128xbf16>, vector<128x128xbf16>, vector<128x128xf32> -> vector<128x128xf32>
    %73 = arith.addf %66, %72 : vector<128x128xf32>
    %74 = arith.index_cast %12 : i32 to index
    %c0_50 = arith.constant 0 : index
    %c37 = arith.constant 37 : index
    %c0_51 = arith.constant 0 : index
    %75 = vector.load %arg7[%74, %c0_50, %c37, %c0_51] : memref<2x1x168x128xbf16, #tpu.memory_space<vmem>>, vector<1x1x128x128xbf16>
    %76 = vector.shape_cast %75 : vector<1x1x128x128xbf16> to vector<128x128xbf16>
    %c7 = arith.constant 7 : index
    %c0_52 = arith.constant 0 : index
    %c0_53 = arith.constant 0 : index
    %77 = vector.load %arg3[%c7, %c0_52, %c0_53] : memref<9x128x128xbf16, #tpu.memory_space<vmem>>, vector<1x128x128xbf16>
    %78 = vector.shape_cast %77 : vector<1x128x128xbf16> to vector<128x128xbf16>
    %cst_54 = arith.constant dense<0.000000e+00> : vector<128x128xf32>
    %79 = tpu.matmul %76, %78, %cst_54 {dimension_numbers = #tpu.dot_dimension_numbers<[1], [0], [0], [1], [0, 0, 1, 1], [], []>} : vector<128x128xbf16>, vector<128x128xbf16>, vector<128x128xf32> -> vector<128x128xf32>
    %80 = arith.addf %73, %79 : vector<128x128xf32>
    %81 = arith.index_cast %12 : i32 to index
    %c0_55 = arith.constant 0 : index
    %c38 = arith.constant 38 : index
    %c0_56 = arith.constant 0 : index
    %82 = vector.load %arg7[%81, %c0_55, %c38, %c0_56] : memref<2x1x168x128xbf16, #tpu.memory_space<vmem>>, vector<1x1x128x128xbf16>
    %83 = vector.shape_cast %82 : vector<1x1x128x128xbf16> to vector<128x128xbf16>
    %c8 = arith.constant 8 : index
    %c0_57 = arith.constant 0 : index
    %c0_58 = arith.constant 0 : index
    %84 = vector.load %arg3[%c8, %c0_57, %c0_58] : memref<9x128x128xbf16, #tpu.memory_space<vmem>>, vector<1x128x128xbf16>
    %85 = vector.shape_cast %84 : vector<1x128x128xbf16> to vector<128x128xbf16>
    %cst_59 = arith.constant dense<0.000000e+00> : vector<128x128xf32>
    %86 = tpu.matmul %83, %85, %cst_59 {dimension_numbers = #tpu.dot_dimension_numbers<[1], [0], [0], [1], [0, 0, 1, 1], [], []>} : vector<128x128xbf16>, vector<128x128xbf16>, vector<128x128xf32> -> vector<128x128xf32>
    %87 = arith.addf %80, %86 : vector<128x128xf32>
    %c0_60 = arith.constant 0 : index
    %c0_61 = arith.constant 0 : index
    %88 = vector.load %arg4[%c0_60, %c0_61] : memref<1x128xf32, #tpu.memory_space<vmem>>, vector<1x128xf32>
    %89 = vector.broadcast %88 : vector<1x128xf32> to vector<128x128xf32>
    %90 = arith.mulf %87, %89 : vector<128x128xf32>
    %c0_62 = arith.constant 0 : index
    %c0_63 = arith.constant 0 : index
    %91 = vector.load %arg5[%c0_62, %c0_63] : memref<1x128xf32, #tpu.memory_space<vmem>>, vector<1x128xf32>
    %92 = vector.broadcast %91 : vector<1x128xf32> to vector<128x128xf32>
    %93 = arith.addf %90, %92 : vector<128x128xf32>
    %cst_64 = arith.constant 0.000000e+00 : f32
    %94 = vector.broadcast %cst_64 : f32 to vector<128x128xf32>
    %95 = arith.cmpf ogt, %93, %94 : vector<128x128xf32>
    %cst_65 = arith.constant 1.000000e-01 : f32
    %96 = vector.broadcast %cst_65 : f32 to vector<128x128xf32>
    %97 = arith.mulf %96, %93 : vector<128x128xf32>
    %98 = arith.select %95, %93, %97 : vector<128x128xi1>, vector<128x128xf32>
    %99 = arith.truncf %98 : vector<128x128xf32> to vector<128x128xbf16>
    %c0_66 = arith.constant 0 : index
    %c0_67 = arith.constant 0 : index
    %c0_68 = arith.constant 0 : index
    %100 = vector.load %arg6[%c0_66, %c0_67, %c0_68] : memref<1x128x128xbf16, #tpu.memory_space<vmem>>, vector<1x128x128xbf16>
    %101 = vector.shape_cast %100 : vector<1x128x128xbf16> to vector<128x128xbf16>
    %102 = vector.shape_cast %99 : vector<128x128xbf16> to vector<1x128x128xbf16>
    tpu.vector_store %arg6[%c0_66, %c0_67, %c0_68], %102 {strides = array<i32>} : memref<1x128x128xbf16, #tpu.memory_space<vmem>>, vector<1x128x128xbf16>,
    return
  }
  func.func @transform_1(%arg0: i32, %arg1: i32) -> (i32, i32, i32) {
    %c0_i32 = arith.constant 0 : i32
    %c0_i32_0 = arith.constant 0 : i32
    %c0_i32_1 = arith.constant 0 : i32
    %c0_i32_2 = arith.constant 0 : i32
    return %c0_i32, %c0_i32_0, %c0_i32_1 : i32, i32, i32
  }
  func.func @transform_2(%arg0: i32, %arg1: i32) -> (i32, i32) {
    %c0_i32 = arith.constant 0 : i32
    %c0_i32_0 = arith.constant 0 : i32
    %c0_i32_1 = arith.constant 0 : i32
    return %c0_i32, %c0_i32_0 : i32, i32
  }
  func.func @transform_3(%arg0: i32, %arg1: i32) -> (i32, i32) {
    %c0_i32 = arith.constant 0 : i32
    %c0_i32_0 = arith.constant 0 : i32
    %c0_i32_1 = arith.constant 0 : i32
    return %c0_i32, %c0_i32_0 : i32, i32
  }
  func.func @transform_4(%arg0: i32, %arg1: i32) -> (i32, i32, i32) {
    %c0_i32 = arith.constant 0 : i32
    %c0_i32_0 = arith.constant 0 : i32
    return %arg0, %arg1, %c0_i32 : i32, i32, i32
  }
}

</mosaic_0001>

<llo_original>
// kernel: tpu_custom_call.1
$region0: #{tpu_custom_call.1}
  #allocation0 [shape = 'u32[]', space=smem, size = 0x4, offset = 0x4, fixed_abs, tag = 'smem constant byte address 0x4 - core index']
  #allocation1 [shape = 'u32[144,128]{1,0:T(1,128)}', space=vmem, size = 0x12000, scoped, tag = 'internal scratch']
  #allocation2 [shape = 'bf16[2,1,168,128]{3,2,1,0:T(8,128)(2,1)}', space=vmem, size = 0x15000, scoped, tag = 'scratch operand']
  #allocation3 [shape = 's32[2]{0}', space=sflag, size = 0x8, scoped, tag = 'scratch operand']
  #allocation8 [shape = 's32[]', space=sflag, size = 0x4, offset = 0, fixed_abs, tag = 'sflag constant byte address 0x0 - dummy sync flag']
  #allocation9 [shape = 's32[]', space=sflag, size = 0x4, offset = 0, fixed_abs, tag = 'sflag constant byte address 0x0 - dummy sync flag']
  #allocation10 [shape = 'u32[]', space=smem, size = 0x4, offset = 0x44, fixed_abs, tag = 'smem constant byte address 0x44 - assertion arg 0']
  #allocation11 [shape = 'u32[]', space=smem, size = 0x4, offset = 0x48, fixed_abs, tag = 'smem constant byte address 0x48 - assertion arg 1']
  #allocation12 [shape = 's32[]', space=sflag, size = 0x4, offset = 0, fixed_abs, tag = 'sflag constant byte address 0x0 - dummy sync flag']
  #allocation13 [shape = 's32[]', space=sflag, size = 0x4, offset = 0, fixed_abs, tag = 'sflag constant byte address 0x0 - dummy sync flag']
  %s0 = inlined_call_operand.hbm [shape: bf16[2,1,424,128], index: 0, kind: input, shape index: {}]
  %s1 = inlined_call_operand.hbm [shape: bf16[9,128,128], index: 1, kind: input, shape index: {}]
  %s2 = inlined_call_operand.vmem [shape: f32[1,128], index: 2, kind: input, shape index: {}]
  %s3 = inlined_call_operand.vmem [shape: f32[1,128], index: 3, kind: input, shape index: {}]
  %s4 = inlined_call_operand.hbm [shape: bf16[2,384,128], index: 4, kind: output, shape index: {}]
  %s5 = sld [smem:[#allocation0]]
  $region65: #{tpu_custom_call.1} parent=0
    _
  %s7 = ssub.s32 1, %s5
  %s8 = scalar_select 0, %s7, %s5
  $region1: #{tpu_custom_call.1} parent=0
    #allocation4 [shape = 'u8[294912]{0}', space=vmem, size = 0x48000, scoped, tag = 'input window, operand 1, single buffered']
    #allocation5 [shape = 's32[2]{0}', space=sflag, size = 0x8, scoped, tag = 'scoped memory for tpu_custom_call.1']
    #allocation6 [shape = 's32[2]{0}', space=sflag, size = 0x8, scoped, tag = 'scoped memory for tpu_custom_call.1']
    #allocation7 [shape = 'u8[65536]{0}', space=vmem, size = 0x10000, scoped, tag = 'output window, operand 0']
    %9 = vsyncpa [#allocation5], 0
    %10 = vsyncpa [#allocation6], 0
    %s11 = scalar_lea.sflag [#allocation6], 1
    %12 = vsyncpa %s11, 0
    loop: start=0, step=1, limit=8
    $region2: #{tpu_custom_call.1} parent=1 // loop_pre_header
      _
    $region3: #{tpu_custom_call.1} parent=1 // loop_header
      %s14 = sphi 0, %s18
      %p15 = scmp.ge.s32.totalorder %s14, 8
      %s21 = sphi 0, %s33
      %s22 = sphi 0, %s29
      %s23 = sphi 0, %s21
      %s24 = sphi 0, %s22
      %s25 = sphi 0, %s23
      %s26 = sphi 0, %s24
      %s34 = sphi 0, %s34
      %s36 = sphi 0, %s34
      %s37 = sphi 0, %s36
      %s51 = sphi 0, %s37
      %s55 = sphi 0, %s55
      %s57 = sphi 0, %s55
      %s58 = sphi 0, %s57
      %s72 = sphi 0, %s58
      %s76 = sphi 0, %s76
      %s78 = sphi 0, %s76
      %s79 = sphi 0, %s78
      %s93 = sphi 0, %s79
      %s101 = sphi 0, %s103
      %s104 = sphi 0, %s101
      %s105 = sphi 0, %s104
      %s121 = sphi 0, %s105
    $region4: #{tpu_custom_call.1} parent=1 // loop_header_branch
      %17 = sbr.rel (%p15) target = $region8
    $region5: #{tpu_custom_call.1} parent=1 // loop_body
      %s19 = ssub.s32 %s14, 1
      %s20 = ssub.s32 %s14, 2
      %s27 = sadd.s32 1, %s22
      %p28 = scmp.ge.s32.totalorder %s27, 3
      %s29 = scalar_select %p28, 0, %s27
      %s30 = sadd.s32 1, %s21
      %s31 = scalar_select %p28, %s30, %s21
      %p32 = scmp.ge.s32.totalorder %s31, 2
      %s33 = scalar_select %p32, 0, %s31
      %s35 = sadd.s32 %s34, 1
      %p38 = scmp.eq.s32.totalorder %s14, 5
      %p39 = scmp.ne.s32.totalorder %s34, %s36
      %p40 = scmp.eq.s32.totalorder %s14, 0
      %p41 = por %p39, %p40
      %p42 = scmp.ne.s32.totalorder %s34, %s36
      %p43 = scmp.eq.s32.totalorder %s19, 5
      %p44 = por %p42, %p43
      %p45 = scmp.ne.s32.totalorder %s36, %s37
      %p46 = scmp.eq.s32.totalorder %s19, 0
      %p47 = por %p45, %p46
      %p48 = scmp.ne.s32.totalorder %s36, %s37
      %p49 = scmp.eq.s32.totalorder %s20, 5
      %p50 = por %p48, %p49
      %p52 = scmp.ne.s32.totalorder %s37, %s51
      %p53 = scmp.eq.s32.totalorder %s20, 0
      %p54 = por %p52, %p53
      %s56 = sadd.s32 %s55, 1
      %p59 = scmp.eq.s32.totalorder %s14, 5
      %p60 = scmp.ne.s32.totalorder %s55, %s57
      %p61 = scmp.eq.s32.totalorder %s14, 0
      %p62 = por %p60, %p61
      %p63 = scmp.ne.s32.totalorder %s55, %s57
      %p64 = scmp.eq.s32.totalorder %s19, 5
      %p65 = por %p63, %p64
      %p66 = scmp.ne.s32.totalorder %s57, %s58
      %p67 = scmp.eq.s32.totalorder %s19, 0
      %p68 = por %p66, %p67
      %p69 = scmp.ne.s32.totalorder %s57, %s58
      %p70 = scmp.eq.s32.totalorder %s20, 5
      %p71 = por %p69, %p70
      %p73 = scmp.ne.s32.totalorder %s58, %s72
      %p74 = scmp.eq.s32.totalorder %s20, 0
      %p75 = por %p73, %p74
      %s77 = sadd.s32 %s76, 1
      %p80 = scmp.eq.s32.totalorder %s14, 5
      %p81 = scmp.ne.s32.totalorder %s76, %s78
      %p82 = scmp.eq.s32.totalorder %s14, 0
      %p83 = por %p81, %p82
      %p84 = scmp.ne.s32.totalorder %s76, %s78
      %p85 = scmp.eq.s32.totalorder %s19, 5
      %p86 = por %p84, %p85
      %p87 = scmp.ne.s32.totalorder %s78, %s79
      %p88 = scmp.eq.s32.totalorder %s19, 0
      %p89 = por %p87, %p88
      %p90 = scmp.ne.s32.totalorder %s78, %s79
      %p91 = scmp.eq.s32.totalorder %s20, 5
      %p92 = por %p90, %p91
      %p94 = scmp.ne.s32.totalorder %s79, %s93
      %p95 = scmp.eq.s32.totalorder %s20, 0
      %p96 = por %p94, %p95
      %s97 = ssub.s32 %s21, %s33
      %s98 = ssub.s32 %s22, %s29
      %s99 = sor.u32 %s97, %s98
      %p100 = scmp.eq.s32.totalorder %s99, 0
      %s102 = sadd.s32 %s101, 1
      %s103 = scalar_select %p100, %s101, %s102
      %p106 = pneg %p100
      %p107 = scmp.eq.s32.totalorder %s14, 5
      %p108 = por %p106, %p107
      %p109 = scmp.ne.s32.totalorder %s101, %s104
      %p110 = scmp.eq.s32.totalorder %s14, 0
      %p111 = por %p109, %p110
      %p112 = scmp.ne.s32.totalorder %s101, %s104
      %p113 = scmp.eq.s32.totalorder %s19, 5
      %p114 = por %p112, %p113
      %p115 = scmp.ne.s32.totalorder %s104, %s105
      %p116 = scmp.eq.s32.totalorder %s19, 0
      %p117 = por %p115, %p116
      %p118 = scmp.ne.s32.totalorder %s104, %s105
      %p119 = scmp.eq.s32.totalorder %s20, 5
      %p120 = por %p118, %p119
      %p122 = scmp.ne.s32.totalorder %s105, %s121
      %p123 = scmp.eq.s32.totalorder %s20, 0
      %p124 = por %p122, %p123
      %p125 = scmp.le.s32.totalorder 1, %s14
      %p126 = scmp.lt.s32.totalorder %s14, 7
      %p127 = pnand %p125, %p126
      %p128 = pneg %p127
      // Predicated region
      $region9: #{tpu_custom_call.1} parent=5 // pred_check
        _
      $region10: #{tpu_custom_call.1} parent=5 // pred_check_branch
        %130 = sbr.rel (%p127) target = $region12
      $region11: #{tpu_custom_call.1} parent=5 // pred_region
        %s131 = ssub.s32 %s14, 1
        // Predicated region
        $region13: #{tpu_custom_call.1} parent=11 // pred_check
          %p132 = pneg %p47
        $region14: #{tpu_custom_call.1} parent=11 // pred_check_branch
          %134 = sbr.rel (%p132) target = $region16
        $region15: #{tpu_custom_call.1} parent=11 // pred_region
          %s136 = ssub.s32 9216, 9216
          %137 = vsyncadd [#allocation5], %s136
          %s138 = sshll.u32 [#allocation4], 4
          %s139 = int_to_ptr.vmem [resolvable:$true] %s138
          %144 = dma.hbm_to_vmem [thread:$0]  %s1, 9216, %s139, [#allocation5], 64, 64, 4
        $region16: #{tpu_custom_call.1} parent=11 // pred_fallthru
          _
        // Predicated region
        $region17: #{tpu_custom_call.1} parent=11 // pred_check
          %p145 = pneg %p68
        $region18: #{tpu_custom_call.1} parent=11 // pred_check_branch
          %147 = sbr.rel (%p145) target = $region20
        $region19: #{tpu_custom_call.1} parent=11 // pred_region
          _
        $region20: #{tpu_custom_call.1} parent=11 // pred_fallthru
          _
        // Predicated region
        $region21: #{tpu_custom_call.1} parent=11 // pred_check
          %p148 = pneg %p89
        $region22: #{tpu_custom_call.1} parent=11 // pred_check_branch
          %150 = sbr.rel (%p148) target = $region24
        $region23: #{tpu_custom_call.1} parent=11 // pred_region
          _
        $region24: #{tpu_custom_call.1} parent=11 // pred_fallthru
          _
      $region12: #{tpu_custom_call.1} parent=5 // pred_fallthru
        _
      %p151 = scmp.lt.s32.totalorder %s14, 6
      // Predicated region
      $region25: #{tpu_custom_call.1} parent=5 // pred_check
        %p152 = pneg %p151
      $region26: #{tpu_custom_call.1} parent=5 // pred_check_branch
        %154 = sbr.rel (%p152) target = $region28
      $region27: #{tpu_custom_call.1} parent=5 // pred_region
        _
      $region28: #{tpu_custom_call.1} parent=5 // pred_fallthru
        _
      %p155 = scmp.le.s32.totalorder 1, %s14
      %p156 = scmp.lt.s32.totalorder %s14, 7
      %p157 = pnand %p155, %p156
      %p158 = pneg %p157
      // Predicated region
      $region29: #{tpu_custom_call.1} parent=5 // pred_check
        _
      $region30: #{tpu_custom_call.1} parent=5 // pred_check_branch
        %160 = sbr.rel (%p157) target = $region32
      $region31: #{tpu_custom_call.1} parent=5 // pred_region
        %s161 = ssub.s32 %s14, 1
        // Predicated region
        $region33: #{tpu_custom_call.1} parent=31 // pred_check
          %p162 = pneg %p47
        $region34: #{tpu_custom_call.1} parent=31 // pred_check_branch
          %164 = sbr.rel (%p162) target = $region36
        $region35: #{tpu_custom_call.1} parent=31 // pred_region
          %165 = dma.done [#allocation5], 9216
        $region36: #{tpu_custom_call.1} parent=31 // pred_fallthru
          _
        %p166 = pneg %p47
        %p167 = pneg %p44
        %p168 = pneg %p68
        %p169 = pneg %p65
        %p170 = pneg %p89
        %p171 = pneg %p86
        %p172 = pneg %p117
        %p173 = pneg %p114
        %s174 = sand.u32 %s104, 1
        %s175 = scalar_lea.sflag [#allocation6], %s174
        %s176 = sand.u32 %s104, 1
        %s177 = smul.addr %s176, 64
        %s178 = scalar_lea.vmem [#allocation7], %s177
        %s179 = smul.u32 16, %s24
        %p181 = scmp.eq.s32.totalorder %s24, 0
        // Predicated region
        $region37: #{tpu_custom_call.1} parent=31 // pred_check
          %p182 = pneg %p181
        $region38: #{tpu_custom_call.1} parent=31 // pred_check_branch
          %184 = sbr.rel (%p182) target = $region40
        $region39: #{tpu_custom_call.1} parent=31 // pred_region
          %s185 = smul.u32 %s23, 53
          %s186 = smul.addr %s185, 64
          %s187 = scalar_lea.hbm %s0, %s186
          // Predicated region
          $region41: #{tpu_custom_call.1} parent=39 // pred_check
            _
          $region42: #{tpu_custom_call.1} parent=39 // pred_check_branch
            %189 = sbr.rel target = $region44
          $region43: #{tpu_custom_call.1} parent=39 // pred_region
            %190 = sst [smem:[#allocation10]] [#allocation9]
            %191 = sst [smem:[#allocation11]] [#allocation8]
          $region44: #{tpu_custom_call.1} parent=39 // pred_fallthru
            _
          %193 = shalt.err (0)
          %s195 = sshll.u32 [#allocation2], 4
          %s196 = int_to_ptr.vmem [resolvable:$true] %s195
          %198 = dma.hbm_to_vmem [thread:$0]  %s187, 1344, %s196, [#allocation3]
        $region40: #{tpu_custom_call.1} parent=31 // pred_fallthru
          _
        %p199 = scmp.lt.s32.totalorder %s24, 0
        %s200 = ssub.s32 0, %s24
        %s201 = scalar_select %p199, %s200, %s24
        %s202 = sand.u32 %s201, 1
        %s203 = ssub.s32 0, %s202
        %s204 = scalar_select %p199, %s203, %s202
        %p205 = scmp.ne.s32.totalorder %s204, 0
        %p206 = scmp.lt.s32.totalorder %s204, 0
        %p207 = pnand %p206, %p205
        %p208 = pneg %p207
        %s209 = sadd.s32 %s204, 2
        %s210 = scalar_select %p208, %s209, %s204
        %s211 = sadd.s32 %s24, 1
        %p212 = scmp.lt.s32.totalorder %s211, 3
        // Predicated region
        $region45: #{tpu_custom_call.1} parent=31 // pred_check
          %p213 = pneg %p212
        $region46: #{tpu_custom_call.1} parent=31 // pred_check_branch
          %215 = sbr.rel (%p213) target = $region48
        $region47: #{tpu_custom_call.1} parent=31 // pred_region
          %s216 = ssub.s32 1, %s210
          %s217 = smul.u32 %s211, 128
          %s218 = sshra.s32 %s217, 3
          %s219 = sand.u32 %s217, 7
          %s220 = smul.u32 %s23, 53
          %s221 = sadd.s32 %s218, %s220
          %s222 = smul.addr %s221, 64
          %s223 = scalar_lea.hbm %s0, %s222
          %s224 = smul.u32 %s216, 21
          %s225 = smul.addr %s224, 4
          %s226 = scalar_lea.vmem [#allocation2], %s225
          %s227 = scalar_lea.sflag [#allocation3], %s216
          // Predicated region
          $region49: #{tpu_custom_call.1} parent=47 // pred_check
            _
          $region50: #{tpu_custom_call.1} parent=47 // pred_check_branch
            %229 = sbr.rel target = $region52
          $region51: #{tpu_custom_call.1} parent=47 // pred_region
            %230 = sst [smem:[#allocation10]] [#allocation13]
            %231 = sst [smem:[#allocation11]] [#allocation12]
          $region52: #{tpu_custom_call.1} parent=47 // pred_fallthru
            _
          %233 = shalt.err (0)
          %s235 = sshll.u32 %s226, 4
          %s236 = int_to_ptr.vmem [resolvable:$true] %s235
          %238 = dma.hbm_to_vmem [thread:$0]  %s223, 1344, %s236, %s227
        $region48: #{tpu_custom_call.1} parent=31 // pred_fallthru
          _
        %s239 = smul.u32 %s210, 21
        %s240 = smul.addr %s239, 4
        %s241 = scalar_lea.vmem [#allocation2], %s240
        %s242 = scalar_lea.sflag [#allocation3], %s210
        %s243 = smul.u32 4, 1
        %s244 = smul.u32 %s243, 21
        %s245 = smul.u32 %s244, 1
        %s246 = sshll.u32 %s245, 4
        %247 = dma.done %s242, %s246
        %v248 = vld [vmem:[%s241] sm:$0xf]
        %v249 = vld [vmem:[%s241 + $0x4] sm:$0xf]
        %v250 = vld [vmem:[%s241 + $0x8] sm:$0xf]
        %v251 = vld [vmem:[%s241 + $0xc] sm:$0xf]
        %v252 = vld [vmem:[%s241 + $0x10] sm:$0xf]
        %v253 = vld [vmem:[%s241 + $0x14] sm:$0xf]
        %v254 = vld [vmem:[%s241 + $0x18] sm:$0xf]
        %v255 = vld [vmem:[%s241 + $0x1c] sm:$0xf]
        %v256 = vld [vmem:[%s241 + $0x20] sm:$0xf]
        %v257 = vld [vmem:[%s241 + $0x24] sm:$0xf]
        %v258 = vld [vmem:[%s241 + $0x28] sm:$0xf]
        %v259 = vld [vmem:[%s241 + $0x2c] sm:$0xf]
        %v260 = vld [vmem:[%s241 + $0x30] sm:$0xf]
        %v261 = vld [vmem:[%s241 + $0x34] sm:$0xf]
        %v262 = vld [vmem:[%s241 + $0x38] sm:$0xf]
        %v263 = vld [vmem:[%s241 + $0x3c] sm:$0xf]
        %v264 = vld [vmem:[#allocation4] sm:$0xf]
        %v265 = vld [vmem:[#allocation4 + $0x4] sm:$0xf]
        %v266 = vld [vmem:[#allocation4 + $0x8] sm:$0xf]
        %v267 = vld [vmem:[#allocation4 + $0xc] sm:$0xf]
        %v268 = vld [vmem:[#allocation4 + $0x10] sm:$0xf]
        %v269 = vld [vmem:[#allocation4 + $0x14] sm:$0xf]
        %v270 = vld [vmem:[#allocation4 + $0x18] sm:$0xf]
        %v271 = vld [vmem:[#allocation4 + $0x1c] sm:$0xf]
        %v272 = vld [vmem:[#allocation4 + $0x20] sm:$0xf]
        %v273 = vld [vmem:[#allocation4 + $0x24] sm:$0xf]
        %v274 = vld [vmem:[#allocation4 + $0x28] sm:$0xf]
        %v275 = vld [vmem:[#allocation4 + $0x2c] sm:$0xf]
        %v276 = vld [vmem:[#allocation4 + $0x30] sm:$0xf]
        %v277 = vld [vmem:[#allocation4 + $0x34] sm:$0xf]
        %v278 = vld [vmem:[#allocation4 + $0x38] sm:$0xf]
        %v279 = vld [vmem:[#allocation4 + $0x3c] sm:$0xf]
        %v280 = vld [vmem:[%s241 + $0x40] sm:$0x1]
        %s281 = scalar_lea.vmem [#allocation4], 64
        %v282 = vld [vmem:[%s281] sm:$0xf]
        %v283 = vld [vmem:[%s281 + $0x4] sm:$0xf]
        %v284 = vld [vmem:[%s281 + $0x8] sm:$0xf]
        %v285 = vld [vmem:[%s281 + $0xc] sm:$0xf]
        %v286 = vld [vmem:[%s281 + $0x10] sm:$0xf]
        %v287 = vld [vmem:[%s281 + $0x14] sm:$0xf]
        %v288 = vld [vmem:[%s281 + $0x18] sm:$0xf]
        %v289 = vld [vmem:[%s281 + $0x1c] sm:$0xf]
        %v290 = vld [vmem:[%s281 + $0x20] sm:$0xf]
        %v291 = vld [vmem:[%s281 + $0x24] sm:$0xf]
        %v292 = vld [vmem:[%s281 + $0x28] sm:$0xf]
        %v293 = vld [vmem:[%s281 + $0x2c] sm:$0xf]
        %v294 = vld [vmem:[%s281 + $0x30] sm:$0xf]
        %v295 = vld [vmem:[%s281 + $0x34] sm:$0xf]
        %v296 = vld [vmem:[%s281 + $0x38] sm:$0xf]
        %v297 = vld [vmem:[%s281 + $0x3c] sm:$0xf]
        %v315 = vunpack.c.l.b16 %v248
        %v316 = vunpack.c.l.b16 %v249
        %v317 = vunpack.c.l.b16 %v250
        %v318 = vunpack.c.l.b16 %v251
        %v319 = vunpack.c.l.b16 %v252
        %v320 = vunpack.c.l.b16 %v253
        %v321 = vunpack.c.l.b16 %v254
        %v322 = vunpack.c.l.b16 %v255
        %v323 = vunpack.c.l.b16 %v256
        %v324 = vunpack.c.l.b16 %v257
        %v325 = vunpack.c.l.b16 %v258
        %v326 = vunpack.c.l.b16 %v259
        %v327 = vunpack.c.l.b16 %v260
        %v328 = vunpack.c.l.b16 %v261
        %v329 = vunpack.c.l.b16 %v262
        %v330 = vunpack.c.l.b16 %v263
        %v331 = vunpack.c.l.b16 %v280
        %v332 = vpack.c.b16 %v316, %v315
        %v333 = vpack.c.b16 %v318, %v317
        %v334 = vpack.c.b16 %v320, %v319
        %v335 = vpack.c.b16 %v322, %v321
        %v336 = vpack.c.b16 %v324, %v323
        %v337 = vpack.c.b16 %v326, %v325
        %v338 = vpack.c.b16 %v328, %v327
        %v339 = vpack.c.b16 %v330, %v329
        %v340 = vpack.c.b16 %v331, %v331
        %vm341 = vsmask.f32 7424
        %v343 = vshrl.u32 %v332, 16
        %v345 = vshll.u32 %v332, 16
        %v347 = vrot.slane %v345, 1
        %v348 = vor.u32 %v343, %v347
        %v350 = vshll.u32 %v333, 16
        %v352 = vrot.slane %v350, 1
        %v353 = vsel %vm341, %v348, %v352
        %v354 = vshrl.u32 %v333, 16
        %v356 = vor.u32 %v354, %v352
        %v358 = vshll.u32 %v334, 16
        %v360 = vrot.slane %v358, 1
        %v361 = vsel %vm341, %v356, %v360
        %v362 = vshrl.u32 %v334, 16
        %v364 = vor.u32 %v362, %v360
        %v366 = vshll.u32 %v335, 16
        %v368 = vrot.slane %v366, 1
        %v369 = vsel %vm341, %v364, %v368
        %v370 = vshrl.u32 %v335, 16
        %v372 = vor.u32 %v370, %v368
        %v374 = vshll.u32 %v336, 16
        %v376 = vrot.slane %v374, 1
        %v377 = vsel %vm341, %v372, %v376
        %v378 = vshrl.u32 %v336, 16
        %v380 = vor.u32 %v378, %v376
        %v382 = vshll.u32 %v337, 16
        %v384 = vrot.slane %v382, 1
        %v385 = vsel %vm341, %v380, %v384
        %v386 = vshrl.u32 %v337, 16
        %v388 = vor.u32 %v386, %v384
        %v390 = vshll.u32 %v338, 16
        %v392 = vrot.slane %v390, 1
        %v393 = vsel %vm341, %v388, %v392
        %v394 = vshrl.u32 %v338, 16
        %v396 = vor.u32 %v394, %v392
        %v398 = vshll.u32 %v339, 16
        %v400 = vrot.slane %v398, 1
        %v401 = vsel %vm341, %v396, %v400
        %v402 = vshrl.u32 %v339, 16
        %v404 = vor.u32 %v402, %v400
        %v406 = vshll.u32 %v340, 16
        %v408 = vrot.slane %v406, 1
        %v409 = vsel %vm341, %v404, %v408
        %v434 = vunpack.c.l.b16 %v282
        %v435 = vunpack.c.l.b16 %v283
        %v436 = vunpack.c.l.b16 %v284
        %v437 = vunpack.c.l.b16 %v285
        %v438 = vunpack.c.l.b16 %v286
        %v439 = vunpack.c.l.b16 %v287
        %v440 = vunpack.c.l.b16 %v288
        %v441 = vunpack.c.l.b16 %v289
        %v442 = vunpack.c.l.b16 %v290
        %v443 = vunpack.c.l.b16 %v291
        %v444 = vunpack.c.l.b16 %v292
        %v445 = vunpack.c.l.b16 %v293
        %v446 = vunpack.c.l.b16 %v294
        %v447 = vunpack.c.l.b16 %v295
        %v448 = vunpack.c.l.b16 %v296
        %v449 = vunpack.c.l.b16 %v297
        %v450 = vpack.c.b16 %v435, %v434
        %v451 = vpack.c.b16 %v437, %v436
        %v452 = vpack.c.b16 %v439, %v438
        %v453 = vpack.c.b16 %v441, %v440
        %v454 = vpack.c.b16 %v443, %v442
        %v455 = vpack.c.b16 %v445, %v444
        %v456 = vpack.c.b16 %v447, %v446
        %v457 = vpack.c.b16 %v449, %v448
        %466 = vmatprep.subr.bf16.mxu0 0
        %467 = vmatpush1.bf16.msra.mxu0 %v450
        %468 = vmatprep.subr.bf16.mxu0 0
        %469 = vmatpush1.bf16.msra.mxu0 %v451
        %470 = vmatprep.subr.bf16.mxu0 0
        %471 = vmatpush1.bf16.msra.mxu0 %v452
        %472 = vmatprep.subr.bf16.mxu0 0
        %473 = vmatpush1.bf16.msra.mxu0 %v453
        %474 = vmatprep.subr.bf16.mxu0 0
        %475 = vmatpush1.bf16.msra.mxu0 %v454
        %476 = vmatprep.subr.bf16.mxu0 0
        %477 = vmatpush1.bf16.msra.mxu0 %v455
        %478 = vmatprep.subr.bf16.mxu0 0
        %479 = vmatpush1.bf16.msra.mxu0 %v456
        %480 = vmatprep.subr.bf16.mxu0 0
        %481 = vmatpush1.bf16.msra.mxu0 %v457
        %482 = vmatprep.subr.bf16.mxu0 0
        %483 = vmatpush1.bf16.msra.mxu0 0
        %484 = vmatprep.subr.bf16.mxu0 0
        %485 = vmatpush1.bf16.msra.mxu0 0
        %486 = vmatprep.subr.bf16.mxu0 0
        %487 = vmatpush1.bf16.msra.mxu0 0
        %488 = vmatprep.subr.bf16.mxu0 0
        %489 = vmatpush1.bf16.msra.mxu0 0
        %490 = vmatprep.subr.bf16.mxu0 0
        %491 = vmatpush1.bf16.msra.mxu0 0
        %492 = vmatprep.subr.bf16.mxu0 0
        %493 = vmatpush1.bf16.msra.mxu0 0
        %494 = vmatprep.subr.bf16.mxu0 0
        %495 = vmatpush1.bf16.msra.mxu0 0
        %496 = vmatprep.subr.bf16.mxu0 0
        %497 = vmatpush1.bf16.msra.mxu0 0
        %498 = vmatprep.mubr.bf16.mxu0 0
        %499 = vmatmul.mubr.bf16.gmra.mrb[0].mxu0 %v353
        %v500 = vpop.f32.mrb[0].mxu0
        %v501 = vadd.f32 0.0, %v500
        %v502 = vpop.f32.mrb[0].mxu0
        %v503 = vpop.f32.mrb[0].mxu0
        %v504 = vadd.f32 0.0, %v503
        %v505 = vpop.f32.mrb[0].mxu0
        %506 = vmatprep.mubr.bf16.mxu0 0
        %507 = vmatmul.mubr.bf16.gmra.mrb[0].mxu0 %v361
        %v508 = vpop.f32.mrb[0].mxu0
        %v509 = vadd.f32 0.0, %v508
        %v510 = vpop.f32.mrb[0].mxu0
        %v511 = vpop.f32.mrb[0].mxu0
        %v512 = vadd.f32 0.0, %v511
        %v513 = vpop.f32.mrb[0].mxu0
        %514 = vmatprep.mubr.bf16.mxu0 0
        %515 = vmatmul.mubr.bf16.gmra.mrb[0].mxu0 %v369
        %v516 = vpop.f32.mrb[0].mxu0
        %v517 = vadd.f32 0.0, %v516
        %v518 = vpop.f32.mrb[0].mxu0
        %v519 = vpop.f32.mrb[0].mxu0
        %v520 = vadd.f32 0.0, %v519
        %v521 = vpop.f32.mrb[0].mxu0
        %522 = vmatprep.mubr.bf16.mxu0 0
        %523 = vmatmul.mubr.bf16.gmra.mrb[0].mxu0 %v377
        %v524 = vpop.f32.mrb[0].mxu0
        %v525 = vadd.f32 0.0, %v524
        %v526 = vpop.f32.mrb[0].mxu0
        %v527 = vpop.f32.mrb[0].mxu0
        %v528 = vadd.f32 0.0, %v527
        %v529 = vpop.f32.mrb[0].mxu0
        %530 = vmatprep.mubr.bf16.mxu0 0
        %531 = vmatmul.mubr.bf16.gmra.mrb[0].mxu0 %v385
        %v532 = vpop.f32.mrb[0].mxu0
        %v533 = vadd.f32 0.0, %v532
        %v534 = vpop.f32.mrb[0].mxu0
        %v535 = vpop.f32.mrb[0].mxu0
        %v536 = vadd.f32 0.0, %v535
        %v537 = vpop.f32.mrb[0].mxu0
        %538 = vmatprep.mubr.bf16.mxu0 0
        %539 = vmatmul.mubr.bf16.gmra.mrb[0].mxu0 %v393
        %v540 = vpop.f32.mrb[0].mxu0
        %v541 = vadd.f32 0.0, %v540
        %v542 = vpop.f32.mrb[0].mxu0
        %v543 = vpop.f32.mrb[0].mxu0
        %v544 = vadd.f32 0.0, %v543
        %v545 = vpop.f32.mrb[0].mxu0
        %546 = vmatprep.mubr.bf16.mxu0 0
        %547 = vmatmul.mubr.bf16.gmra.mrb[0].mxu0 %v401
        %v548 = vpop.f32.mrb[0].mxu0
        %v549 = vadd.f32 0.0, %v548
        %v550 = vpop.f32.mrb[0].mxu0
        %v551 = vpop.f32.mrb[0].mxu0
        %v552 = vadd.f32 0.0, %v551
        %v553 = vpop.f32.mrb[0].mxu0
        %554 = vmatprep.mubr.bf16.mxu0 0
        %555 = vmatmul.mubr.bf16.gmra.mrb[0].mxu0 %v409
        %v556 = vpop.f32.mrb[0].mxu0
        %v557 = vadd.f32 0.0, %v556
        %v558 = vpop.f32.mrb[0].mxu0
        %v559 = vpop.f32.mrb[0].mxu0
        %v560 = vadd.f32 0.0, %v559
        %v561 = vpop.f32.mrb[0].mxu0
        %562 = vdwg.mxu0
        %v587 = vunpack.c.l.b16 %v264
        %v588 = vunpack.c.l.b16 %v265
        %v589 = vunpack.c.l.b16 %v266
        %v590 = vunpack.c.l.b16 %v267
        %v591 = vunpack.c.l.b16 %v268
        %v592 = vunpack.c.l.b16 %v269
        %v593 = vunpack.c.l.b16 %v270
        %v594 = vunpack.c.l.b16 %v271
        %v595 = vunpack.c.l.b16 %v272
        %v596 = vunpack.c.l.b16 %v273
        %v597 = vunpack.c.l.b16 %v274
        %v598 = vunpack.c.l.b16 %v275
        %v599 = vunpack.c.l.b16 %v276
        %v600 = vunpack.c.l.b16 %v277
        %v601 = vunpack.c.l.b16 %v278
        %v602 = vunpack.c.l.b16 %v279
        %v603 = vpack.c.b16 %v588, %v587
        %v604 = vpack.c.b16 %v590, %v589
        %v605 = vpack.c.b16 %v592, %v591
        %v606 = vpack.c.b16 %v594, %v593
        %v607 = vpack.c.b16 %v596, %v595
        %v608 = vpack.c.b16 %v598, %v597
        %v609 = vpack.c.b16 %v600, %v599
        %v610 = vpack.c.b16 %v602, %v601
        %619 = vmatprep.subr.bf16.mxu0 0
        %620 = vmatpush1.bf16.msra.mxu0 %v603
        %621 = vmatprep.subr.bf16.mxu0 0
        %622 = vmatpush1.bf16.msra.mxu0 %v604
        %623 = vmatprep.subr.bf16.mxu0 0
        %624 = vmatpush1.bf16.msra.mxu0 %v605
        %625 = vmatprep.subr.bf16.mxu0 0
        %626 = vmatpush1.bf16.msra.mxu0 %v606
        %627 = vmatprep.subr.bf16.mxu0 0
        %628 = vmatpush1.bf16.msra.mxu0 %v607
        %629 = vmatprep.subr.bf16.mxu0 0
        %630 = vmatpush1.bf16.msra.mxu0 %v608
        %631 = vmatprep.subr.bf16.mxu0 0
        %632 = vmatpush1.bf16.msra.mxu0 %v609
        %633 = vmatprep.subr.bf16.mxu0 0
        %634 = vmatpush1.bf16.msra.mxu0 %v610
        %635 = vmatprep.subr.bf16.mxu0 0
        %636 = vmatpush1.bf16.msra.mxu0 0
        %637 = vmatprep.subr.bf16.mxu0 0
        %638 = vmatpush1.bf16.msra.mxu0 0
        %639 = vmatprep.subr.bf16.mxu0 0
        %640 = vmatpush1.bf16.msra.mxu0 0
        %641 = vmatprep.subr.bf16.mxu0 0
        %642 = vmatpush1.bf16.msra.mxu0 0
        %643 = vmatprep.subr.bf16.mxu0 0
        %644 = vmatpush1.bf16.msra.mxu0 0
        %645 = vmatprep.subr.bf16.mxu0 0
        %646 = vmatpush1.bf16.msra.mxu0 0
        %647 = vmatprep.subr.bf16.mxu0 0
        %648 = vmatpush1.bf16.msra.mxu0 0
        %649 = vmatprep.subr.bf16.mxu0 0
        %650 = vmatpush1.bf16.msra.mxu0 0
        %651 = vmatprep.mubr.bf16.mxu0 0
        %652 = vmatmul.mubr.bf16.gmra.mrb[0].mxu0 %v332
        %v653 = vpop.f32.mrb[0].mxu0
        %v654 = vadd.f32 %v501, %v653
        %v655 = vpop.f32.mrb[0].mxu0
        %v656 = vpop.f32.mrb[0].mxu0
        %v657 = vadd.f32 %v504, %v656
        %v658 = vpop.f32.mrb[0].mxu0
        %659 = vmatprep.mubr.bf16.mxu0 0
        %660 = vmatmul.mubr.bf16.gmra.mrb[0].mxu0 %v333
        %v661 = vpop.f32.mrb[0].mxu0
        %v662 = vadd.f32 %v509, %v661
        %v663 = vpop.f32.mrb[0].mxu0
        %v664 = vpop.f32.mrb[0].mxu0
        %v665 = vadd.f32 %v512, %v664
        %v666 = vpop.f32.mrb[0].mxu0
        %667 = vmatprep.mubr.bf16.mxu0 0
        %668 = vmatmul.mubr.bf16.gmra.mrb[0].mxu0 %v334
        %v669 = vpop.f32.mrb[0].mxu0
        %v670 = vadd.f32 %v517, %v669
        %v671 = vpop.f32.mrb[0].mxu0
        %v672 = vpop.f32.mrb[0].mxu0
        %v673 = vadd.f32 %v520, %v672
        %v674 = vpop.f32.mrb[0].mxu0
        %675 = vmatprep.mubr.bf16.mxu0 0
        %676 = vmatmul.mubr.bf16.gmra.mrb[0].mxu0 %v335
        %v677 = vpop.f32.mrb[0].mxu0
        %v678 = vadd.f32 %v525, %v677
        %v679 = vpop.f32.mrb[0].mxu0
        %v680 = vpop.f32.mrb[0].mxu0
        %v681 = vadd.f32 %v528, %v680
        %v682 = vpop.f32.mrb[0].mxu0
        %683 = vmatprep.mubr.bf16.mxu0 0
        %684 = vmatmul.mubr.bf16.gmra.mrb[0].mxu0 %v336
        %v685 = vpop.f32.mrb[0].mxu0
        %v686 = vadd.f32 %v533, %v685
        %v687 = vpop.f32.mrb[0].mxu0
        %v688 = vpop.f32.mrb[0].mxu0
        %v689 = vadd.f32 %v536, %v688
        %v690 = vpop.f32.mrb[0].mxu0
        %691 = vmatprep.mubr.bf16.mxu0 0
        %692 = vmatmul.mubr.bf16.gmra.mrb[0].mxu0 %v337
        %v693 = vpop.f32.mrb[0].mxu0
        %v694 = vadd.f32 %v541, %v693
        %v695 = vpop.f32.mrb[0].mxu0
        %v696 = vpop.f32.mrb[0].mxu0
        %v697 = vadd.f32 %v544, %v696
        %v698 = vpop.f32.mrb[0].mxu0
        %699 = vmatprep.mubr.bf16.mxu0 0
        %700 = vmatmul.mubr.bf16.gmra.mrb[0].mxu0 %v338
        %v701 = vpop.f32.mrb[0].mxu0
        %v702 = vadd.f32 %v549, %v701
        %v703 = vpop.f32.mrb[0].mxu0
        %v704 = vpop.f32.mrb[0].mxu0
        %v705 = vadd.f32 %v552, %v704
        %v706 = vpop.f32.mrb[0].mxu0
        %707 = vmatprep.mubr.bf16.mxu0 0
        %708 = vmatmul.mubr.bf16.gmra.mrb[0].mxu0 %v339
        %v709 = vpop.f32.mrb[0].mxu0
        %v710 = vadd.f32 %v557, %v709
        %v711 = vpop.f32.mrb[0].mxu0
        %v712 = vpop.f32.mrb[0].mxu0
        %v713 = vadd.f32 %v560, %v712
        %v714 = vpop.f32.mrb[0].mxu0
        %715 = vdwg.mxu0
        %v716 = vld [vmem:[%s241] sm:$0xe]
        %s717 = scalar_lea.vmem [#allocation4], 128
        %v718 = vld [vmem:[%s717] sm:$0xf]
        %v719 = vld [vmem:[%s717 + $0x4] sm:$0xf]
        %v720 = vld [vmem:[%s717 + $0x8] sm:$0xf]
        %v721 = vld [vmem:[%s717 + $0xc] sm:$0xf]
        %v722 = vld [vmem:[%s717 + $0x10] sm:$0xf]
        %v723 = vld [vmem:[%s717 + $0x14] sm:$0xf]
        %v724 = vld [vmem:[%s717 + $0x18] sm:$0xf]
        %v725 = vld [vmem:[%s717 + $0x1c] sm:$0xf]
        %v726 = vld [vmem:[%s717 + $0x20] sm:$0xf]
        %v727 = vld [vmem:[%s717 + $0x24] sm:$0xf]
        %v728 = vld [vmem:[%s717 + $0x28] sm:$0xf]
        %v729 = vld [vmem:[%s717 + $0x2c] sm:$0xf]
        %v730 = vld [vmem:[%s717 + $0x30] sm:$0xf]
        %v731 = vld [vmem:[%s717 + $0x34] sm:$0xf]
        %v732 = vld [vmem:[%s717 + $0x38] sm:$0xf]
        %v733 = vld [vmem:[%s717 + $0x3c] sm:$0xf]
        %v735 = vunpack.c.l.b16 %v716
        %v736 = vpack.c.b16 %v316, %v735
        %vm737 = vcmask 1046528
        %v738 = vrot.slane %v736, 1
        %v739 = vrot.slane %v333, 1
        %v740 = vsel %vm737, %v738, %v739
        %v741 = vrot.slane %v334, 1
        %v742 = vsel %vm737, %v739, %v741
        %v743 = vrot.slane %v335, 1
        %v744 = vsel %vm737, %v741, %v743
        %v745 = vrot.slane %v336, 1
        %v746 = vsel %vm737, %v743, %v745
        %v747 = vrot.slane %v337, 1
        %v748 = vsel %vm737, %v745, %v747
        %v749 = vrot.slane %v338, 1
        %v750 = vsel %vm737, %v747, %v749
        %v751 = vrot.slane %v339, 1
        %v752 = vsel %vm737, %v749, %v751
        %v753 = vrot.slane %v340, 1
        %v754 = vsel %vm737, %v751, %v753
        %v779 = vunpack.c.l.b16 %v718
        %v780 = vunpack.c.l.b16 %v719
        %v781 = vunpack.c.l.b16 %v720
        %v782 = vunpack.c.l.b16 %v721
        %v783 = vunpack.c.l.b16 %v722
        %v784 = vunpack.c.l.b16 %v723
        %v785 = vunpack.c.l.b16 %v724
        %v786 = vunpack.c.l.b16 %v725
        %v787 = vunpack.c.l.b16 %v726
        %v788 = vunpack.c.l.b16 %v727
        %v789 = vunpack.c.l.b16 %v728
        %v790 = vunpack.c.l.b16 %v729
        %v791 = vunpack.c.l.b16 %v730
        %v792 = vunpack.c.l.b16 %v731
        %v793 = vunpack.c.l.b16 %v732
        %v794 = vunpack.c.l.b16 %v733
        %v795 = vpack.c.b16 %v780, %v779
        %v796 = vpack.c.b16 %v782, %v781
        %v797 = vpack.c.b16 %v784, %v783
        %v798 = vpack.c.b16 %v786, %v785
        %v799 = vpack.c.b16 %v788, %v787
        %v800 = vpack.c.b16 %v790, %v789
        %v801 = vpack.c.b16 %v792, %v791
        %v802 = vpack.c.b16 %v794, %v793
        %811 = vmatprep.subr.bf16.mxu0 0
        %812 = vmatpush1.bf16.msra.mxu0 %v795
        %813 = vmatprep.subr.bf16.mxu0 0
        %814 = vmatpush1.bf16.msra.mxu0 %v796
        %815 = vmatprep.subr.bf16.mxu0 0
        %816 = vmatpush1.bf16.msra.mxu0 %v797
        %817 = vmatprep.subr.bf16.mxu0 0
        %818 = vmatpush1.bf16.msra.mxu0 %v798
        %819 = vmatprep.subr.bf16.mxu0 0
        %820 = vmatpush1.bf16.msra.mxu0 %v799
        %821 = vmatprep.subr.bf16.mxu0 0
        %822 = vmatpush1.bf16.msra.mxu0 %v800
        %823 = vmatprep.subr.bf16.mxu0 0
        %824 = vmatpush1.bf16.msra.mxu0 %v801
        %825 = vmatprep.subr.bf16.mxu0 0
        %826 = vmatpush1.bf16.msra.mxu0 %v802
        %827 = vmatprep.subr.bf16.mxu0 0
        %828 = vmatpush1.bf16.msra.mxu0 0
        %829 = vmatprep.subr.bf16.mxu0 0
        %830 = vmatpush1.bf16.msra.mxu0 0
        %831 = vmatprep.subr.bf16.mxu0 0
        %832 = vmatpush1.bf16.msra.mxu0 0
        %833 = vmatprep.subr.bf16.mxu0 0
        %834 = vmatpush1.bf16.msra.mxu0 0
        %835 = vmatprep.subr.bf16.mxu0 0
        %836 = vmatpush1.bf16.msra.mxu0 0
        %837 = vmatprep.subr.bf16.mxu0 0
        %838 = vmatpush1.bf16.msra.mxu0 0
        %839 = vmatprep.subr.bf16.mxu0 0
        %840 = vmatpush1.bf16.msra.mxu0 0
        %841 = vmatprep.subr.bf16.mxu0 0
        %842 = vmatpush1.bf16.msra.mxu0 0
        %843 = vmatprep.mubr.bf16.mxu0 0
        %844 = vmatmul.mubr.bf16.gmra.mrb[0].mxu0 %v740
        %v845 = vpop.f32.mrb[0].mxu0
        %v846 = vadd.f32 0.0, %v845
        %v847 = vpop.f32.mrb[0].mxu0
        %v848 = vpop.f32.mrb[0].mxu0
        %v849 = vadd.f32 0.0, %v848
        %v850 = vpop.f32.mrb[0].mxu0
        %851 = vmatprep.mubr.bf16.mxu0 0
        %852 = vmatmul.mubr.bf16.gmra.mrb[0].mxu0 %v742
        %v853 = vpop.f32.mrb[0].mxu0
        %v854 = vadd.f32 0.0, %v853
        %v855 = vpop.f32.mrb[0].mxu0
        %v856 = vpop.f32.mrb[0].mxu0
        %v857 = vadd.f32 0.0, %v856
        %v858 = vpop.f32.mrb[0].mxu0
        %859 = vmatprep.mubr.bf16.mxu0 0
        %860 = vmatmul.mubr.bf16.gmra.mrb[0].mxu0 %v744
        %v861 = vpop.f32.mrb[0].mxu0
        %v862 = vadd.f32 0.0, %v861
        %v863 = vpop.f32.mrb[0].mxu0
        %v864 = vpop.f32.mrb[0].mxu0
        %v865 = vadd.f32 0.0, %v864
        %v866 = vpop.f32.mrb[0].mxu0
        %867 = vmatprep.mubr.bf16.mxu0 0
        %868 = vmatmul.mubr.bf16.gmra.mrb[0].mxu0 %v746
        %v869 = vpop.f32.mrb[0].mxu0
        %v870 = vadd.f32 0.0, %v869
        %v871 = vpop.f32.mrb[0].mxu0
        %v872 = vpop.f32.mrb[0].mxu0
        %v873 = vadd.f32 0.0, %v872
        %v874 = vpop.f32.mrb[0].mxu0
        %875 = vmatprep.mubr.bf16.mxu0 0
        %876 = vmatmul.mubr.bf16.gmra.mrb[0].mxu0 %v748
        %v877 = vpop.f32.mrb[0].mxu0
        %v878 = vadd.f32 0.0, %v877
        %v879 = vpop.f32.mrb[0].mxu0
        %v880 = vpop.f32.mrb[0].mxu0
        %v881 = vadd.f32 0.0, %v880
        %v882 = vpop.f32.mrb[0].mxu0
        %883 = vmatprep.mubr.bf16.mxu0 0
        %884 = vmatmul.mubr.bf16.gmra.mrb[0].mxu0 %v750
        %v885 = vpop.f32.mrb[0].mxu0
        %v886 = vadd.f32 0.0, %v885
        %v887 = vpop.f32.mrb[0].mxu0
        %v888 = vpop.f32.mrb[0].mxu0
        %v889 = vadd.f32 0.0, %v888
        %v890 = vpop.f32.mrb[0].mxu0
        %891 = vmatprep.mubr.bf16.mxu0 0
        %892 = vmatmul.mubr.bf16.gmra.mrb[0].mxu0 %v752
        %v893 = vpop.f32.mrb[0].mxu0
        %v894 = vadd.f32 0.0, %v893
        %v895 = vpop.f32.mrb[0].mxu0
        %v896 = vpop.f32.mrb[0].mxu0
        %v897 = vadd.f32 0.0, %v896
        %v898 = vpop.f32.mrb[0].mxu0
        %899 = vmatprep.mubr.bf16.mxu0 0
        %900 = vmatmul.mubr.bf16.gmra.mrb[0].mxu0 %v754
        %v901 = vpop.f32.mrb[0].mxu0
        %v902 = vadd.f32 0.0, %v901
        %v903 = vpop.f32.mrb[0].mxu0
        %v904 = vpop.f32.mrb[0].mxu0
        %v905 = vadd.f32 0.0, %v904
        %v906 = vpop.f32.mrb[0].mxu0
        %907 = vdwg.mxu0
        %v908 = vadd.f32 %v654, %v846
        %v909 = vadd.f32 %v657, %v849
        %v910 = vadd.f32 %v662, %v854
        %v911 = vadd.f32 %v665, %v857
        %v912 = vadd.f32 %v670, %v862
        %v913 = vadd.f32 %v673, %v865
        %v914 = vadd.f32 %v678, %v870
        %v915 = vadd.f32 %v681, %v873
        %v916 = vadd.f32 %v686, %v878
        %v917 = vadd.f32 %v689, %v881
        %v918 = vadd.f32 %v694, %v886
        %v919 = vadd.f32 %v697, %v889
        %v920 = vadd.f32 %v702, %v894
        %v921 = vadd.f32 %v705, %v897
        %v922 = vadd.f32 %v710, %v902
        %v923 = vadd.f32 %v713, %v905
        %v924 = vld [vmem:[%s241 + $0x8] sm:$0xe]
        %v925 = vld [vmem:[%s241 + $0xc] sm:$0xf]
        %v926 = vld [vmem:[%s241 + $0x10] sm:$0xf]
        %v927 = vld [vmem:[%s241 + $0x14] sm:$0xf]
        %v928 = vld [vmem:[%s241 + $0x18] sm:$0xf]
        %v929 = vld [vmem:[%s241 + $0x1c] sm:$0xf]
        %v930 = vld [vmem:[%s241 + $0x20] sm:$0xf]
        %v931 = vld [vmem:[%s241 + $0x24] sm:$0xf]
        %v932 = vld [vmem:[%s241 + $0x28] sm:$0xf]
        %v933 = vld [vmem:[%s241 + $0x2c] sm:$0xf]
        %v934 = vld [vmem:[%s241 + $0x30] sm:$0xf]
        %v935 = vld [vmem:[%s241 + $0x34] sm:$0xf]
        %v936 = vld [vmem:[%s241 + $0x38] sm:$0xf]
        %v937 = vld [vmem:[%s241 + $0x3c] sm:$0xf]
        %v938 = vld [vmem:[%s241 + $0x40] sm:$0xf]
        %v939 = vld [vmem:[%s241 + $0x44] sm:$0xf]
        %v940 = vld [vmem:[%s241 + $0x48] sm:$0x1]
        %s941 = scalar_lea.vmem [#allocation4], 192
        %v942 = vld [vmem:[%s941] sm:$0xf]
        %v943 = vld [vmem:[%s941 + $0x4] sm:$0xf]
        %v944 = vld [vmem:[%s941 + $0x8] sm:$0xf]
        %v945 = vld [vmem:[%s941 + $0xc] sm:$0xf]
        %v946 = vld [vmem:[%s941 + $0x10] sm:$0xf]
        %v947 = vld [vmem:[%s941 + $0x14] sm:$0xf]
        %v948 = vld [vmem:[%s941 + $0x18] sm:$0xf]
        %v949 = vld [vmem:[%s941 + $0x1c] sm:$0xf]
        %v950 = vld [vmem:[%s941 + $0x20] sm:$0xf]
        %v951 = vld [vmem:[%s941 + $0x24] sm:$0xf]
        %v952 = vld [vmem:[%s941 + $0x28] sm:$0xf]
        %v953 = vld [vmem:[%s941 + $0x2c] sm:$0xf]
        %v954 = vld [vmem:[%s941 + $0x30] sm:$0xf]
        %v955 = vld [vmem:[%s941 + $0x34] sm:$0xf]
        %v956 = vld [vmem:[%s941 + $0x38] sm:$0xf]
        %v957 = vld [vmem:[%s941 + $0x3c] sm:$0xf]
        %v975 = vunpack.c.l.b16 %v924
        %v976 = vunpack.c.l.b16 %v925
        %v977 = vunpack.c.l.b16 %v926
        %v978 = vunpack.c.l.b16 %v927
        %v979 = vunpack.c.l.b16 %v928
        %v980 = vunpack.c.l.b16 %v929
        %v981 = vunpack.c.l.b16 %v930
        %v982 = vunpack.c.l.b16 %v931
        %v983 = vunpack.c.l.b16 %v932
        %v984 = vunpack.c.l.b16 %v933
        %v985 = vunpack.c.l.b16 %v934
        %v986 = vunpack.c.l.b16 %v935
        %v987 = vunpack.c.l.b16 %v936
        %v988 = vunpack.c.l.b16 %v937
        %v989 = vunpack.c.l.b16 %v938
        %v990 = vunpack.c.l.b16 %v939
        %v991 = vunpack.c.l.b16 %v940
        %v992 = vpack.c.b16 %v976, %v975
        %v993 = vpack.c.b16 %v978, %v977
        %v994 = vpack.c.b16 %v980, %v979
        %v995 = vpack.c.b16 %v982, %v981
        %v996 = vpack.c.b16 %v984, %v983
        %v997 = vpack.c.b16 %v986, %v985
        %v998 = vpack.c.b16 %v988, %v987
        %v999 = vpack.c.b16 %v990, %v989
        %v1000 = vpack.c.b16 %v991, %v991
        %v1001 = vrot.slane %v992, 1
        %v1002 = vrot.slane %v993, 1
        %v1003 = vsel %vm737, %v1001, %v1002
        %v1004 = vrot.slane %v994, 1
        %v1005 = vsel %vm737, %v1002, %v1004
        %v1006 = vrot.slane %v995, 1
        %v1007 = vsel %vm737, %v1004, %v1006
        %v1008 = vrot.slane %v996, 1
        %v1009 = vsel %vm737, %v1006, %v1008
        %v1010 = vrot.slane %v997, 1
        %v1011 = vsel %vm737, %v1008, %v1010
        %v1012 = vrot.slane %v998, 1
        %v1013 = vsel %vm737, %v1010, %v1012
        %v1014 = vrot.slane %v999, 1
        %v1015 = vsel %vm737, %v1012, %v1014
        %v1016 = vrot.slane %v1000, 1
        %v1017 = vsel %vm737, %v1014, %v1016
        %v1042 = vunpack.c.l.b16 %v942
        %v1043 = vunpack.c.l.b16 %v943
        %v1044 = vunpack.c.l.b16 %v944
        %v1045 = vunpack.c.l.b16 %v945
        %v1046 = vunpack.c.l.b16 %v946
        %v1047 = vunpack.c.l.b16 %v947
        %v1048 = vunpack.c.l.b16 %v948
        %v1049 = vunpack.c.l.b16 %v949
        %v1050 = vunpack.c.l.b16 %v950
        %v1051 = vunpack.c.l.b16 %v951
        %v1052 = vunpack.c.l.b16 %v952
        %v1053 = vunpack.c.l.b16 %v953
        %v1054 = vunpack.c.l.b16 %v954
        %v1055 = vunpack.c.l.b16 %v955
        %v1056 = vunpack.c.l.b16 %v956
        %v1057 = vunpack.c.l.b16 %v957
        %v1058 = vpack.c.b16 %v1043, %v1042
        %v1059 = vpack.c.b16 %v1045, %v1044
        %v1060 = vpack.c.b16 %v1047, %v1046
        %v1061 = vpack.c.b16 %v1049, %v1048
        %v1062 = vpack.c.b16 %v1051, %v1050
        %v1063 = vpack.c.b16 %v1053, %v1052
        %v1064 = vpack.c.b16 %v1055, %v1054
        %v1065 = vpack.c.b16 %v1057, %v1056
        %1074 = vmatprep.subr.bf16.mxu0 0
        %1075 = vmatpush1.bf16.msra.mxu0 %v1058
        %1076 = vmatprep.subr.bf16.mxu0 0
        %1077 = vmatpush1.bf16.msra.mxu0 %v1059
        %1078 = vmatprep.subr.bf16.mxu0 0
        %1079 = vmatpush1.bf16.msra.mxu0 %v1060
        %1080 = vmatprep.subr.bf16.mxu0 0
        %1081 = vmatpush1.bf16.msra.mxu0 %v1061
        %1082 = vmatprep.subr.bf16.mxu0 0
        %1083 = vmatpush1.bf16.msra.mxu0 %v1062
        %1084 = vmatprep.subr.bf16.mxu0 0
        %1085 = vmatpush1.bf16.msra.mxu0 %v1063
        %1086 = vmatprep.subr.bf16.mxu0 0
        %1087 = vmatpush1.bf16.msra.mxu0 %v1064
        %1088 = vmatprep.subr.bf16.mxu0 0
        %1089 = vmatpush1.bf16.msra.mxu0 %v1065
        %1090 = vmatprep.subr.bf16.mxu0 0
        %1091 = vmatpush1.bf16.msra.mxu0 0
        %1092 = vmatprep.subr.bf16.mxu0 0
        %1093 = vmatpush1.bf16.msra.mxu0 0
        %1094 = vmatprep.subr.bf16.mxu0 0
        %1095 = vmatpush1.bf16.msra.mxu0 0
        %1096 = vmatprep.subr.bf16.mxu0 0
        %1097 = vmatpush1.bf16.msra.mxu0 0
        %1098 = vmatprep.subr.bf16.mxu0 0
        %1099 = vmatpush1.bf16.msra.mxu0 0
        %1100 = vmatprep.subr.bf16.mxu0 0
        %1101 = vmatpush1.bf16.msra.mxu0 0
        %1102 = vmatprep.subr.bf16.mxu0 0
        %1103 = vmatpush1.bf16.msra.mxu0 0
        %1104 = vmatprep.subr.bf16.mxu0 0
        %1105 = vmatpush1.bf16.msra.mxu0 0
        %1106 = vmatprep.mubr.bf16.mxu0 0
        %1107 = vmatmul.mubr.bf16.gmra.mrb[0].mxu0 %v1003
        %v1108 = vpop.f32.mrb[0].mxu0
        %v1109 = vadd.f32 0.0, %v1108
        %v1110 = vpop.f32.mrb[0].mxu0
        %v1111 = vpop.f32.mrb[0].mxu0
        %v1112 = vadd.f32 0.0, %v1111
        %v1113 = vpop.f32.mrb[0].mxu0
        %1114 = vmatprep.mubr.bf16.mxu0 0
        %1115 = vmatmul.mubr.bf16.gmra.mrb[0].mxu0 %v1005
        %v1116 = vpop.f32.mrb[0].mxu0
        %v1117 = vadd.f32 0.0, %v1116
        %v1118 = vpop.f32.mrb[0].mxu0
        %v1119 = vpop.f32.mrb[0].mxu0
        %v1120 = vadd.f32 0.0, %v1119
        %v1121 = vpop.f32.mrb[0].mxu0
        %1122 = vmatprep.mubr.bf16.mxu0 0
        %1123 = vmatmul.mubr.bf16.gmra.mrb[0].mxu0 %v1007
        %v1124 = vpop.f32.mrb[0].mxu0
        %v1125 = vadd.f32 0.0, %v1124
        %v1126 = vpop.f32.mrb[0].mxu0
        %v1127 = vpop.f32.mrb[0].mxu0
        %v1128 = vadd.f32 0.0, %v1127
        %v1129 = vpop.f32.mrb[0].mxu0
        %1130 = vmatprep.mubr.bf16.mxu0 0
        %1131 = vmatmul.mubr.bf16.gmra.mrb[0].mxu0 %v1009
        %v1132 = vpop.f32.mrb[0].mxu0
        %v1133 = vadd.f32 0.0, %v1132
        %v1134 = vpop.f32.mrb[0].mxu0
        %v1135 = vpop.f32.mrb[0].mxu0
        %v1136 = vadd.f32 0.0, %v1135
        %v1137 = vpop.f32.mrb[0].mxu0
        %1138 = vmatprep.mubr.bf16.mxu0 0
        %1139 = vmatmul.mubr.bf16.gmra.mrb[0].mxu0 %v1011
        %v1140 = vpop.f32.mrb[0].mxu0
        %v1141 = vadd.f32 0.0, %v1140
        %v1142 = vpop.f32.mrb[0].mxu0
        %v1143 = vpop.f32.mrb[0].mxu0
        %v1144 = vadd.f32 0.0, %v1143
        %v1145 = vpop.f32.mrb[0].mxu0
        %1146 = vmatprep.mubr.bf16.mxu0 0
        %1147 = vmatmul.mubr.bf16.gmra.mrb[0].mxu0 %v1013
        %v1148 = vpop.f32.mrb[0].mxu0
        %v1149 = vadd.f32 0.0, %v1148
        %v1150 = vpop.f32.mrb[0].mxu0
        %v1151 = vpop.f32.mrb[0].mxu0
        %v1152 = vadd.f32 0.0, %v1151
        %v1153 = vpop.f32.mrb[0].mxu0
        %1154 = vmatprep.mubr.bf16.mxu0 0
        %1155 = vmatmul.mubr.bf16.gmra.mrb[0].mxu0 %v1015
        %v1156 = vpop.f32.mrb[0].mxu0
        %v1157 = vadd.f32 0.0, %v1156
        %v1158 = vpop.f32.mrb[0].mxu0
        %v1159 = vpop.f32.mrb[0].mxu0
        %v1160 = vadd.f32 0.0, %v1159
        %v1161 = vpop.f32.mrb[0].mxu0
        %1162 = vmatprep.mubr.bf16.mxu0 0
        %1163 = vmatmul.mubr.bf16.gmra.mrb[0].mxu0 %v1017
        %v1164 = vpop.f32.mrb[0].mxu0
        %v1165 = vadd.f32 0.0, %v1164
        %v1166 = vpop.f32.mrb[0].mxu0
        %v1167 = vpop.f32.mrb[0].mxu0
        %v1168 = vadd.f32 0.0, %v1167
        %v1169 = vpop.f32.mrb[0].mxu0
        %1170 = vdwg.mxu0
        %v1171 = vadd.f32 %v908, %v1109
        %v1172 = vadd.f32 %v909, %v1112
        %v1173 = vadd.f32 %v910, %v1117
        %v1174 = vadd.f32 %v911, %v1120
        %v1175 = vadd.f32 %v912, %v1125
        %v1176 = vadd.f32 %v913, %v1128
        %v1177 = vadd.f32 %v914, %v1133
        %v1178 = vadd.f32 %v915, %v1136
        %v1179 = vadd.f32 %v916, %v1141
        %v1180 = vadd.f32 %v917, %v1144
        %v1181 = vadd.f32 %v918, %v1149
        %v1182 = vadd.f32 %v919, %v1152
        %v1183 = vadd.f32 %v920, %v1157
        %v1184 = vadd.f32 %v921, %v1160
        %v1185 = vadd.f32 %v922, %v1165
        %v1186 = vadd.f32 %v923, %v1168
        %v1187 = vld [vmem:[%s241 + $0x48] sm:$0x3]
        %s1188 = scalar_lea.vmem [#allocation4], 256
        %v1189 = vld [vmem:[%s1188] sm:$0xf]
        %v1190 = vld [vmem:[%s1188 + $0x4] sm:$0xf]
        %v1191 = vld [vmem:[%s1188 + $0x8] sm:$0xf]
        %v1192 = vld [vmem:[%s1188 + $0xc] sm:$0xf]
        %v1193 = vld [vmem:[%s1188 + $0x10] sm:$0xf]
        %v1194 = vld [vmem:[%s1188 + $0x14] sm:$0xf]
        %v1195 = vld [vmem:[%s1188 + $0x18] sm:$0xf]
        %v1196 = vld [vmem:[%s1188 + $0x1c] sm:$0xf]
        %v1197 = vld [vmem:[%s1188 + $0x20] sm:$0xf]
        %v1198 = vld [vmem:[%s1188 + $0x24] sm:$0xf]
        %v1199 = vld [vmem:[%s1188 + $0x28] sm:$0xf]
        %v1200 = vld [vmem:[%s1188 + $0x2c] sm:$0xf]
        %v1201 = vld [vmem:[%s1188 + $0x30] sm:$0xf]
        %v1202 = vld [vmem:[%s1188 + $0x34] sm:$0xf]
        %v1203 = vld [vmem:[%s1188 + $0x38] sm:$0xf]
        %v1204 = vld [vmem:[%s1188 + $0x3c] sm:$0xf]
        %v1206 = vunpack.c.l.b16 %v1187
        %v1207 = vpack.c.b16 %v1206, %v1206
        %vm1208 = vsmask.f32 6400
        %v1210 = vshrl.u32 %v992, 16
        %v1212 = vrot.slane %v1210, 1
        %v1213 = vshll.u32 %v992, 16
        %v1215 = vrot.slane %v1213, 2
        %v1216 = vor.u32 %v1212, %v1215
        %v1218 = vshrl.u32 %v993, 16
        %v1220 = vrot.slane %v1218, 1
        %v1221 = vshll.u32 %v993, 16
        %v1223 = vrot.slane %v1221, 2
        %v1224 = vor.u32 %v1220, %v1223
        %v1225 = vsel %vm1208, %v1216, %v1224
        %v1227 = vshrl.u32 %v994, 16
        %v1229 = vrot.slane %v1227, 1
        %v1230 = vshll.u32 %v994, 16
        %v1232 = vrot.slane %v1230, 2
        %v1233 = vor.u32 %v1229, %v1232
        %v1234 = vsel %vm1208, %v1224, %v1233
        %v1236 = vshrl.u32 %v995, 16
        %v1238 = vrot.slane %v1236, 1
        %v1239 = vshll.u32 %v995, 16
        %v1241 = vrot.slane %v1239, 2
        %v1242 = vor.u32 %v1238, %v1241
        %v1243 = vsel %vm1208, %v1233, %v1242
        %v1245 = vshrl.u32 %v996, 16
        %v1247 = vrot.slane %v1245, 1
        %v1248 = vshll.u32 %v996, 16
        %v1250 = vrot.slane %v1248, 2
        %v1251 = vor.u32 %v1247, %v1250
        %v1252 = vsel %vm1208, %v1242, %v1251
        %v1254 = vshrl.u32 %v997, 16
        %v1256 = vrot.slane %v1254, 1
        %v1257 = vshll.u32 %v997, 16
        %v1259 = vrot.slane %v1257, 2
        %v1260 = vor.u32 %v1256, %v1259
        %v1261 = vsel %vm1208, %v1251, %v1260
        %v1263 = vshrl.u32 %v998, 16
        %v1265 = vrot.slane %v1263, 1
        %v1266 = vshll.u32 %v998, 16
        %v1268 = vrot.slane %v1266, 2
        %v1269 = vor.u32 %v1265, %v1268
        %v1270 = vsel %vm1208, %v1260, %v1269
        %v1272 = vshrl.u32 %v999, 16
        %v1274 = vrot.slane %v1272, 1
        %v1275 = vshll.u32 %v999, 16
        %v1277 = vrot.slane %v1275, 2
        %v1278 = vor.u32 %v1274, %v1277
        %v1279 = vsel %vm1208, %v1269, %v1278
        %v1281 = vshrl.u32 %v1207, 16
        %v1283 = vrot.slane %v1281, 1
        %v1284 = vshll.u32 %v1207, 16
        %v1286 = vrot.slane %v1284, 2
        %v1287 = vor.u32 %v1283, %v1286
        %v1288 = vsel %vm1208, %v1278, %v1287
        %v1313 = vunpack.c.l.b16 %v1189
        %v1314 = vunpack.c.l.b16 %v1190
        %v1315 = vunpack.c.l.b16 %v1191
        %v1316 = vunpack.c.l.b16 %v1192
        %v1317 = vunpack.c.l.b16 %v1193
        %v1318 = vunpack.c.l.b16 %v1194
        %v1319 = vunpack.c.l.b16 %v1195
        %v1320 = vunpack.c.l.b16 %v1196
        %v1321 = vunpack.c.l.b16 %v1197
        %v1322 = vunpack.c.l.b16 %v1198
        %v1323 = vunpack.c.l.b16 %v1199
        %v1324 = vunpack.c.l.b16 %v1200
        %v1325 = vunpack.c.l.b16 %v1201
        %v1326 = vunpack.c.l.b16 %v1202
        %v1327 = vunpack.c.l.b16 %v1203
        %v1328 = vunpack.c.l.b16 %v1204
        %v1329 = vpack.c.b16 %v1314, %v1313
        %v1330 = vpack.c.b16 %v1316, %v1315
        %v1331 = vpack.c.b16 %v1318, %v1317
        %v1332 = vpack.c.b16 %v1320, %v1319
        %v1333 = vpack.c.b16 %v1322, %v1321
        %v1334 = vpack.c.b16 %v1324, %v1323
        %v1335 = vpack.c.b16 %v1326, %v1325
        %v1336 = vpack.c.b16 %v1328, %v1327
        %1345 = vmatprep.subr.bf16.mxu0 0
        %1346 = vmatpush1.bf16.msra.mxu0 %v1329
        %1347 = vmatprep.subr.bf16.mxu0 0
        %1348 = vmatpush1.bf16.msra.mxu0 %v1330
        %1349 = vmatprep.subr.bf16.mxu0 0
        %1350 = vmatpush1.bf16.msra.mxu0 %v1331
        %1351 = vmatprep.subr.bf16.mxu0 0
        %1352 = vmatpush1.bf16.msra.mxu0 %v1332
        %1353 = vmatprep.subr.bf16.mxu0 0
        %1354 = vmatpush1.bf16.msra.mxu0 %v1333
        %1355 = vmatprep.subr.bf16.mxu0 0
        %1356 = vmatpush1.bf16.msra.mxu0 %v1334
        %1357 = vmatprep.subr.bf16.mxu0 0
        %1358 = vmatpush1.bf16.msra.mxu0 %v1335
        %1359 = vmatprep.subr.bf16.mxu0 0
        %1360 = vmatpush1.bf16.msra.mxu0 %v1336
        %1361 = vmatprep.subr.bf16.mxu0 0
        %1362 = vmatpush1.bf16.msra.mxu0 0
        %1363 = vmatprep.subr.bf16.mxu0 0
        %1364 = vmatpush1.bf16.msra.mxu0 0
        %1365 = vmatprep.subr.bf16.mxu0 0
        %1366 = vmatpush1.bf16.msra.mxu0 0
        %1367 = vmatprep.subr.bf16.mxu0 0
        %1368 = vmatpush1.bf16.msra.mxu0 0
        %1369 = vmatprep.subr.bf16.mxu0 0
        %1370 = vmatpush1.bf16.msra.mxu0 0
        %1371 = vmatprep.subr.bf16.mxu0 0
        %1372 = vmatpush1.bf16.msra.mxu0 0
        %1373 = vmatprep.subr.bf16.mxu0 0
        %1374 = vmatpush1.bf16.msra.mxu0 0
        %1375 = vmatprep.subr.bf16.mxu0 0
        %1376 = vmatpush1.bf16.msra.mxu0 0
        %1377 = vmatprep.mubr.bf16.mxu0 0
        %1378 = vmatmul.mubr.bf16.gmra.mrb[0].mxu0 %v1225
        %v1379 = vpop.f32.mrb[0].mxu0
        %v1380 = vadd.f32 0.0, %v1379
        %v1381 = vpop.f32.mrb[0].mxu0
        %v1382 = vpop.f32.mrb[0].mxu0
        %v1383 = vadd.f32 0.0, %v1382
        %v1384 = vpop.f32.mrb[0].mxu0
        %1385 = vmatprep.mubr.bf16.mxu0 0
        %1386 = vmatmul.mubr.bf16.gmra.mrb[0].mxu0 %v1234
        %v1387 = vpop.f32.mrb[0].mxu0
        %v1388 = vadd.f32 0.0, %v1387
        %v1389 = vpop.f32.mrb[0].mxu0
        %v1390 = vpop.f32.mrb[0].mxu0
        %v1391 = vadd.f32 0.0, %v1390
        %v1392 = vpop.f32.mrb[0].mxu0
        %1393 = vmatprep.mubr.bf16.mxu0 0
        %1394 = vmatmul.mubr.bf16.gmra.mrb[0].mxu0 %v1243
        %v1395 = vpop.f32.mrb[0].mxu0
        %v1396 = vadd.f32 0.0, %v1395
        %v1397 = vpop.f32.mrb[0].mxu0
        %v1398 = vpop.f32.mrb[0].mxu0
        %v1399 = vadd.f32 0.0, %v1398
        %v1400 = vpop.f32.mrb[0].mxu0
        %1401 = vmatprep.mubr.bf16.mxu0 0
        %1402 = vmatmul.mubr.bf16.gmra.mrb[0].mxu0 %v1252
        %v1403 = vpop.f32.mrb[0].mxu0
        %v1404 = vadd.f32 0.0, %v1403
        %v1405 = vpop.f32.mrb[0].mxu0
        %v1406 = vpop.f32.mrb[0].mxu0
        %v1407 = vadd.f32 0.0, %v1406
        %v1408 = vpop.f32.mrb[0].mxu0
        %1409 = vmatprep.mubr.bf16.mxu0 0
        %1410 = vmatmul.mubr.bf16.gmra.mrb[0].mxu0 %v1261
        %v1411 = vpop.f32.mrb[0].mxu0
        %v1412 = vadd.f32 0.0, %v1411
        %v1413 = vpop.f32.mrb[0].mxu0
        %v1414 = vpop.f32.mrb[0].mxu0
        %v1415 = vadd.f32 0.0, %v1414
        %v1416 = vpop.f32.mrb[0].mxu0
        %1417 = vmatprep.mubr.bf16.mxu0 0
        %1418 = vmatmul.mubr.bf16.gmra.mrb[0].mxu0 %v1270
        %v1419 = vpop.f32.mrb[0].mxu0
        %v1420 = vadd.f32 0.0, %v1419
        %v1421 = vpop.f32.mrb[0].mxu0
        %v1422 = vpop.f32.mrb[0].mxu0
        %v1423 = vadd.f32 0.0, %v1422
        %v1424 = vpop.f32.mrb[0].mxu0
        %1425 = vmatprep.mubr.bf16.mxu0 0
        %1426 = vmatmul.mubr.bf16.gmra.mrb[0].mxu0 %v1279
        %v1427 = vpop.f32.mrb[0].mxu0
        %v1428 = vadd.f32 0.0, %v1427
        %v1429 = vpop.f32.mrb[0].mxu0
        %v1430 = vpop.f32.mrb[0].mxu0
        %v1431 = vadd.f32 0.0, %v1430
        %v1432 = vpop.f32.mrb[0].mxu0
        %1433 = vmatprep.mubr.bf16.mxu0 0
        %1434 = vmatmul.mubr.bf16.gmra.mrb[0].mxu0 %v1288
        %v1435 = vpop.f32.mrb[0].mxu0
        %v1436 = vadd.f32 0.0, %v1435
        %v1437 = vpop.f32.mrb[0].mxu0
        %v1438 = vpop.f32.mrb[0].mxu0
        %v1439 = vadd.f32 0.0, %v1438
        %v1440 = vpop.f32.mrb[0].mxu0
        %1441 = vdwg.mxu0
        %v1442 = vadd.f32 %v1171, %v1380
        %v1443 = vadd.f32 %v1172, %v1383
        %v1444 = vadd.f32 %v1173, %v1388
        %v1445 = vadd.f32 %v1174, %v1391
        %v1446 = vadd.f32 %v1175, %v1396
        %v1447 = vadd.f32 %v1176, %v1399
        %v1448 = vadd.f32 %v1177, %v1404
        %v1449 = vadd.f32 %v1178, %v1407
        %v1450 = vadd.f32 %v1179, %v1412
        %v1451 = vadd.f32 %v1180, %v1415
        %v1452 = vadd.f32 %v1181, %v1420
        %v1453 = vadd.f32 %v1182, %v1423
        %v1454 = vadd.f32 %v1183, %v1428
        %v1455 = vadd.f32 %v1184, %v1431
        %v1456 = vadd.f32 %v1185, %v1436
        %v1457 = vadd.f32 %v1186, %v1439
        %v1458 = vld [vmem:[%s241 + $0x8] sm:$0xc]
        %s1459 = scalar_lea.vmem [#allocation4], 320
        %v1460 = vld [vmem:[%s1459] sm:$0xf]
        %v1461 = vld [vmem:[%s1459 + $0x4] sm:$0xf]
        %v1462 = vld [vmem:[%s1459 + $0x8] sm:$0xf]
        %v1463 = vld [vmem:[%s1459 + $0xc] sm:$0xf]
        %v1464 = vld [vmem:[%s1459 + $0x10] sm:$0xf]
        %v1465 = vld [vmem:[%s1459 + $0x14] sm:$0xf]
        %v1466 = vld [vmem:[%s1459 + $0x18] sm:$0xf]
        %v1467 = vld [vmem:[%s1459 + $0x1c] sm:$0xf]
        %v1468 = vld [vmem:[%s1459 + $0x20] sm:$0xf]
        %v1469 = vld [vmem:[%s1459 + $0x24] sm:$0xf]
        %v1470 = vld [vmem:[%s1459 + $0x28] sm:$0xf]
        %v1471 = vld [vmem:[%s1459 + $0x2c] sm:$0xf]
        %v1472 = vld [vmem:[%s1459 + $0x30] sm:$0xf]
        %v1473 = vld [vmem:[%s1459 + $0x34] sm:$0xf]
        %v1474 = vld [vmem:[%s1459 + $0x38] sm:$0xf]
        %v1475 = vld [vmem:[%s1459 + $0x3c] sm:$0xf]
        %v1477 = vunpack.c.l.b16 %v1458
        %v1478 = vpack.c.b16 %v976, %v1477
        %vm1479 = vcmask 1045504
        %v1480 = vrot.slane %v1478, 2
        %v1481 = vrot.slane %v993, 2
        %v1482 = vsel %vm1479, %v1480, %v1481
        %v1483 = vrot.slane %v994, 2
        %v1484 = vsel %vm1479, %v1481, %v1483
        %v1485 = vrot.slane %v995, 2
        %v1486 = vsel %vm1479, %v1483, %v1485
        %v1487 = vrot.slane %v996, 2
        %v1488 = vsel %vm1479, %v1485, %v1487
        %v1489 = vrot.slane %v997, 2
        %v1490 = vsel %vm1479, %v1487, %v1489
        %v1491 = vrot.slane %v998, 2
        %v1492 = vsel %vm1479, %v1489, %v1491
        %v1493 = vrot.slane %v999, 2
        %v1494 = vsel %vm1479, %v1491, %v1493
        %v1495 = vrot.slane %v1207, 2
        %v1496 = vsel %vm1479, %v1493, %v1495
        %v1521 = vunpack.c.l.b16 %v1460
        %v1522 = vunpack.c.l.b16 %v1461
        %v1523 = vunpack.c.l.b16 %v1462
        %v1524 = vunpack.c.l.b16 %v1463
        %v1525 = vunpack.c.l.b16 %v1464
        %v1526 = vunpack.c.l.b16 %v1465
        %v1527 = vunpack.c.l.b16 %v1466
        %v1528 = vunpack.c.l.b16 %v1467
        %v1529 = vunpack.c.l.b16 %v1468
        %v1530 = vunpack.c.l.b16 %v1469
        %v1531 = vunpack.c.l.b16 %v1470
        %v1532 = vunpack.c.l.b16 %v1471
        %v1533 = vunpack.c.l.b16 %v1472
        %v1534 = vunpack.c.l.b16 %v1473
        %v1535 = vunpack.c.l.b16 %v1474
        %v1536 = vunpack.c.l.b16 %v1475
        %v1537 = vpack.c.b16 %v1522, %v1521
        %v1538 = vpack.c.b16 %v1524, %v1523
        %v1539 = vpack.c.b16 %v1526, %v1525
        %v1540 = vpack.c.b16 %v1528, %v1527
        %v1541 = vpack.c.b16 %v1530, %v1529
        %v1542 = vpack.c.b16 %v1532, %v1531
        %v1543 = vpack.c.b16 %v1534, %v1533
        %v1544 = vpack.c.b16 %v1536, %v1535
        %1553 = vmatprep.subr.bf16.mxu0 0
        %1554 = vmatpush1.bf16.msra.mxu0 %v1537
        %1555 = vmatprep.subr.bf16.mxu0 0
        %1556 = vmatpush1.bf16.msra.mxu0 %v1538
        %1557 = vmatprep.subr.bf16.mxu0 0
        %1558 = vmatpush1.bf16.msra.mxu0 %v1539
        %1559 = vmatprep.subr.bf16.mxu0 0
        %1560 = vmatpush1.bf16.msra.mxu0 %v1540
        %1561 = vmatprep.subr.bf16.mxu0 0
        %1562 = vmatpush1.bf16.msra.mxu0 %v1541
        %1563 = vmatprep.subr.bf16.mxu0 0
        %1564 = vmatpush1.bf16.msra.mxu0 %v1542
        %1565 = vmatprep.subr.bf16.mxu0 0
        %1566 = vmatpush1.bf16.msra.mxu0 %v1543
        %1567 = vmatprep.subr.bf16.mxu0 0
        %1568 = vmatpush1.bf16.msra.mxu0 %v1544
        %1569 = vmatprep.subr.bf16.mxu0 0
        %1570 = vmatpush1.bf16.msra.mxu0 0
        %1571 = vmatprep.subr.bf16.mxu0 0
        %1572 = vmatpush1.bf16.msra.mxu0 0
        %1573 = vmatprep.subr.bf16.mxu0 0
        %1574 = vmatpush1.bf16.msra.mxu0 0
        %1575 = vmatprep.subr.bf16.mxu0 0
        %1576 = vmatpush1.bf16.msra.mxu0 0
        %1577 = vmatprep.subr.bf16.mxu0 0
        %1578 = vmatpush1.bf16.msra.mxu0 0
        %1579 = vmatprep.subr.bf16.mxu0 0
        %1580 = vmatpush1.bf16.msra.mxu0 0
        %1581 = vmatprep.subr.bf16.mxu0 0
        %1582 = vmatpush1.bf16.msra.mxu0 0
        %1583 = vmatprep.subr.bf16.mxu0 0
        %1584 = vmatpush1.bf16.msra.mxu0 0
        %1585 = vmatprep.mubr.bf16.mxu0 0
        %1586 = vmatmul.mubr.bf16.gmra.mrb[0].mxu0 %v1482
        %v1587 = vpop.f32.mrb[0].mxu0
        %v1588 = vadd.f32 0.0, %v1587
        %v1589 = vpop.f32.mrb[0].mxu0
        %v1590 = vpop.f32.mrb[0].mxu0
        %v1591 = vadd.f32 0.0, %v1590
        %v1592 = vpop.f32.mrb[0].mxu0
        %1593 = vmatprep.mubr.bf16.mxu0 0
        %1594 = vmatmul.mubr.bf16.gmra.mrb[0].mxu0 %v1484
        %v1595 = vpop.f32.mrb[0].mxu0
        %v1596 = vadd.f32 0.0, %v1595
        %v1597 = vpop.f32.mrb[0].mxu0
        %v1598 = vpop.f32.mrb[0].mxu0
        %v1599 = vadd.f32 0.0, %v1598
        %v1600 = vpop.f32.mrb[0].mxu0
        %1601 = vmatprep.mubr.bf16.mxu0 0
        %1602 = vmatmul.mubr.bf16.gmra.mrb[0].mxu0 %v1486
        %v1603 = vpop.f32.mrb[0].mxu0
        %v1604 = vadd.f32 0.0, %v1603
        %v1605 = vpop.f32.mrb[0].mxu0
        %v1606 = vpop.f32.mrb[0].mxu0
        %v1607 = vadd.f32 0.0, %v1606
        %v1608 = vpop.f32.mrb[0].mxu0
        %1609 = vmatprep.mubr.bf16.mxu0 0
        %1610 = vmatmul.mubr.bf16.gmra.mrb[0].mxu0 %v1488
        %v1611 = vpop.f32.mrb[0].mxu0
        %v1612 = vadd.f32 0.0, %v1611
        %v1613 = vpop.f32.mrb[0].mxu0
        %v1614 = vpop.f32.mrb[0].mxu0
        %v1615 = vadd.f32 0.0, %v1614
        %v1616 = vpop.f32.mrb[0].mxu0
        %1617 = vmatprep.mubr.bf16.mxu0 0
        %1618 = vmatmul.mubr.bf16.gmra.mrb[0].mxu0 %v1490
        %v1619 = vpop.f32.mrb[0].mxu0
        %v1620 = vadd.f32 0.0, %v1619
        %v1621 = vpop.f32.mrb[0].mxu0
        %v1622 = vpop.f32.mrb[0].mxu0
        %v1623 = vadd.f32 0.0, %v1622
        %v1624 = vpop.f32.mrb[0].mxu0
        %1625 = vmatprep.mubr.bf16.mxu0 0
        %1626 = vmatmul.mubr.bf16.gmra.mrb[0].mxu0 %v1492
        %v1627 = vpop.f32.mrb[0].mxu0
        %v1628 = vadd.f32 0.0, %v1627
        %v1629 = vpop.f32.mrb[0].mxu0
        %v1630 = vpop.f32.mrb[0].mxu0
        %v1631 = vadd.f32 0.0, %v1630
        %v1632 = vpop.f32.mrb[0].mxu0
        %1633 = vmatprep.mubr.bf16.mxu0 0
        %1634 = vmatmul.mubr.bf16.gmra.mrb[0].mxu0 %v1494
        %v1635 = vpop.f32.mrb[0].mxu0
        %v1636 = vadd.f32 0.0, %v1635
        %v1637 = vpop.f32.mrb[0].mxu0
        %v1638 = vpop.f32.mrb[0].mxu0
        %v1639 = vadd.f32 0.0, %v1638
        %v1640 = vpop.f32.mrb[0].mxu0
        %1641 = vmatprep.mubr.bf16.mxu0 0
        %1642 = vmatmul.mubr.bf16.gmra.mrb[0].mxu0 %v1496
        %v1643 = vpop.f32.mrb[0].mxu0
        %v1644 = vadd.f32 0.0, %v1643
        %v1645 = vpop.f32.mrb[0].mxu0
        %v1646 = vpop.f32.mrb[0].mxu0
        %v1647 = vadd.f32 0.0, %v1646
        %v1648 = vpop.f32.mrb[0].mxu0
        %1649 = vdwg.mxu0
        %v1650 = vadd.f32 %v1442, %v1588
        %v1651 = vadd.f32 %v1443, %v1591
        %v1652 = vadd.f32 %v1444, %v1596
        %v1653 = vadd.f32 %v1445, %v1599
        %v1654 = vadd.f32 %v1446, %v1604
        %v1655 = vadd.f32 %v1447, %v1607
        %v1656 = vadd.f32 %v1448, %v1612
        %v1657 = vadd.f32 %v1449, %v1615
        %v1658 = vadd.f32 %v1450, %v1620
        %v1659 = vadd.f32 %v1451, %v1623
        %v1660 = vadd.f32 %v1452, %v1628
        %v1661 = vadd.f32 %v1453, %v1631
        %v1662 = vadd.f32 %v1454, %v1636
        %v1663 = vadd.f32 %v1455, %v1639
        %v1664 = vadd.f32 %v1456, %v1644
        %v1665 = vadd.f32 %v1457, %v1647
        %v1666 = vld [vmem:[%s241 + $0x10] sm:$0xc]
        %v1667 = vld [vmem:[%s241 + $0x14] sm:$0xf]
        %v1668 = vld [vmem:[%s241 + $0x18] sm:$0xf]
        %v1669 = vld [vmem:[%s241 + $0x1c] sm:$0xf]
        %v1670 = vld [vmem:[%s241 + $0x20] sm:$0xf]
        %v1671 = vld [vmem:[%s241 + $0x24] sm:$0xf]
        %v1672 = vld [vmem:[%s241 + $0x28] sm:$0xf]
        %v1673 = vld [vmem:[%s241 + $0x2c] sm:$0xf]
        %v1674 = vld [vmem:[%s241 + $0x30] sm:$0xf]
        %v1675 = vld [vmem:[%s241 + $0x34] sm:$0xf]
        %v1676 = vld [vmem:[%s241 + $0x38] sm:$0xf]
        %v1677 = vld [vmem:[%s241 + $0x3c] sm:$0xf]
        %v1678 = vld [vmem:[%s241 + $0x40] sm:$0xf]
        %v1679 = vld [vmem:[%s241 + $0x44] sm:$0xf]
        %v1680 = vld [vmem:[%s241 + $0x48] sm:$0xf]
        %v1681 = vld [vmem:[%s241 + $0x4c] sm:$0xf]
        %v1682 = vld [vmem:[%s241 + $0x50] sm:$0x3]
        %s1683 = scalar_lea.vmem [#allocation4], 384
        %v1684 = vld [vmem:[%s1683] sm:$0xf]
        %v1685 = vld [vmem:[%s1683 + $0x4] sm:$0xf]
        %v1686 = vld [vmem:[%s1683 + $0x8] sm:$0xf]
        %v1687 = vld [vmem:[%s1683 + $0xc] sm:$0xf]
        %v1688 = vld [vmem:[%s1683 + $0x10] sm:$0xf]
        %v1689 = vld [vmem:[%s1683 + $0x14] sm:$0xf]
        %v1690 = vld [vmem:[%s1683 + $0x18] sm:$0xf]
        %v1691 = vld [vmem:[%s1683 + $0x1c] sm:$0xf]
        %v1692 = vld [vmem:[%s1683 + $0x20] sm:$0xf]
        %v1693 = vld [vmem:[%s1683 + $0x24] sm:$0xf]
        %v1694 = vld [vmem:[%s1683 + $0x28] sm:$0xf]
        %v1695 = vld [vmem:[%s1683 + $0x2c] sm:$0xf]
        %v1696 = vld [vmem:[%s1683 + $0x30] sm:$0xf]
        %v1697 = vld [vmem:[%s1683 + $0x34] sm:$0xf]
        %v1698 = vld [vmem:[%s1683 + $0x38] sm:$0xf]
        %v1699 = vld [vmem:[%s1683 + $0x3c] sm:$0xf]
        %v1717 = vunpack.c.l.b16 %v1666
        %v1718 = vunpack.c.l.b16 %v1667
        %v1719 = vunpack.c.l.b16 %v1668
        %v1720 = vunpack.c.l.b16 %v1669
        %v1721 = vunpack.c.l.b16 %v1670
        %v1722 = vunpack.c.l.b16 %v1671
        %v1723 = vunpack.c.l.b16 %v1672
        %v1724 = vunpack.c.l.b16 %v1673
        %v1725 = vunpack.c.l.b16 %v1674
        %v1726 = vunpack.c.l.b16 %v1675
        %v1727 = vunpack.c.l.b16 %v1676
        %v1728 = vunpack.c.l.b16 %v1677
        %v1729 = vunpack.c.l.b16 %v1678
        %v1730 = vunpack.c.l.b16 %v1679
        %v1731 = vunpack.c.l.b16 %v1680
        %v1732 = vunpack.c.l.b16 %v1681
        %v1733 = vunpack.c.l.b16 %v1682
        %v1734 = vpack.c.b16 %v1718, %v1717
        %v1735 = vpack.c.b16 %v1720, %v1719
        %v1736 = vpack.c.b16 %v1722, %v1721
        %v1737 = vpack.c.b16 %v1724, %v1723
        %v1738 = vpack.c.b16 %v1726, %v1725
        %v1739 = vpack.c.b16 %v1728, %v1727
        %v1740 = vpack.c.b16 %v1730, %v1729
        %v1741 = vpack.c.b16 %v1732, %v1731
        %v1742 = vpack.c.b16 %v1733, %v1733
        %v1743 = vrot.slane %v1734, 2
        %v1744 = vrot.slane %v1735, 2
        %v1745 = vsel %vm1479, %v1743, %v1744
        %v1746 = vrot.slane %v1736, 2
        %v1747 = vsel %vm1479, %v1744, %v1746
        %v1748 = vrot.slane %v1737, 2
        %v1749 = vsel %vm1479, %v1746, %v1748
        %v1750 = vrot.slane %v1738, 2
        %v1751 = vsel %vm1479, %v1748, %v1750
        %v1752 = vrot.slane %v1739, 2
        %v1753 = vsel %vm1479, %v1750, %v1752
        %v1754 = vrot.slane %v1740, 2
        %v1755 = vsel %vm1479, %v1752, %v1754
        %v1756 = vrot.slane %v1741, 2
        %v1757 = vsel %vm1479, %v1754, %v1756
        %v1758 = vrot.slane %v1742, 2
        %v1759 = vsel %vm1479, %v1756, %v1758
        %v1784 = vunpack.c.l.b16 %v1684
        %v1785 = vunpack.c.l.b16 %v1685
        %v1786 = vunpack.c.l.b16 %v1686
        %v1787 = vunpack.c.l.b16 %v1687
        %v1788 = vunpack.c.l.b16 %v1688
        %v1789 = vunpack.c.l.b16 %v1689
        %v1790 = vunpack.c.l.b16 %v1690
        %v1791 = vunpack.c.l.b16 %v1691
        %v1792 = vunpack.c.l.b16 %v1692
        %v1793 = vunpack.c.l.b16 %v1693
        %v1794 = vunpack.c.l.b16 %v1694
        %v1795 = vunpack.c.l.b16 %v1695
        %v1796 = vunpack.c.l.b16 %v1696
        %v1797 = vunpack.c.l.b16 %v1697
        %v1798 = vunpack.c.l.b16 %v1698
        %v1799 = vunpack.c.l.b16 %v1699
        %v1800 = vpack.c.b16 %v1785, %v1784
        %v1801 = vpack.c.b16 %v1787, %v1786
        %v1802 = vpack.c.b16 %v1789, %v1788
        %v1803 = vpack.c.b16 %v1791, %v1790
        %v1804 = vpack.c.b16 %v1793, %v1792
        %v1805 = vpack.c.b16 %v1795, %v1794
        %v1806 = vpack.c.b16 %v1797, %v1796
        %v1807 = vpack.c.b16 %v1799, %v1798
        %1816 = vmatprep.subr.bf16.mxu0 0
        %1817 = vmatpush1.bf16.msra.mxu0 %v1800
        %1818 = vmatprep.subr.bf16.mxu0 0
        %1819 = vmatpush1.bf16.msra.mxu0 %v1801
        %1820 = vmatprep.subr.bf16.mxu0 0
        %1821 = vmatpush1.bf16.msra.mxu0 %v1802
        %1822 = vmatprep.subr.bf16.mxu0 0
        %1823 = vmatpush1.bf16.msra.mxu0 %v1803
        %1824 = vmatprep.subr.bf16.mxu0 0
        %1825 = vmatpush1.bf16.msra.mxu0 %v1804
        %1826 = vmatprep.subr.bf16.mxu0 0
        %1827 = vmatpush1.bf16.msra.mxu0 %v1805
        %1828 = vmatprep.subr.bf16.mxu0 0
        %1829 = vmatpush1.bf16.msra.mxu0 %v1806
        %1830 = vmatprep.subr.bf16.mxu0 0
        %1831 = vmatpush1.bf16.msra.mxu0 %v1807
        %1832 = vmatprep.subr.bf16.mxu0 0
        %1833 = vmatpush1.bf16.msra.mxu0 0
        %1834 = vmatprep.subr.bf16.mxu0 0
        %1835 = vmatpush1.bf16.msra.mxu0 0
        %1836 = vmatprep.subr.bf16.mxu0 0
        %1837 = vmatpush1.bf16.msra.mxu0 0
        %1838 = vmatprep.subr.bf16.mxu0 0
        %1839 = vmatpush1.bf16.msra.mxu0 0
        %1840 = vmatprep.subr.bf16.mxu0 0
        %1841 = vmatpush1.bf16.msra.mxu0 0
        %1842 = vmatprep.subr.bf16.mxu0 0
        %1843 = vmatpush1.bf16.msra.mxu0 0
        %1844 = vmatprep.subr.bf16.mxu0 0
        %1845 = vmatpush1.bf16.msra.mxu0 0
        %1846 = vmatprep.subr.bf16.mxu0 0
        %1847 = vmatpush1.bf16.msra.mxu0 0
        %1848 = vmatprep.mubr.bf16.mxu0 0
        %1849 = vmatmul.mubr.bf16.gmra.mrb[0].mxu0 %v1745
        %v1850 = vpop.f32.mrb[0].mxu0
        %v1851 = vadd.f32 0.0, %v1850
        %v1852 = vpop.f32.mrb[0].mxu0
        %v1853 = vpop.f32.mrb[0].mxu0
        %v1854 = vadd.f32 0.0, %v1853
        %v1855 = vpop.f32.mrb[0].mxu0
        %1856 = vmatprep.mubr.bf16.mxu0 0
        %1857 = vmatmul.mubr.bf16.gmra.mrb[0].mxu0 %v1747
        %v1858 = vpop.f32.mrb[0].mxu0
        %v1859 = vadd.f32 0.0, %v1858
        %v1860 = vpop.f32.mrb[0].mxu0
        %v1861 = vpop.f32.mrb[0].mxu0
        %v1862 = vadd.f32 0.0, %v1861
        %v1863 = vpop.f32.mrb[0].mxu0
        %1864 = vmatprep.mubr.bf16.mxu0 0
        %1865 = vmatmul.mubr.bf16.gmra.mrb[0].mxu0 %v1749
        %v1866 = vpop.f32.mrb[0].mxu0
        %v1867 = vadd.f32 0.0, %v1866
        %v1868 = vpop.f32.mrb[0].mxu0
        %v1869 = vpop.f32.mrb[0].mxu0
        %v1870 = vadd.f32 0.0, %v1869
        %v1871 = vpop.f32.mrb[0].mxu0
        %1872 = vmatprep.mubr.bf16.mxu0 0
        %1873 = vmatmul.mubr.bf16.gmra.mrb[0].mxu0 %v1751
        %v1874 = vpop.f32.mrb[0].mxu0
        %v1875 = vadd.f32 0.0, %v1874
        %v1876 = vpop.f32.mrb[0].mxu0
        %v1877 = vpop.f32.mrb[0].mxu0
        %v1878 = vadd.f32 0.0, %v1877
        %v1879 = vpop.f32.mrb[0].mxu0
        %1880 = vmatprep.mubr.bf16.mxu0 0
        %1881 = vmatmul.mubr.bf16.gmra.mrb[0].mxu0 %v1753
        %v1882 = vpop.f32.mrb[0].mxu0
        %v1883 = vadd.f32 0.0, %v1882
        %v1884 = vpop.f32.mrb[0].mxu0
        %v1885 = vpop.f32.mrb[0].mxu0
        %v1886 = vadd.f32 0.0, %v1885
        %v1887 = vpop.f32.mrb[0].mxu0
        %1888 = vmatprep.mubr.bf16.mxu0 0
        %1889 = vmatmul.mubr.bf16.gmra.mrb[0].mxu0 %v1755
        %v1890 = vpop.f32.mrb[0].mxu0
        %v1891 = vadd.f32 0.0, %v1890
        %v1892 = vpop.f32.mrb[0].mxu0
        %v1893 = vpop.f32.mrb[0].mxu0
        %v1894 = vadd.f32 0.0, %v1893
        %v1895 = vpop.f32.mrb[0].mxu0
        %1896 = vmatprep.mubr.bf16.mxu0 0
        %1897 = vmatmul.mubr.bf16.gmra.mrb[0].mxu0 %v1757
        %v1898 = vpop.f32.mrb[0].mxu0
        %v1899 = vadd.f32 0.0, %v1898
        %v1900 = vpop.f32.mrb[0].mxu0
        %v1901 = vpop.f32.mrb[0].mxu0
        %v1902 = vadd.f32 0.0, %v1901
        %v1903 = vpop.f32.mrb[0].mxu0
        %1904 = vmatprep.mubr.bf16.mxu0 0
        %1905 = vmatmul.mubr.bf16.gmra.mrb[0].mxu0 %v1759
        %v1906 = vpop.f32.mrb[0].mxu0
        %v1907 = vadd.f32 0.0, %v1906
        %v1908 = vpop.f32.mrb[0].mxu0
        %v1909 = vpop.f32.mrb[0].mxu0
        %v1910 = vadd.f32 0.0, %v1909
        %v1911 = vpop.f32.mrb[0].mxu0
        %1912 = vdwg.mxu0
        %v1913 = vadd.f32 %v1650, %v1851
        %v1914 = vadd.f32 %v1651, %v1854
        %v1915 = vadd.f32 %v1652, %v1859
        %v1916 = vadd.f32 %v1653, %v1862
        %v1917 = vadd.f32 %v1654, %v1867
        %v1918 = vadd.f32 %v1655, %v1870
        %v1919 = vadd.f32 %v1656, %v1875
        %v1920 = vadd.f32 %v1657, %v1878
        %v1921 = vadd.f32 %v1658, %v1883
        %v1922 = vadd.f32 %v1659, %v1886
        %v1923 = vadd.f32 %v1660, %v1891
        %v1924 = vadd.f32 %v1661, %v1894
        %v1925 = vadd.f32 %v1662, %v1899
        %v1926 = vadd.f32 %v1663, %v1902
        %v1927 = vadd.f32 %v1664, %v1907
        %v1928 = vadd.f32 %v1665, %v1910
        %v1929 = vld [vmem:[%s241 + $0x50] sm:$0x7]
        %s1930 = scalar_lea.vmem [#allocation4], 448
        %v1931 = vld [vmem:[%s1930] sm:$0xf]
        %v1932 = vld [vmem:[%s1930 + $0x4] sm:$0xf]
        %v1933 = vld [vmem:[%s1930 + $0x8] sm:$0xf]
        %v1934 = vld [vmem:[%s1930 + $0xc] sm:$0xf]
        %v1935 = vld [vmem:[%s1930 + $0x10] sm:$0xf]
        %v1936 = vld [vmem:[%s1930 + $0x14] sm:$0xf]
        %v1937 = vld [vmem:[%s1930 + $0x18] sm:$0xf]
        %v1938 = vld [vmem:[%s1930 + $0x1c] sm:$0xf]
        %v1939 = vld [vmem:[%s1930 + $0x20] sm:$0xf]
        %v1940 = vld [vmem:[%s1930 + $0x24] sm:$0xf]
        %v1941 = vld [vmem:[%s1930 + $0x28] sm:$0xf]
        %v1942 = vld [vmem:[%s1930 + $0x2c] sm:$0xf]
        %v1943 = vld [vmem:[%s1930 + $0x30] sm:$0xf]
        %v1944 = vld [vmem:[%s1930 + $0x34] sm:$0xf]
        %v1945 = vld [vmem:[%s1930 + $0x38] sm:$0xf]
        %v1946 = vld [vmem:[%s1930 + $0x3c] sm:$0xf]
        %v1948 = vunpack.c.l.b16 %v1929
        %v1949 = vpack.c.b16 %v1948, %v1948
        %vm1950 = vsmask.f32 5376
        %v1952 = vshrl.u32 %v1734, 16
        %v1954 = vrot.slane %v1952, 2
        %v1955 = vshll.u32 %v1734, 16
        %v1957 = vrot.slane %v1955, 3
        %v1958 = vor.u32 %v1954, %v1957
        %v1960 = vshrl.u32 %v1735, 16
        %v1962 = vrot.slane %v1960, 2
        %v1963 = vshll.u32 %v1735, 16
        %v1965 = vrot.slane %v1963, 3
        %v1966 = vor.u32 %v1962, %v1965
        %v1967 = vsel %vm1950, %v1958, %v1966
        %v1969 = vshrl.u32 %v1736, 16
        %v1971 = vrot.slane %v1969, 2
        %v1972 = vshll.u32 %v1736, 16
        %v1974 = vrot.slane %v1972, 3
        %v1975 = vor.u32 %v1971, %v1974
        %v1976 = vsel %vm1950, %v1966, %v1975
        %v1978 = vshrl.u32 %v1737, 16
        %v1980 = vrot.slane %v1978, 2
        %v1981 = vshll.u32 %v1737, 16
        %v1983 = vrot.slane %v1981, 3
        %v1984 = vor.u32 %v1980, %v1983
        %v1985 = vsel %vm1950, %v1975, %v1984
        %v1987 = vshrl.u32 %v1738, 16
        %v1989 = vrot.slane %v1987, 2
        %v1990 = vshll.u32 %v1738, 16
        %v1992 = vrot.slane %v1990, 3
        %v1993 = vor.u32 %v1989, %v1992
        %v1994 = vsel %vm1950, %v1984, %v1993
        %v1996 = vshrl.u32 %v1739, 16
        %v1998 = vrot.slane %v1996, 2
        %v1999 = vshll.u32 %v1739, 16
        %v2001 = vrot.slane %v1999, 3
        %v2002 = vor.u32 %v1998, %v2001
        %v2003 = vsel %vm1950, %v1993, %v2002
        %v2005 = vshrl.u32 %v1740, 16
        %v2007 = vrot.slane %v2005, 2
        %v2008 = vshll.u32 %v1740, 16
        %v2010 = vrot.slane %v2008, 3
        %v2011 = vor.u32 %v2007, %v2010
        %v2012 = vsel %vm1950, %v2002, %v2011
        %v2014 = vshrl.u32 %v1741, 16
        %v2016 = vrot.slane %v2014, 2
        %v2017 = vshll.u32 %v1741, 16
        %v2019 = vrot.slane %v2017, 3
        %v2020 = vor.u32 %v2016, %v2019
        %v2021 = vsel %vm1950, %v2011, %v2020
        %v2023 = vshrl.u32 %v1949, 16
        %v2025 = vrot.slane %v2023, 2
        %v2026 = vshll.u32 %v1949, 16
        %v2028 = vrot.slane %v2026, 3
        %v2029 = vor.u32 %v2025, %v2028
        %v2030 = vsel %vm1950, %v2020, %v2029
        %v2055 = vunpack.c.l.b16 %v1931
        %v2056 = vunpack.c.l.b16 %v1932
        %v2057 = vunpack.c.l.b16 %v1933
        %v2058 = vunpack.c.l.b16 %v1934
        %v2059 = vunpack.c.l.b16 %v1935
        %v2060 = vunpack.c.l.b16 %v1936
        %v2061 = vunpack.c.l.b16 %v1937
        %v2062 = vunpack.c.l.b16 %v1938
        %v2063 = vunpack.c.l.b16 %v1939
        %v2064 = vunpack.c.l.b16 %v1940
        %v2065 = vunpack.c.l.b16 %v1941
        %v2066 = vunpack.c.l.b16 %v1942
        %v2067 = vunpack.c.l.b16 %v1943
        %v2068 = vunpack.c.l.b16 %v1944
        %v2069 = vunpack.c.l.b16 %v1945
        %v2070 = vunpack.c.l.b16 %v1946
        %v2071 = vpack.c.b16 %v2056, %v2055
        %v2072 = vpack.c.b16 %v2058, %v2057
        %v2073 = vpack.c.b16 %v2060, %v2059
        %v2074 = vpack.c.b16 %v2062, %v2061
        %v2075 = vpack.c.b16 %v2064, %v2063
        %v2076 = vpack.c.b16 %v2066, %v2065
        %v2077 = vpack.c.b16 %v2068, %v2067
        %v2078 = vpack.c.b16 %v2070, %v2069
        %2087 = vmatprep.subr.bf16.mxu0 0
        %2088 = vmatpush1.bf16.msra.mxu0 %v2071
        %2089 = vmatprep.subr.bf16.mxu0 0
        %2090 = vmatpush1.bf16.msra.mxu0 %v2072
        %2091 = vmatprep.subr.bf16.mxu0 0
        %2092 = vmatpush1.bf16.msra.mxu0 %v2073
        %2093 = vmatprep.subr.bf16.mxu0 0
        %2094 = vmatpush1.bf16.msra.mxu0 %v2074
        %2095 = vmatprep.subr.bf16.mxu0 0
        %2096 = vmatpush1.bf16.msra.mxu0 %v2075
        %2097 = vmatprep.subr.bf16.mxu0 0
        %2098 = vmatpush1.bf16.msra.mxu0 %v2076
        %2099 = vmatprep.subr.bf16.mxu0 0
        %2100 = vmatpush1.bf16.msra.mxu0 %v2077
        %2101 = vmatprep.subr.bf16.mxu0 0
        %2102 = vmatpush1.bf16.msra.mxu0 %v2078
        %2103 = vmatprep.subr.bf16.mxu0 0
        %2104 = vmatpush1.bf16.msra.mxu0 0
        %2105 = vmatprep.subr.bf16.mxu0 0
        %2106 = vmatpush1.bf16.msra.mxu0 0
        %2107 = vmatprep.subr.bf16.mxu0 0
        %2108 = vmatpush1.bf16.msra.mxu0 0
        %2109 = vmatprep.subr.bf16.mxu0 0
        %2110 = vmatpush1.bf16.msra.mxu0 0
        %2111 = vmatprep.subr.bf16.mxu0 0
        %2112 = vmatpush1.bf16.msra.mxu0 0
        %2113 = vmatprep.subr.bf16.mxu0 0
        %2114 = vmatpush1.bf16.msra.mxu0 0
        %2115 = vmatprep.subr.bf16.mxu0 0
        %2116 = vmatpush1.bf16.msra.mxu0 0
        %2117 = vmatprep.subr.bf16.mxu0 0
        %2118 = vmatpush1.bf16.msra.mxu0 0
        %2119 = vmatprep.mubr.bf16.mxu0 0
        %2120 = vmatmul.mubr.bf16.gmra.mrb[0].mxu0 %v1967
        %v2121 = vpop.f32.mrb[0].mxu0
        %v2122 = vadd.f32 0.0, %v2121
        %v2123 = vpop.f32.mrb[0].mxu0
        %v2124 = vpop.f32.mrb[0].mxu0
        %v2125 = vadd.f32 0.0, %v2124
        %v2126 = vpop.f32.mrb[0].mxu0
        %2127 = vmatprep.mubr.bf16.mxu0 0
        %2128 = vmatmul.mubr.bf16.gmra.mrb[0].mxu0 %v1976
        %v2129 = vpop.f32.mrb[0].mxu0
        %v2130 = vadd.f32 0.0, %v2129
        %v2131 = vpop.f32.mrb[0].mxu0
        %v2132 = vpop.f32.mrb[0].mxu0
        %v2133 = vadd.f32 0.0, %v2132
        %v2134 = vpop.f32.mrb[0].mxu0
        %2135 = vmatprep.mubr.bf16.mxu0 0
        %2136 = vmatmul.mubr.bf16.gmra.mrb[0].mxu0 %v1985
        %v2137 = vpop.f32.mrb[0].mxu0
        %v2138 = vadd.f32 0.0, %v2137
        %v2139 = vpop.f32.mrb[0].mxu0
        %v2140 = vpop.f32.mrb[0].mxu0
        %v2141 = vadd.f32 0.0, %v2140
        %v2142 = vpop.f32.mrb[0].mxu0
        %2143 = vmatprep.mubr.bf16.mxu0 0
        %2144 = vmatmul.mubr.bf16.gmra.mrb[0].mxu0 %v1994
        %v2145 = vpop.f32.mrb[0].mxu0
        %v2146 = vadd.f32 0.0, %v2145
        %v2147 = vpop.f32.mrb[0].mxu0
        %v2148 = vpop.f32.mrb[0].mxu0
        %v2149 = vadd.f32 0.0, %v2148
        %v2150 = vpop.f32.mrb[0].mxu0
        %2151 = vmatprep.mubr.bf16.mxu0 0
        %2152 = vmatmul.mubr.bf16.gmra.mrb[0].mxu0 %v2003
        %v2153 = vpop.f32.mrb[0].mxu0
        %v2154 = vadd.f32 0.0, %v2153
        %v2155 = vpop.f32.mrb[0].mxu0
        %v2156 = vpop.f32.mrb[0].mxu0
        %v2157 = vadd.f32 0.0, %v2156
        %v2158 = vpop.f32.mrb[0].mxu0
        %2159 = vmatprep.mubr.bf16.mxu0 0
        %2160 = vmatmul.mubr.bf16.gmra.mrb[0].mxu0 %v2012
        %v2161 = vpop.f32.mrb[0].mxu0
        %v2162 = vadd.f32 0.0, %v2161
        %v2163 = vpop.f32.mrb[0].mxu0
        %v2164 = vpop.f32.mrb[0].mxu0
        %v2165 = vadd.f32 0.0, %v2164
        %v2166 = vpop.f32.mrb[0].mxu0
        %2167 = vmatprep.mubr.bf16.mxu0 0
        %2168 = vmatmul.mubr.bf16.gmra.mrb[0].mxu0 %v2021
        %v2169 = vpop.f32.mrb[0].mxu0
        %v2170 = vadd.f32 0.0, %v2169
        %v2171 = vpop.f32.mrb[0].mxu0
        %v2172 = vpop.f32.mrb[0].mxu0
        %v2173 = vadd.f32 0.0, %v2172
        %v2174 = vpop.f32.mrb[0].mxu0
        %2175 = vmatprep.mubr.bf16.mxu0 0
        %2176 = vmatmul.mubr.bf16.gmra.mrb[0].mxu0 %v2030
        %v2177 = vpop.f32.mrb[0].mxu0
        %v2178 = vadd.f32 0.0, %v2177
        %v2179 = vpop.f32.mrb[0].mxu0
        %v2180 = vpop.f32.mrb[0].mxu0
        %v2181 = vadd.f32 0.0, %v2180
        %v2182 = vpop.f32.mrb[0].mxu0
        %2183 = vdwg.mxu0
        %v2184 = vadd.f32 %v1913, %v2122
        %v2185 = vadd.f32 %v1914, %v2125
        %v2186 = vadd.f32 %v1915, %v2130
        %v2187 = vadd.f32 %v1916, %v2133
        %v2188 = vadd.f32 %v1917, %v2138
        %v2189 = vadd.f32 %v1918, %v2141
        %v2190 = vadd.f32 %v1919, %v2146
        %v2191 = vadd.f32 %v1920, %v2149
        %v2192 = vadd.f32 %v1921, %v2154
        %v2193 = vadd.f32 %v1922, %v2157
        %v2194 = vadd.f32 %v1923, %v2162
        %v2195 = vadd.f32 %v1924, %v2165
        %v2196 = vadd.f32 %v1925, %v2170
        %v2197 = vadd.f32 %v1926, %v2173
        %v2198 = vadd.f32 %v1927, %v2178
        %v2199 = vadd.f32 %v1928, %v2181
        %v2200 = vld [vmem:[%s241 + $0x10] sm:$0x8]
        %s2201 = scalar_lea.vmem [#allocation4], 512
        %v2202 = vld [vmem:[%s2201] sm:$0xf]
        %v2203 = vld [vmem:[%s2201 + $0x4] sm:$0xf]
        %v2204 = vld [vmem:[%s2201 + $0x8] sm:$0xf]
        %v2205 = vld [vmem:[%s2201 + $0xc] sm:$0xf]
        %v2206 = vld [vmem:[%s2201 + $0x10] sm:$0xf]
        %v2207 = vld [vmem:[%s2201 + $0x14] sm:$0xf]
        %v2208 = vld [vmem:[%s2201 + $0x18] sm:$0xf]
        %v2209 = vld [vmem:[%s2201 + $0x1c] sm:$0xf]
        %v2210 = vld [vmem:[%s2201 + $0x20] sm:$0xf]
        %v2211 = vld [vmem:[%s2201 + $0x24] sm:$0xf]
        %v2212 = vld [vmem:[%s2201 + $0x28] sm:$0xf]
        %v2213 = vld [vmem:[%s2201 + $0x2c] sm:$0xf]
        %v2214 = vld [vmem:[%s2201 + $0x30] sm:$0xf]
        %v2215 = vld [vmem:[%s2201 + $0x34] sm:$0xf]
        %v2216 = vld [vmem:[%s2201 + $0x38] sm:$0xf]
        %v2217 = vld [vmem:[%s2201 + $0x3c] sm:$0xf]
        %v2219 = vunpack.c.l.b16 %v2200
        %v2220 = vpack.c.b16 %v1718, %v2219
        %vm2221 = vcmask 1044480
        %v2222 = vrot.slane %v2220, 3
        %v2223 = vrot.slane %v1735, 3
        %v2224 = vsel %vm2221, %v2222, %v2223
        %v2225 = vrot.slane %v1736, 3
        %v2226 = vsel %vm2221, %v2223, %v2225
        %v2227 = vrot.slane %v1737, 3
        %v2228 = vsel %vm2221, %v2225, %v2227
        %v2229 = vrot.slane %v1738, 3
        %v2230 = vsel %vm2221, %v2227, %v2229
        %v2231 = vrot.slane %v1739, 3
        %v2232 = vsel %vm2221, %v2229, %v2231
        %v2233 = vrot.slane %v1740, 3
        %v2234 = vsel %vm2221, %v2231, %v2233
        %v2235 = vrot.slane %v1741, 3
        %v2236 = vsel %vm2221, %v2233, %v2235
        %v2237 = vrot.slane %v1949, 3
        %v2238 = vsel %vm2221, %v2235, %v2237
        %v2263 = vunpack.c.l.b16 %v2202
        %v2264 = vunpack.c.l.b16 %v2203
        %v2265 = vunpack.c.l.b16 %v2204
        %v2266 = vunpack.c.l.b16 %v2205
        %v2267 = vunpack.c.l.b16 %v2206
        %v2268 = vunpack.c.l.b16 %v2207
        %v2269 = vunpack.c.l.b16 %v2208
        %v2270 = vunpack.c.l.b16 %v2209
        %v2271 = vunpack.c.l.b16 %v2210
        %v2272 = vunpack.c.l.b16 %v2211
        %v2273 = vunpack.c.l.b16 %v2212
        %v2274 = vunpack.c.l.b16 %v2213
        %v2275 = vunpack.c.l.b16 %v2214
        %v2276 = vunpack.c.l.b16 %v2215
        %v2277 = vunpack.c.l.b16 %v2216
        %v2278 = vunpack.c.l.b16 %v2217
        %v2279 = vpack.c.b16 %v2264, %v2263
        %v2280 = vpack.c.b16 %v2266, %v2265
        %v2281 = vpack.c.b16 %v2268, %v2267
        %v2282 = vpack.c.b16 %v2270, %v2269
        %v2283 = vpack.c.b16 %v2272, %v2271
        %v2284 = vpack.c.b16 %v2274, %v2273
        %v2285 = vpack.c.b16 %v2276, %v2275
        %v2286 = vpack.c.b16 %v2278, %v2277
        %2295 = vmatprep.subr.bf16.mxu0 0
        %2296 = vmatpush1.bf16.msra.mxu0 %v2279
        %2297 = vmatprep.subr.bf16.mxu0 0
        %2298 = vmatpush1.bf16.msra.mxu0 %v2280
        %2299 = vmatprep.subr.bf16.mxu0 0
        %2300 = vmatpush1.bf16.msra.mxu0 %v2281
        %2301 = vmatprep.subr.bf16.mxu0 0
        %2302 = vmatpush1.bf16.msra.mxu0 %v2282
        %2303 = vmatprep.subr.bf16.mxu0 0
        %2304 = vmatpush1.bf16.msra.mxu0 %v2283
        %2305 = vmatprep.subr.bf16.mxu0 0
        %2306 = vmatpush1.bf16.msra.mxu0 %v2284
        %2307 = vmatprep.subr.bf16.mxu0 0
        %2308 = vmatpush1.bf16.msra.mxu0 %v2285
        %2309 = vmatprep.subr.bf16.mxu0 0
        %2310 = vmatpush1.bf16.msra.mxu0 %v2286
        %2311 = vmatprep.subr.bf16.mxu0 0
        %2312 = vmatpush1.bf16.msra.mxu0 0
        %2313 = vmatprep.subr.bf16.mxu0 0
        %2314 = vmatpush1.bf16.msra.mxu0 0
        %2315 = vmatprep.subr.bf16.mxu0 0
        %2316 = vmatpush1.bf16.msra.mxu0 0
        %2317 = vmatprep.subr.bf16.mxu0 0
        %2318 = vmatpush1.bf16.msra.mxu0 0
        %2319 = vmatprep.subr.bf16.mxu0 0
        %2320 = vmatpush1.bf16.msra.mxu0 0
        %2321 = vmatprep.subr.bf16.mxu0 0
        %2322 = vmatpush1.bf16.msra.mxu0 0
        %2323 = vmatprep.subr.bf16.mxu0 0
        %2324 = vmatpush1.bf16.msra.mxu0 0
        %2325 = vmatprep.subr.bf16.mxu0 0
        %2326 = vmatpush1.bf16.msra.mxu0 0
        %2327 = vmatprep.mubr.bf16.mxu0 0
        %2328 = vmatmul.mubr.bf16.gmra.mrb[0].mxu0 %v2224
        %v2329 = vpop.f32.mrb[0].mxu0
        %v2330 = vadd.f32 0.0, %v2329
        %v2331 = vpop.f32.mrb[0].mxu0
        %v2332 = vpop.f32.mrb[0].mxu0
        %v2333 = vadd.f32 0.0, %v2332
        %v2334 = vpop.f32.mrb[0].mxu0
        %2335 = vmatprep.mubr.bf16.mxu0 0
        %2336 = vmatmul.mubr.bf16.gmra.mrb[0].mxu0 %v2226
        %v2337 = vpop.f32.mrb[0].mxu0
        %v2338 = vadd.f32 0.0, %v2337
        %v2339 = vpop.f32.mrb[0].mxu0
        %v2340 = vpop.f32.mrb[0].mxu0
        %v2341 = vadd.f32 0.0, %v2340
        %v2342 = vpop.f32.mrb[0].mxu0
        %2343 = vmatprep.mubr.bf16.mxu0 0
        %2344 = vmatmul.mubr.bf16.gmra.mrb[0].mxu0 %v2228
        %v2345 = vpop.f32.mrb[0].mxu0
        %v2346 = vadd.f32 0.0, %v2345
        %v2347 = vpop.f32.mrb[0].mxu0
        %v2348 = vpop.f32.mrb[0].mxu0
        %v2349 = vadd.f32 0.0, %v2348
        %v2350 = vpop.f32.mrb[0].mxu0
        %2351 = vmatprep.mubr.bf16.mxu0 0
        %2352 = vmatmul.mubr.bf16.gmra.mrb[0].mxu0 %v2230
        %v2353 = vpop.f32.mrb[0].mxu0
        %v2354 = vadd.f32 0.0, %v2353
        %v2355 = vpop.f32.mrb[0].mxu0
        %v2356 = vpop.f32.mrb[0].mxu0
        %v2357 = vadd.f32 0.0, %v2356
        %v2358 = vpop.f32.mrb[0].mxu0
        %2359 = vmatprep.mubr.bf16.mxu0 0
        %2360 = vmatmul.mubr.bf16.gmra.mrb[0].mxu0 %v2232
        %v2361 = vpop.f32.mrb[0].mxu0
        %v2362 = vadd.f32 0.0, %v2361
        %v2363 = vpop.f32.mrb[0].mxu0
        %v2364 = vpop.f32.mrb[0].mxu0
        %v2365 = vadd.f32 0.0, %v2364
        %v2366 = vpop.f32.mrb[0].mxu0
        %2367 = vmatprep.mubr.bf16.mxu0 0
        %2368 = vmatmul.mubr.bf16.gmra.mrb[0].mxu0 %v2234
        %v2369 = vpop.f32.mrb[0].mxu0
        %v2370 = vadd.f32 0.0, %v2369
        %v2371 = vpop.f32.mrb[0].mxu0
        %v2372 = vpop.f32.mrb[0].mxu0
        %v2373 = vadd.f32 0.0, %v2372
        %v2374 = vpop.f32.mrb[0].mxu0
        %2375 = vmatprep.mubr.bf16.mxu0 0
        %2376 = vmatmul.mubr.bf16.gmra.mrb[0].mxu0 %v2236
        %v2377 = vpop.f32.mrb[0].mxu0
        %v2378 = vadd.f32 0.0, %v2377
        %v2379 = vpop.f32.mrb[0].mxu0
        %v2380 = vpop.f32.mrb[0].mxu0
        %v2381 = vadd.f32 0.0, %v2380
        %v2382 = vpop.f32.mrb[0].mxu0
        %2383 = vmatprep.mubr.bf16.mxu0 0
        %2384 = vmatmul.mubr.bf16.gmra.mrb[0].mxu0 %v2238
        %v2385 = vpop.f32.mrb[0].mxu0
        %v2386 = vadd.f32 0.0, %v2385
        %v2387 = vpop.f32.mrb[0].mxu0
        %v2388 = vpop.f32.mrb[0].mxu0
        %v2389 = vadd.f32 0.0, %v2388
        %v2390 = vpop.f32.mrb[0].mxu0
        %2391 = vdwg.mxu0
        %v2392 = vadd.f32 %v2184, %v2330
        %v2393 = vadd.f32 %v2185, %v2333
        %v2394 = vadd.f32 %v2186, %v2338
        %v2395 = vadd.f32 %v2187, %v2341
        %v2396 = vadd.f32 %v2188, %v2346
        %v2397 = vadd.f32 %v2189, %v2349
        %v2398 = vadd.f32 %v2190, %v2354
        %v2399 = vadd.f32 %v2191, %v2357
        %v2400 = vadd.f32 %v2192, %v2362
        %v2401 = vadd.f32 %v2193, %v2365
        %v2402 = vadd.f32 %v2194, %v2370
        %v2403 = vadd.f32 %v2195, %v2373
        %v2404 = vadd.f32 %v2196, %v2378
        %v2405 = vadd.f32 %v2197, %v2381
        %v2406 = vadd.f32 %v2198, %v2386
        %v2407 = vadd.f32 %v2199, %v2389
        %v2408 = vld [vmem:[%s2] sm:$0x1]
        %v2410 = vlaneseq
        %v2411 = vshrl.u32 %v2410, 7
        %v2412 = vsub.s32 0, %v2411
        %v2413 = vrot.slane %v2408, %v2412
        %v2415 = vmul.f32 %v2392, %v2413
        %v2416 = vmul.f32 %v2393, %v2413
        %v2417 = vmul.f32 %v2394, %v2413
        %v2418 = vmul.f32 %v2395, %v2413
        %v2419 = vmul.f32 %v2396, %v2413
        %v2420 = vmul.f32 %v2397, %v2413
        %v2421 = vmul.f32 %v2398, %v2413
        %v2422 = vmul.f32 %v2399, %v2413
        %v2423 = vmul.f32 %v2400, %v2413
        %v2424 = vmul.f32 %v2401, %v2413
        %v2425 = vmul.f32 %v2402, %v2413
        %v2426 = vmul.f32 %v2403, %v2413
        %v2427 = vmul.f32 %v2404, %v2413
        %v2428 = vmul.f32 %v2405, %v2413
        %v2429 = vmul.f32 %v2406, %v2413
        %v2430 = vmul.f32 %v2407, %v2413
        %v2431 = vld [vmem:[%s3] sm:$0x1]
        %v2433 = vlaneseq
        %v2434 = vshrl.u32 %v2433, 7
        %v2435 = vsub.s32 0, %v2434
        %v2436 = vrot.slane %v2431, %v2435
        %v2438 = vadd.f32 %v2415, %v2436
        %v2439 = vadd.f32 %v2416, %v2436
        %v2440 = vadd.f32 %v2417, %v2436
        %v2441 = vadd.f32 %v2418, %v2436
        %v2442 = vadd.f32 %v2419, %v2436
        %v2443 = vadd.f32 %v2420, %v2436
        %v2444 = vadd.f32 %v2421, %v2436
        %v2445 = vadd.f32 %v2422, %v2436
        %v2446 = vadd.f32 %v2423, %v2436
        %v2447 = vadd.f32 %v2424, %v2436
        %v2448 = vadd.f32 %v2425, %v2436
        %v2449 = vadd.f32 %v2426, %v2436
        %v2450 = vadd.f32 %v2427, %v2436
        %v2451 = vadd.f32 %v2428, %v2436
        %v2452 = vadd.f32 %v2429, %v2436
        %v2453 = vadd.f32 %v2430, %v2436
        %vm2454 = vcmp.gt.f32.partialorder %v2438, 0.0
        %vm2455 = vcmp.gt.f32.partialorder %v2439, 0.0
        %vm2456 = vcmp.gt.f32.partialorder %v2440, 0.0
        %vm2457 = vcmp.gt.f32.partialorder %v2441, 0.0
        %vm2458 = vcmp.gt.f32.partialorder %v2442, 0.0
        %vm2459 = vcmp.gt.f32.partialorder %v2443, 0.0
        %vm2460 = vcmp.gt.f32.partialorder %v2444, 0.0
        %vm2461 = vcmp.gt.f32.partialorder %v2445, 0.0
        %vm2462 = vcmp.gt.f32.partialorder %v2446, 0.0
        %vm2463 = vcmp.gt.f32.partialorder %v2447, 0.0
        %vm2464 = vcmp.gt.f32.partialorder %v2448, 0.0
        %vm2465 = vcmp.gt.f32.partialorder %v2449, 0.0
        %vm2466 = vcmp.gt.f32.partialorder %v2450, 0.0
        %vm2467 = vcmp.gt.f32.partialorder %v2451, 0.0
        %vm2468 = vcmp.gt.f32.partialorder %v2452, 0.0
        %vm2469 = vcmp.gt.f32.partialorder %v2453, 0.0
        %v2470 = vmul.f32 %v2438, 0.1
        %v2471 = vmul.f32 %v2439, 0.1
        %v2472 = vmul.f32 %v2440, 0.1
        %v2473 = vmul.f32 %v2441, 0.1
        %v2474 = vmul.f32 %v2442, 0.1
        %v2475 = vmul.f32 %v2443, 0.1
        %v2476 = vmul.f32 %v2444, 0.1
        %v2477 = vmul.f32 %v2445, 0.1
        %v2478 = vmul.f32 %v2446, 0.1
        %v2479 = vmul.f32 %v2447, 0.1
        %v2480 = vmul.f32 %v2448, 0.1
        %v2481 = vmul.f32 %v2449, 0.1
        %v2482 = vmul.f32 %v2450, 0.1
        %v2483 = vmul.f32 %v2451, 0.1
        %v2484 = vmul.f32 %v2452, 0.1
        %v2485 = vmul.f32 %v2453, 0.1
        %v2486 = vsel %vm2454, %v2438, %v2470
        %v2487 = vsel %vm2455, %v2439, %v2471
        %v2488 = vsel %vm2456, %v2440, %v2472
        %v2489 = vsel %vm2457, %v2441, %v2473
        %v2490 = vsel %vm2458, %v2442, %v2474
        %v2491 = vsel %vm2459, %v2443, %v2475
        %v2492 = vsel %vm2460, %v2444, %v2476
        %v2493 = vsel %vm2461, %v2445, %v2477
        %v2494 = vsel %vm2462, %v2446, %v2478
        %v2495 = vsel %vm2463, %v2447, %v2479
        %v2496 = vsel %vm2464, %v2448, %v2480
        %v2497 = vsel %vm2465, %v2449, %v2481
        %v2498 = vsel %vm2466, %v2450, %v2482
        %v2499 = vsel %vm2467, %v2451, %v2483
        %v2500 = vsel %vm2468, %v2452, %v2484
        %v2501 = vsel %vm2469, %v2453, %v2485
        %v2502 = vpack.c.bf16 %v2487, %v2486
        %v2503 = vpack.c.bf16 %v2489, %v2488
        %v2504 = vpack.c.bf16 %v2491, %v2490
        %v2505 = vpack.c.bf16 %v2493, %v2492
        %v2506 = vpack.c.bf16 %v2495, %v2494
        %v2507 = vpack.c.bf16 %v2497, %v2496
        %v2508 = vpack.c.bf16 %v2499, %v2498
        %v2509 = vpack.c.bf16 %v2501, %v2500
        %v2518 = vunpack.c.l.b16 %v2502
        %v2519 = vunpack.c.h.b16 %v2502
        %v2520 = vunpack.c.l.b16 %v2503
        %v2521 = vunpack.c.h.b16 %v2503
        %v2522 = vunpack.c.l.b16 %v2504
        %v2523 = vunpack.c.h.b16 %v2504
        %v2524 = vunpack.c.l.b16 %v2505
        %v2525 = vunpack.c.h.b16 %v2505
        %v2526 = vunpack.c.l.b16 %v2506
        %v2527 = vunpack.c.h.b16 %v2506
        %v2528 = vunpack.c.l.b16 %v2507
        %v2529 = vunpack.c.h.b16 %v2507
        %v2530 = vunpack.c.l.b16 %v2508
        %v2531 = vunpack.c.h.b16 %v2508
        %v2532 = vunpack.c.l.b16 %v2509
        %v2533 = vunpack.c.h.b16 %v2509
        %v2534 = vpack.c.b16 %v2518, %v2518
        %v2535 = vpack.c.b16 %v2519, %v2519
        %v2536 = vpack.c.b16 %v2520, %v2520
        %v2537 = vpack.c.b16 %v2521, %v2521
        %v2538 = vpack.c.b16 %v2522, %v2522
        %v2539 = vpack.c.b16 %v2523, %v2523
        %v2540 = vpack.c.b16 %v2524, %v2524
        %v2541 = vpack.c.b16 %v2525, %v2525
        %v2542 = vpack.c.b16 %v2526, %v2526
        %v2543 = vpack.c.b16 %v2527, %v2527
        %v2544 = vpack.c.b16 %v2528, %v2528
        %v2545 = vpack.c.b16 %v2529, %v2529
        %v2546 = vpack.c.b16 %v2530, %v2530
        %v2547 = vpack.c.b16 %v2531, %v2531
        %v2548 = vpack.c.b16 %v2532, %v2532
        %v2549 = vpack.c.b16 %v2533, %v2533
        %2566 = vst [vmem:[%s178] sm:$0xf] %v2534
        %2567 = vst [vmem:[%s178 + $0x4] sm:$0xf] %v2535
        %2568 = vst [vmem:[%s178 + $0x8] sm:$0xf] %v2536
        %2569 = vst [vmem:[%s178 + $0xc] sm:$0xf] %v2537
        %2570 = vst [vmem:[%s178 + $0x10] sm:$0xf] %v2538
        %2571 = vst [vmem:[%s178 + $0x14] sm:$0xf] %v2539
        %2572 = vst [vmem:[%s178 + $0x18] sm:$0xf] %v2540
        %2573 = vst [vmem:[%s178 + $0x1c] sm:$0xf] %v2541
        %2574 = vst [vmem:[%s178 + $0x20] sm:$0xf] %v2542
        %2575 = vst [vmem:[%s178 + $0x24] sm:$0xf] %v2543
        %2576 = vst [vmem:[%s178 + $0x28] sm:$0xf] %v2544
        %2577 = vst [vmem:[%s178 + $0x2c] sm:$0xf] %v2545
        %2578 = vst [vmem:[%s178 + $0x30] sm:$0xf] %v2546
        %2579 = vst [vmem:[%s178 + $0x34] sm:$0xf] %v2547
        %2580 = vst [vmem:[%s178 + $0x38] sm:$0xf] %v2548
        %2581 = vst [vmem:[%s178 + $0x3c] sm:$0xf] %v2549
        %s2582 = sand.u32 %s104, 1
        %s2583 = scalar_lea.sflag [#allocation6], %s2582
        %s2584 = sand.u32 %s104, 1
        %s2585 = smul.addr %s2584, 64
        %s2586 = scalar_lea.vmem [#allocation7], %s2585
        // Predicated region
        $region53: #{tpu_custom_call.1} parent=31 // pred_check
          %p2587 = pneg %p114
        $region54: #{tpu_custom_call.1} parent=31 // pred_check_branch
          %2589 = sbr.rel (%p2587) target = $region56
        $region55: #{tpu_custom_call.1} parent=31 // pred_region
          %s2590 = smul.u32 16, %s24
          %s2592 = ssub.s32 1024, 1024
          %2593 = vsyncadd %s2583, %s2592
          %s2594 = smul.addr %s23, 48
          %s2595 = sadd.s32 %s2590, %s2594
          %s2596 = smul.addr %s2595, 64
          %s2597 = scalar_lea.hbm %s4, %s2596
          %s2598 = sshll.u32 %s2586, 4
          %s2599 = int_to_ptr.vmem [resolvable:$true] %s2598
          %2604 = dma.vmem_to_hbm [thread:$0]  %s2599, 1024, %s2597, %s2583, 64, 64, 4
        $region56: #{tpu_custom_call.1} parent=31 // pred_fallthru
          _
      $region32: #{tpu_custom_call.1} parent=5 // pred_fallthru
        _
      %p2605 = scmp.le.s32.totalorder 2, %s14
      // Predicated region
      $region57: #{tpu_custom_call.1} parent=5 // pred_check
        %p2606 = pneg %p2605
      $region58: #{tpu_custom_call.1} parent=5 // pred_check_branch
        %2608 = sbr.rel (%p2606) target = $region60
      $region59: #{tpu_custom_call.1} parent=5 // pred_region
        %s2609 = ssub.s32 %s14, 2
        // Predicated region
        $region61: #{tpu_custom_call.1} parent=59 // pred_check
          %p2610 = pneg %p120
        $region62: #{tpu_custom_call.1} parent=59 // pred_check_branch
          %2612 = sbr.rel (%p2610) target = $region64
        $region63: #{tpu_custom_call.1} parent=59 // pred_region
          %s2613 = sand.u32 %s105, 1
          %s2614 = scalar_lea.sflag [#allocation6], %s2613
          %s2615 = sand.u32 %s105, 1
          %s2616 = smul.addr %s2615, 64
          %s2617 = scalar_lea.vmem [#allocation7], %s2616
          %2618 = dma.done %s2614, 1024
        $region64: #{tpu_custom_call.1} parent=59 // pred_fallthru
          _
      $region60: #{tpu_custom_call.1} parent=5 // pred_fallthru
        _
    $region6: #{tpu_custom_call.1} parent=1 // loop_footer
      %s18 = sadd.s32 1, %s14
    $region7: #{tpu_custom_call.1} parent=1 // loop_footer_branch
      %13 = sbr.rel target = $region3
    $region8: #{tpu_custom_call.1} parent=1 // loop_exit
      _
    %2619 = vsyncpa [#allocation5], 1
    %s2620 = scalar_lea.sflag [#allocation5], 1
    %2621 = vsyncpa %s2620, 1
    %2622 = vsyncpa [#allocation6], 1
    %s2623 = scalar_lea.sflag [#allocation6], 1
    %2624 = vsyncpa %s2623, 1
  %2625 = vsyncmov [#allocation3]
  %s2626 = vpop.sfrf %2625
  %p2627 = scmp.eq.s32.totalorder %s2626, 0
  %p2628 = pneg %p2627
  %2630 = shalt.err (%p2628)
  %s2631 = scalar_lea.sflag [#allocation3], 1
  %2632 = vsyncmov %s2631
  %s2633 = vpop.sfrf %2632
  %p2634 = scmp.eq.s32.totalorder %s2633, 0
  %p2635 = pneg %p2634
  %2637 = shalt.err (%p2635)

// kernel: tpu_custom_call.1
$region0: #{tpu_custom_call.1}
  #allocation0 [shape = 'u32[]', space=smem, size = 0x4, offset = 0x4, fixed_abs, tag = 'smem constant byte address 0x4 - core index']
  #allocation1 [shape = 'u32[144,128]{1,0:T(1,128)}', space=vmem, size = 0x12000, scoped, tag = 'internal scratch']
  #allocation2 [shape = 'bf16[2,1,168,128]{3,2,1,0:T(8,128)(2,1)}', space=vmem, size = 0x15000, scoped, tag = 'scratch operand']
  #allocation3 [shape = 's32[2]{0}', space=sflag, size = 0x8, scoped, tag = 'scratch operand']
  #allocation8 [shape = 's32[]', space=sflag, size = 0x4, offset = 0, fixed_abs, tag = 'sflag constant byte address 0x0 - dummy sync flag']
  #allocation9 [shape = 's32[]', space=sflag, size = 0x4, offset = 0, fixed_abs, tag = 'sflag constant byte address 0x0 - dummy sync flag']
  #allocation10 [shape = 'u32[]', space=smem, size = 0x4, offset = 0x44, fixed_abs, tag = 'smem constant byte address 0x44 - assertion arg 0']
  #allocation11 [shape = 'u32[]', space=smem, size = 0x4, offset = 0x48, fixed_abs, tag = 'smem constant byte address 0x48 - assertion arg 1']
  #allocation12 [shape = 's32[]', space=sflag, size = 0x4, offset = 0, fixed_abs, tag = 'sflag constant byte address 0x0 - dummy sync flag']
  #allocation13 [shape = 's32[]', space=sflag, size = 0x4, offset = 0, fixed_abs, tag = 'sflag constant byte address 0x0 - dummy sync flag']
  %s0 = inlined_call_operand.hbm [shape: bf16[2,1,424,128], index: 0, kind: input, shape index: {}]
  %s1 = inlined_call_operand.hbm [shape: bf16[9,128,128], index: 1, kind: input, shape index: {}]
  %s2 = inlined_call_operand.vmem [shape: f32[1,128], index: 2, kind: input, shape index: {}]
  %s3 = inlined_call_operand.vmem [shape: f32[1,128], index: 3, kind: input, shape index: {}]
  %s4 = inlined_call_operand.hbm [shape: bf16[2,384,128], index: 4, kind: output, shape index: {}]
  %s5 = sld [smem:[#allocation0]]
  $region65: #{tpu_custom_call.1} parent=0
    _
  %s7 = ssub.s32 1, %s5
  %s8 = scalar_select 0, %s7, %s5
  $region1: #{tpu_custom_call.1} parent=0
    #allocation4 [shape = 'u8[294912]{0}', space=vmem, size = 0x48000, scoped, tag = 'input window, operand 1, single buffered']
    #allocation5 [shape = 's32[2]{0}', space=sflag, size = 0x8, scoped, tag = 'scoped memory for tpu_custom_call.1']
    #allocation6 [shape = 's32[2]{0}', space=sflag, size = 0x8, scoped, tag = 'scoped memory for tpu_custom_call.1']
    #allocation7 [shape = 'u8[65536]{0}', space=vmem, size = 0x10000, scoped, tag = 'output window, operand 0']
    %9 = vsyncpa [#allocation5], 0
    %10 = vsyncpa [#allocation6], 0
    %s11 = scalar_lea.sflag [#allocation6], 1
    %12 = vsyncpa %s11, 0
    loop: start=0, step=1, limit=8
    $region2: #{tpu_custom_call.1} parent=1 // loop_pre_header
      _
    $region3: #{tpu_custom_call.1} parent=1 // loop_header
      %s14 = sphi 0, %s18
      %p15 = scmp.ge.s32.totalorder %s14, 8
      %s21 = sphi 0, %s33
      %s22 = sphi 0, %s29
      %s23 = sphi 0, %s21
      %s24 = sphi 0, %s22
      %s25 = sphi 0, %s23
      %s26 = sphi 0, %s24
      %s34 = sphi 0, %s34
      %s36 = sphi 0, %s34
      %s37 = sphi 0, %s36
      %s51 = sphi 0, %s37
      %s55 = sphi 0, %s55
      %s57 = sphi 0, %s55
      %s58 = sphi 0, %s57
      %s72 = sphi 0, %s58
      %s76 = sphi 0, %s76
      %s78 = sphi 0, %s76
      %s79 = sphi 0, %s78
      %s93 = sphi 0, %s79
      %s101 = sphi 0, %s103
      %s104 = sphi 0, %s101
      %s105 = sphi 0, %s104
      %s121 = sphi 0, %s105
    $region4: #{tpu_custom_call.1} parent=1 // loop_header_branch
      %17 = sbr.rel (%p15) target = $region8
    $region5: #{tpu_custom_call.1} parent=1 // loop_body
      %s19 = ssub.s32 %s14, 1
      %s20 = ssub.s32 %s14, 2
      %s27 = sadd.s32 1, %s22
      %p28 = scmp.ge.s32.totalorder %s27, 3
      %s29 = scalar_select %p28, 0, %s27
      %s30 = sadd.s32 1, %s21
      %s31 = scalar_select %p28, %s30, %s21
      %p32 = scmp.ge.s32.totalorder %s31, 2
      %s33 = scalar_select %p32, 0, %s31
      %s35 = sadd.s32 %s34, 1
      %p38 = scmp.eq.s32.totalorder %s14, 5
      %p39 = scmp.ne.s32.totalorder %s34, %s36
      %p40 = scmp.eq.s32.totalorder %s14, 0
      %p41 = por %p39, %p40
      %p42 = scmp.ne.s32.totalorder %s34, %s36
      %p43 = scmp.eq.s32.totalorder %s19, 5
      %p44 = por %p42, %p43
      %p45 = scmp.ne.s32.totalorder %s36, %s37
      %p46 = scmp.eq.s32.totalorder %s19, 0
      %p47 = por %p45, %p46
      %p48 = scmp.ne.s32.totalorder %s36, %s37
      %p49 = scmp.eq.s32.totalorder %s20, 5
      %p50 = por %p48, %p49
      %p52 = scmp.ne.s32.totalorder %s37, %s51
      %p53 = scmp.eq.s32.totalorder %s20, 0
      %p54 = por %p52, %p53
      %s56 = sadd.s32 %s55, 1
      %p59 = scmp.eq.s32.totalorder %s14, 5
      %p60 = scmp.ne.s32.totalorder %s55, %s57
      %p61 = scmp.eq.s32.totalorder %s14, 0
      %p62 = por %p60, %p61
      %p63 = scmp.ne.s32.totalorder %s55, %s57
      %p64 = scmp.eq.s32.totalorder %s19, 5
      %p65 = por %p63, %p64
      %p66 = scmp.ne.s32.totalorder %s57, %s58
      %p67 = scmp.eq.s32.totalorder %s19, 0
      %p68 = por %p66, %p67
      %p69 = scmp.ne.s32.totalorder %s57, %s58
      %p70 = scmp.eq.s32.totalorder %s20, 5
      %p71 = por %p69, %p70
      %p73 = scmp.ne.s32.totalorder %s58, %s72
      %p74 = scmp.eq.s32.totalorder %s20, 0
      %p75 = por %p73, %p74
      %s77 = sadd.s32 %s76, 1
      %p80 = scmp.eq.s32.totalorder %s14, 5
      %p81 = scmp.ne.s32.totalorder %s76, %s78
      %p82 = scmp.eq.s32.totalorder %s14, 0
      %p83 = por %p81, %p82
      %p84 = scmp.ne.s32.totalorder %s76, %s78
      %p85 = scmp.eq.s32.totalorder %s19, 5
      %p86 = por %p84, %p85
      %p87 = scmp.ne.s32.totalorder %s78, %s79
      %p88 = scmp.eq.s32.totalorder %s19, 0
      %p89 = por %p87, %p88
      %p90 = scmp.ne.s32.totalorder %s78, %s79
      %p91 = scmp.eq.s32.totalorder %s20, 5
      %p92 = por %p90, %p91
      %p94 = scmp.ne.s32.totalorder %s79, %s93
      %p95 = scmp.eq.s32.totalorder %s20, 0
      %p96 = por %p94, %p95
      %s97 = ssub.s32 %s21, %s33
      %s98 = ssub.s32 %s22, %s29
      %s99 = sor.u32 %s97, %s98
      %p100 = scmp.eq.s32.totalorder %s99, 0
      %s102 = sadd.s32 %s101, 1
      %s103 = scalar_select %p100, %s101, %s102
      %p106 = pneg %p100
      %p107 = scmp.eq.s32.totalorder %s14, 5
      %p108 = por %p106, %p107
      %p109 = scmp.ne.s32.totalorder %s101, %s104
      %p110 = scmp.eq.s32.totalorder %s14, 0
      %p111 = por %p109, %p110
      %p112 = scmp.ne.s32.totalorder %s101, %s104
      %p113 = scmp.eq.s32.totalorder %s19, 5
      %p114 = por %p112, %p113
      %p115 = scmp.ne.s32.totalorder %s104, %s105
      %p116 = scmp.eq.s32.totalorder %s19, 0
      %p117 = por %p115, %p116
      %p118 = scmp.ne.s32.totalorder %s104, %s105
      %p119 = scmp.eq.s32.totalorder %s20, 5
      %p120 = por %p118, %p119
      %p122 = scmp.ne.s32.totalorder %s105, %s121
      %p123 = scmp.eq.s32.totalorder %s20, 0
      %p124 = por %p122, %p123
      %p125 = scmp.le.s32.totalorder 1, %s14
      %p126 = scmp.lt.s32.totalorder %s14, 7
      %p127 = pnand %p125, %p126
      %p128 = pneg %p127
      // Predicated region
      $region9: #{tpu_custom_call.1} parent=5 // pred_check
        _
      $region10: #{tpu_custom_call.1} parent=5 // pred_check_branch
        %130 = sbr.rel (%p127) target = $region12
      $region11: #{tpu_custom_call.1} parent=5 // pred_region
        %s131 = ssub.s32 %s14, 1
        // Predicated region
        $region13: #{tpu_custom_call.1} parent=11 // pred_check
          %p132 = pneg %p47
        $region14: #{tpu_custom_call.1} parent=11 // pred_check_branch
          %134 = sbr.rel (%p132) target = $region16
        $region15: #{tpu_custom_call.1} parent=11 // pred_region
          %s136 = ssub.s32 9216, 9216
          %137 = vsyncadd [#allocation5], %s136
          %s138 = sshll.u32 [#allocation4], 4
          %s139 = int_to_ptr.vmem [resolvable:$true] %s138
          %144 = dma.hbm_to_vmem [thread:$0]  %s1, 9216, %s139, [#allocation5], 64, 64, 4
        $region16: #{tpu_custom_call.1} parent=11 // pred_fallthru
          _
        // Predicated region
        $region17: #{tpu_custom_call.1} parent=11 // pred_check
          %p145 = pneg %p68
        $region18: #{tpu_custom_call.1} parent=11 // pred_check_branch
          %147 = sbr.rel (%p145) target = $region20
        $region19: #{tpu_custom_call.1} parent=11 // pred_region
          _
        $region20: #{tpu_custom_call.1} parent=11 // pred_fallthru
          _
        // Predicated region
        $region21: #{tpu_custom_call.1} parent=11 // pred_check
          %p148 = pneg %p89
        $region22: #{tpu_custom_call.1} parent=11 // pred_check_branch
          %150 = sbr.rel (%p148) target = $region24
        $region23: #{tpu_custom_call.1} parent=11 // pred_region
          _
        $region24: #{tpu_custom_call.1} parent=11 // pred_fallthru
          _
      $region12: #{tpu_custom_call.1} parent=5 // pred_fallthru
        _
      %p151 = scmp.lt.s32.totalorder %s14, 6
      // Predicated region
      $region25: #{tpu_custom_call.1} parent=5 // pred_check
        %p152 = pneg %p151
      $region26: #{tpu_custom_call.1} parent=5 // pred_check_branch
        %154 = sbr.rel (%p152) target = $region28
      $region27: #{tpu_custom_call.1} parent=5 // pred_region
        _
      $region28: #{tpu_custom_call.1} parent=5 // pred_fallthru
        _
      %p155 = scmp.le.s32.totalorder 1, %s14
      %p156 = scmp.lt.s32.totalorder %s14, 7
      %p157 = pnand %p155, %p156
      %p158 = pneg %p157
      // Predicated region
      $region29: #{tpu_custom_call.1} parent=5 // pred_check
        _
      $region30: #{tpu_custom_call.1} parent=5 // pred_check_branch
        %160 = sbr.rel (%p157) target = $region32
      $region31: #{tpu_custom_call.1} parent=5 // pred_region
        %s161 = ssub.s32 %s14, 1
        // Predicated region
        $region33: #{tpu_custom_call.1} parent=31 // pred_check
          %p162 = pneg %p47
        $region34: #{tpu_custom_call.1} parent=31 // pred_check_branch
          %164 = sbr.rel (%p162) target = $region36
        $region35: #{tpu_custom_call.1} parent=31 // pred_region
          %165 = dma.done [#allocation5], 9216
        $region36: #{tpu_custom_call.1} parent=31 // pred_fallthru
          _
        %p166 = pneg %p47
        %p167 = pneg %p44
        %p168 = pneg %p68
        %p169 = pneg %p65
        %p170 = pneg %p89
        %p171 = pneg %p86
        %p172 = pneg %p117
        %p173 = pneg %p114
        %s174 = sand.u32 %s104, 1
        %s175 = scalar_lea.sflag [#allocation6], %s174
        %s176 = sand.u32 %s104, 1
        %s177 = smul.addr %s176, 64
        %s178 = scalar_lea.vmem [#allocation7], %s177
        %s179 = smul.u32 16, %s24
        %p181 = scmp.eq.s32.totalorder %s24, 0
        // Predicated region
        $region37: #{tpu_custom_call.1} parent=31 // pred_check
          %p182 = pneg %p181
        $region38: #{tpu_custom_call.1} parent=31 // pred_check_branch
          %184 = sbr.rel (%p182) target = $region40
        $region39: #{tpu_custom_call.1} parent=31 // pred_region
          %s185 = smul.u32 %s23, 53
          %s186 = smul.addr %s185, 64
          %s187 = scalar_lea.hbm %s0, %s186
          // Predicated region
          $region41: #{tpu_custom_call.1} parent=39 // pred_check
            _
          $region42: #{tpu_custom_call.1} parent=39 // pred_check_branch
            %189 = sbr.rel target = $region44
          $region43: #{tpu_custom_call.1} parent=39 // pred_region
            %190 = sst [smem:[#allocation10]] [#allocation9]
            %191 = sst [smem:[#allocation11]] [#allocation8]
          $region44: #{tpu_custom_call.1} parent=39 // pred_fallthru
            _
          %193 = shalt.err (0)
          %s195 = sshll.u32 [#allocation2], 4
          %s196 = int_to_ptr.vmem [resolvable:$true] %s195
          %198 = dma.hbm_to_vmem [thread:$0]  %s187, 1344, %s196, [#allocation3]
        $region40: #{tpu_custom_call.1} parent=31 // pred_fallthru
          _
        %p199 = scmp.lt.s32.totalorder %s24, 0
        %s200 = ssub.s32 0, %s24
        %s201 = scalar_select %p199, %s200, %s24
        %s202 = sand.u32 %s201, 1
        %s203 = ssub.s32 0, %s202
        %s204 = scalar_select %p199, %s203, %s202
        %p205 = scmp.ne.s32.totalorder %s204, 0
        %p206 = scmp.lt.s32.totalorder %s204, 0
        %p207 = pnand %p206, %p205
        %p208 = pneg %p207
        %s209 = sadd.s32 %s204, 2
        %s210 = scalar_select %p208, %s209, %s204
        %s211 = sadd.s32 %s24, 1
        %p212 = scmp.lt.s32.totalorder %s211, 3
        // Predicated region
        $region45: #{tpu_custom_call.1} parent=31 // pred_check
          %p213 = pneg %p212
        $region46: #{tpu_custom_call.1} parent=31 // pred_check_branch
          %215 = sbr.rel (%p213) target = $region48
        $region47: #{tpu_custom_call.1} parent=31 // pred_region
          %s216 = ssub.s32 1, %s210
          %s217 = smul.u32 %s211, 128
          %s218 = sshra.s32 %s217, 3
          %s219 = sand.u32 %s217, 7
          %s220 = smul.u32 %s23, 53
          %s221 = sadd.s32 %s218, %s220
          %s222 = smul.addr %s221, 64
          %s223 = scalar_lea.hbm %s0, %s222
          %s224 = smul.u32 %s216, 21
          %s225 = smul.addr %s224, 4
          %s226 = scalar_lea.vmem [#allocation2], %s225
          %s227 = scalar_lea.sflag [#allocation3], %s216
          // Predicated region
          $region49: #{tpu_custom_call.1} parent=47 // pred_check
            _
          $region50: #{tpu_custom_call.1} parent=47 // pred_check_branch
            %229 = sbr.rel target = $region52
          $region51: #{tpu_custom_call.1} parent=47 // pred_region
            %230 = sst [smem:[#allocation10]] [#allocation13]
            %231 = sst [smem:[#allocation11]] [#allocation12]
          $region52: #{tpu_custom_call.1} parent=47 // pred_fallthru
            _
          %233 = shalt.err (0)
          %s235 = sshll.u32 %s226, 4
          %s236 = int_to_ptr.vmem [resolvable:$true] %s235
          %238 = dma.hbm_to_vmem [thread:$0]  %s223, 1344, %s236, %s227
        $region48: #{tpu_custom_call.1} parent=31 // pred_fallthru
          _
        %s239 = smul.u32 %s210, 21
        %s240 = smul.addr %s239, 4
        %s241 = scalar_lea.vmem [#allocation2], %s240
        %s242 = scalar_lea.sflag [#allocation3], %s210
        %s243 = smul.u32 4, 1
        %s244 = smul.u32 %s243, 21
        %s245 = smul.u32 %s244, 1
        %s246 = sshll.u32 %s245, 4
        %247 = dma.done %s242, %s246
        %v248 = vld [vmem:[%s241] sm:$0xf]
        %v249 = vld [vmem:[%s241 + $0x4] sm:$0xf]
        %v250 = vld [vmem:[%s241 + $0x8] sm:$0xf]
        %v251 = vld [vmem:[%s241 + $0xc] sm:$0xf]
        %v252 = vld [vmem:[%s241 + $0x10] sm:$0xf]
        %v253 = vld [vmem:[%s241 + $0x14] sm:$0xf]
        %v254 = vld [vmem:[%s241 + $0x18] sm:$0xf]
        %v255 = vld [vmem:[%s241 + $0x1c] sm:$0xf]
        %v256 = vld [vmem:[%s241 + $0x20] sm:$0xf]
        %v257 = vld [vmem:[%s241 + $0x24] sm:$0xf]
        %v258 = vld [vmem:[%s241 + $0x28] sm:$0xf]
        %v259 = vld [vmem:[%s241 + $0x2c] sm:$0xf]
        %v260 = vld [vmem:[%s241 + $0x30] sm:$0xf]
        %v261 = vld [vmem:[%s241 + $0x34] sm:$0xf]
        %v262 = vld [vmem:[%s241 + $0x38] sm:$0xf]
        %v263 = vld [vmem:[%s241 + $0x3c] sm:$0xf]
        %v264 = vld [vmem:[#allocation4] sm:$0xf]
        %v265 = vld [vmem:[#allocation4 + $0x4] sm:$0xf]
        %v266 = vld [vmem:[#allocation4 + $0x8] sm:$0xf]
        %v267 = vld [vmem:[#allocation4 + $0xc] sm:$0xf]
        %v268 = vld [vmem:[#allocation4 + $0x10] sm:$0xf]
        %v269 = vld [vmem:[#allocation4 + $0x14] sm:$0xf]
        %v270 = vld [vmem:[#allocation4 + $0x18] sm:$0xf]
        %v271 = vld [vmem:[#allocation4 + $0x1c] sm:$0xf]
        %v272 = vld [vmem:[#allocation4 + $0x20] sm:$0xf]
        %v273 = vld [vmem:[#allocation4 + $0x24] sm:$0xf]
        %v274 = vld [vmem:[#allocation4 + $0x28] sm:$0xf]
        %v275 = vld [vmem:[#allocation4 + $0x2c] sm:$0xf]
        %v276 = vld [vmem:[#allocation4 + $0x30] sm:$0xf]
        %v277 = vld [vmem:[#allocation4 + $0x34] sm:$0xf]
        %v278 = vld [vmem:[#allocation4 + $0x38] sm:$0xf]
        %v279 = vld [vmem:[#allocation4 + $0x3c] sm:$0xf]
        %v280 = vld [vmem:[%s241 + $0x40] sm:$0x1]
        %s281 = scalar_lea.vmem [#allocation4], 64
        %v282 = vld [vmem:[%s281] sm:$0xf]
        %v283 = vld [vmem:[%s281 + $0x4] sm:$0xf]
        %v284 = vld [vmem:[%s281 + $0x8] sm:$0xf]
        %v285 = vld [vmem:[%s281 + $0xc] sm:$0xf]
        %v286 = vld [vmem:[%s281 + $0x10] sm:$0xf]
        %v287 = vld [vmem:[%s281 + $0x14] sm:$0xf]
        %v288 = vld [vmem:[%s281 + $0x18] sm:$0xf]
        %v289 = vld [vmem:[%s281 + $0x1c] sm:$0xf]
        %v290 = vld [vmem:[%s281 + $0x20] sm:$0xf]
        %v291 = vld [vmem:[%s281 + $0x24] sm:$0xf]
        %v292 = vld [vmem:[%s281 + $0x28] sm:$0xf]
        %v293 = vld [vmem:[%s281 + $0x2c] sm:$0xf]
        %v294 = vld [vmem:[%s281 + $0x30] sm:$0xf]
        %v295 = vld [vmem:[%s281 + $0x34] sm:$0xf]
        %v296 = vld [vmem:[%s281 + $0x38] sm:$0xf]
        %v297 = vld [vmem:[%s281 + $0x3c] sm:$0xf]
        %v315 = vunpack.c.l.b16 %v248
        %v316 = vunpack.c.l.b16 %v249
        %v317 = vunpack.c.l.b16 %v250
        %v318 = vunpack.c.l.b16 %v251
        %v319 = vunpack.c.l.b16 %v252
        %v320 = vunpack.c.l.b16 %v253
        %v321 = vunpack.c.l.b16 %v254
        %v322 = vunpack.c.l.b16 %v255
        %v323 = vunpack.c.l.b16 %v256
        %v324 = vunpack.c.l.b16 %v257
        %v325 = vunpack.c.l.b16 %v258
        %v326 = vunpack.c.l.b16 %v259
        %v327 = vunpack.c.l.b16 %v260
        %v328 = vunpack.c.l.b16 %v261
        %v329 = vunpack.c.l.b16 %v262
        %v330 = vunpack.c.l.b16 %v263
        %v331 = vunpack.c.l.b16 %v280
        %v332 = vpack.c.b16 %v316, %v315
        %v333 = vpack.c.b16 %v318, %v317
        %v334 = vpack.c.b16 %v320, %v319
        %v335 = vpack.c.b16 %v322, %v321
        %v336 = vpack.c.b16 %v324, %v323
        %v337 = vpack.c.b16 %v326, %v325
        %v338 = vpack.c.b16 %v328, %v327
        %v339 = vpack.c.b16 %v330, %v329
        %v340 = vpack.c.b16 %v331, %v331
        %vm341 = vsmask.f32 7424
        %v343 = vshrl.u32 %v332, 16
        %v345 = vshll.u32 %v332, 16
        %v347 = vrot.slane %v345, 1
        %v348 = vor.u32 %v343, %v347
        %v350 = vshll.u32 %v333, 16
        %v352 = vrot.slane %v350, 1
        %v353 = vsel %vm341, %v348, %v352
        %v354 = vshrl.u32 %v333, 16
        %v356 = vor.u32 %v354, %v352
        %v358 = vshll.u32 %v334, 16
        %v360 = vrot.slane %v358, 1
        %v361 = vsel %vm341, %v356, %v360
        %v362 = vshrl.u32 %v334, 16
        %v364 = vor.u32 %v362, %v360
        %v366 = vshll.u32 %v335, 16
        %v368 = vrot.slane %v366, 1
        %v369 = vsel %vm341, %v364, %v368
        %v370 = vshrl.u32 %v335, 16
        %v372 = vor.u32 %v370, %v368
        %v374 = vshll.u32 %v336, 16
        %v376 = vrot.slane %v374, 1
        %v377 = vsel %vm341, %v372, %v376
        %v378 = vshrl.u32 %v336, 16
        %v380 = vor.u32 %v378, %v376
        %v382 = vshll.u32 %v337, 16
        %v384 = vrot.slane %v382, 1
        %v385 = vsel %vm341, %v380, %v384
        %v386 = vshrl.u32 %v337, 16
        %v388 = vor.u32 %v386, %v384
        %v390 = vshll.u32 %v338, 16
        %v392 = vrot.slane %v390, 1
        %v393 = vsel %vm341, %v388, %v392
        %v394 = vshrl.u32 %v338, 16
        %v396 = vor.u32 %v394, %v392
        %v398 = vshll.u32 %v339, 16
        %v400 = vrot.slane %v398, 1
        %v401 = vsel %vm341, %v396, %v400
        %v402 = vshrl.u32 %v339, 16
        %v404 = vor.u32 %v402, %v400
        %v406 = vshll.u32 %v340, 16
        %v408 = vrot.slane %v406, 1
        %v409 = vsel %vm341, %v404, %v408
        %v434 = vunpack.c.l.b16 %v282
        %v435 = vunpack.c.l.b16 %v283
        %v436 = vunpack.c.l.b16 %v284
        %v437 = vunpack.c.l.b16 %v285
        %v438 = vunpack.c.l.b16 %v286
        %v439 = vunpack.c.l.b16 %v287
        %v440 = vunpack.c.l.b16 %v288
        %v441 = vunpack.c.l.b16 %v289
        %v442 = vunpack.c.l.b16 %v290
        %v443 = vunpack.c.l.b16 %v291
        %v444 = vunpack.c.l.b16 %v292
        %v445 = vunpack.c.l.b16 %v293
        %v446 = vunpack.c.l.b16 %v294
        %v447 = vunpack.c.l.b16 %v295
        %v448 = vunpack.c.l.b16 %v296
        %v449 = vunpack.c.l.b16 %v297
        %v450 = vpack.c.b16 %v435, %v434
        %v451 = vpack.c.b16 %v437, %v436
        %v452 = vpack.c.b16 %v439, %v438
        %v453 = vpack.c.b16 %v441, %v440
        %v454 = vpack.c.b16 %v443, %v442
        %v455 = vpack.c.b16 %v445, %v444
        %v456 = vpack.c.b16 %v447, %v446
        %v457 = vpack.c.b16 %v449, %v448
        %466 = vmatprep.subr.bf16.mxu0 0
        %467 = vmatpush1.bf16.msra.mxu0 %v450
        %468 = vmatprep.subr.bf16.mxu0 0
        %469 = vmatpush1.bf16.msra.mxu0 %v451
        %470 = vmatprep.subr.bf16.mxu0 0
        %471 = vmatpush1.bf16.msra.mxu0 %v452
        %472 = vmatprep.subr.bf16.mxu0 0
        %473 = vmatpush1.bf16.msra.mxu0 %v453
        %474 = vmatprep.subr.bf16.mxu0 0
        %475 = vmatpush1.bf16.msra.mxu0 %v454
        %476 = vmatprep.subr.bf16.mxu0 0
        %477 = vmatpush1.bf16.msra.mxu0 %v455
        %478 = vmatprep.subr.bf16.mxu0 0
        %479 = vmatpush1.bf16.msra.mxu0 %v456
        %480 = vmatprep.subr.bf16.mxu0 0
        %481 = vmatpush1.bf16.msra.mxu0 %v457
        %482 = vmatprep.subr.bf16.mxu0 0
        %483 = vmatpush1.bf16.msra.mxu0 0
        %484 = vmatprep.subr.bf16.mxu0 0
        %485 = vmatpush1.bf16.msra.mxu0 0
        %486 = vmatprep.subr.bf16.mxu0 0
        %487 = vmatpush1.bf16.msra.mxu0 0
        %488 = vmatprep.subr.bf16.mxu0 0
        %489 = vmatpush1.bf16.msra.mxu0 0
        %490 = vmatprep.subr.bf16.mxu0 0
        %491 = vmatpush1.bf16.msra.mxu0 0
        %492 = vmatprep.subr.bf16.mxu0 0
        %493 = vmatpush1.bf16.msra.mxu0 0
        %494 = vmatprep.subr.bf16.mxu0 0
        %495 = vmatpush1.bf16.msra.mxu0 0
        %496 = vmatprep.subr.bf16.mxu0 0
        %497 = vmatpush1.bf16.msra.mxu0 0
        %498 = vmatprep.mubr.bf16.mxu0 0
        %499 = vmatmul.mubr.bf16.gmra.mrb[0].mxu0 %v353
        %v500 = vpop.f32.mrb[0].mxu0
        %v501 = vadd.f32 0.0, %v500
        %v502 = vpop.f32.mrb[0].mxu0
        %v503 = vpop.f32.mrb[0].mxu0
        %v504 = vadd.f32 0.0, %v503
        %v505 = vpop.f32.mrb[0].mxu0
        %506 = vmatprep.mubr.bf16.mxu0 0
        %507 = vmatmul.mubr.bf16.gmra.mrb[0].mxu0 %v361
        %v508 = vpop.f32.mrb[0].mxu0
        %v509 = vadd.f32 0.0, %v508
        %v510 = vpop.f32.mrb[0].mxu0
        %v511 = vpop.f32.mrb[0].mxu0
        %v512 = vadd.f32 0.0, %v511
        %v513 = vpop.f32.mrb[0].mxu0
        %514 = vmatprep.mubr.bf16.mxu0 0
        %515 = vmatmul.mubr.bf16.gmra.mrb[0].mxu0 %v369
        %v516 = vpop.f32.mrb[0].mxu0
        %v517 = vadd.f32 0.0, %v516
        %v518 = vpop.f32.mrb[0].mxu0
        %v519 = vpop.f32.mrb[0].mxu0
        %v520 = vadd.f32 0.0, %v519
        %v521 = vpop.f32.mrb[0].mxu0
        %522 = vmatprep.mubr.bf16.mxu0 0
        %523 = vmatmul.mubr.bf16.gmra.mrb[0].mxu0 %v377
        %v524 = vpop.f32.mrb[0].mxu0
        %v525 = vadd.f32 0.0, %v524
        %v526 = vpop.f32.mrb[0].mxu0
        %v527 = vpop.f32.mrb[0].mxu0
        %v528 = vadd.f32 0.0, %v527
        %v529 = vpop.f32.mrb[0].mxu0
        %530 = vmatprep.mubr.bf16.mxu0 0
        %531 = vmatmul.mubr.bf16.gmra.mrb[0].mxu0 %v385
        %v532 = vpop.f32.mrb[0].mxu0
        %v533 = vadd.f32 0.0, %v532
        %v534 = vpop.f32.mrb[0].mxu0
        %v535 = vpop.f32.mrb[0].mxu0
        %v536 = vadd.f32 0.0, %v535
        %v537 = vpop.f32.mrb[0].mxu0
        %538 = vmatprep.mubr.bf16.mxu0 0
        %539 = vmatmul.mubr.bf16.gmra.mrb[0].mxu0 %v393
        %v540 = vpop.f32.mrb[0].mxu0
        %v541 = vadd.f32 0.0, %v540
        %v542 = vpop.f32.mrb[0].mxu0
        %v543 = vpop.f32.mrb[0].mxu0
        %v544 = vadd.f32 0.0, %v543
        %v545 = vpop.f32.mrb[0].mxu0
        %546 = vmatprep.mubr.bf16.mxu0 0
        %547 = vmatmul.mubr.bf16.gmra.mrb[0].mxu0 %v401
        %v548 = vpop.f32.mrb[0].mxu0
        %v549 = vadd.f32 0.0, %v548
        %v550 = vpop.f32.mrb[0].mxu0
        %v551 = vpop.f32.mrb[0].mxu0
        %v552 = vadd.f32 0.0, %v551
        %v553 = vpop.f32.mrb[0].mxu0
        %554 = vmatprep.mubr.bf16.mxu0 0
        %555 = vmatmul.mubr.bf16.gmra.mrb[0].mxu0 %v409
        %v556 = vpop.f32.mrb[0].mxu0
        %v557 = vadd.f32 0.0, %v556
        %v558 = vpop.f32.mrb[0].mxu0
        %v559 = vpop.f32.mrb[0].mxu0
        %v560 = vadd.f32 0.0, %v559
        %v561 = vpop.f32.mrb[0].mxu0
        %562 = vdwg.mxu0
        %v587 = vunpack.c.l.b16 %v264
        %v588 = vunpack.c.l.b16 %v265
        %v589 = vunpack.c.l.b16 %v266
        %v590 = vunpack.c.l.b16 %v267
        %v591 = vunpack.c.l.b16 %v268
        %v592 = vunpack.c.l.b16 %v269
        %v593 = vunpack.c.l.b16 %v270
        %v594 = vunpack.c.l.b16 %v271
        %v595 = vunpack.c.l.b16 %v272
        %v596 = vunpack.c.l.b16 %v273
        %v597 = vunpack.c.l.b16 %v274
        %v598 = vunpack.c.l.b16 %v275
        %v599 = vunpack.c.l.b16 %v276
        %v600 = vunpack.c.l.b16 %v277
        %v601 = vunpack.c.l.b16 %v278
        %v602 = vunpack.c.l.b16 %v279
        %v603 = vpack.c.b16 %v588, %v587
        %v604 = vpack.c.b16 %v590, %v589
        %v605 = vpack.c.b16 %v592, %v591
        %v606 = vpack.c.b16 %v594, %v593
        %v607 = vpack.c.b16 %v596, %v595
        %v608 = vpack.c.b16 %v598, %v597
        %v609 = vpack.c.b16 %v600, %v599
        %v610 = vpack.c.b16 %v602, %v601
        %619 = vmatprep.subr.bf16.mxu0 0
        %620 = vmatpush1.bf16.msra.mxu0 %v603
        %621 = vmatprep.subr.bf16.mxu0 0
        %622 = vmatpush1.bf16.msra.mxu0 %v604
        %623 = vmatprep.subr.bf16.mxu0 0
        %624 = vmatpush1.bf16.msra.mxu0 %v605
        %625 = vmatprep.subr.bf16.mxu0 0
        %626 = vmatpush1.bf16.msra.mxu0 %v606
        %627 = vmatprep.subr.bf16.mxu0 0
        %628 = vmatpush1.bf16.msra.mxu0 %v607
        %629 = vmatprep.subr.bf16.mxu0 0
        %630 = vmatpush1.bf16.msra.mxu0 %v608
        %631 = vmatprep.subr.bf16.mxu0 0
        %632 = vmatpush1.bf16.msra.mxu0 %v609
        %633 = vmatprep.subr.bf16.mxu0 0
        %634 = vmatpush1.bf16.msra.mxu0 %v610
        %635 = vmatprep.subr.bf16.mxu0 0
        %636 = vmatpush1.bf16.msra.mxu0 0
        %637 = vmatprep.subr.bf16.mxu0 0
        %638 = vmatpush1.bf16.msra.mxu0 0
        %639 = vmatprep.subr.bf16.mxu0 0
        %640 = vmatpush1.bf16.msra.mxu0 0
        %641 = vmatprep.subr.bf16.mxu0 0
        %642 = vmatpush1.bf16.msra.mxu0 0
        %643 = vmatprep.subr.bf16.mxu0 0
        %644 = vmatpush1.bf16.msra.mxu0 0
        %645 = vmatprep.subr.bf16.mxu0 0
        %646 = vmatpush1.bf16.msra.mxu0 0
        %647 = vmatprep.subr.bf16.mxu0 0
        %648 = vmatpush1.bf16.msra.mxu0 0
        %649 = vmatprep.subr.bf16.mxu0 0
        %650 = vmatpush1.bf16.msra.mxu0 0
        %651 = vmatprep.mubr.bf16.mxu0 0
        %652 = vmatmul.mubr.bf16.gmra.mrb[0].mxu0 %v332
        %v653 = vpop.f32.mrb[0].mxu0
        %v654 = vadd.f32 %v501, %v653
        %v655 = vpop.f32.mrb[0].mxu0
        %v656 = vpop.f32.mrb[0].mxu0
        %v657 = vadd.f32 %v504, %v656
        %v658 = vpop.f32.mrb[0].mxu0
        %659 = vmatprep.mubr.bf16.mxu0 0
        %660 = vmatmul.mubr.bf16.gmra.mrb[0].mxu0 %v333
        %v661 = vpop.f32.mrb[0].mxu0
        %v662 = vadd.f32 %v509, %v661
        %v663 = vpop.f32.mrb[0].mxu0
        %v664 = vpop.f32.mrb[0].mxu0
        %v665 = vadd.f32 %v512, %v664
        %v666 = vpop.f32.mrb[0].mxu0
        %667 = vmatprep.mubr.bf16.mxu0 0
        %668 = vmatmul.mubr.bf16.gmra.mrb[0].mxu0 %v334
        %v669 = vpop.f32.mrb[0].mxu0
        %v670 = vadd.f32 %v517, %v669
        %v671 = vpop.f32.mrb[0].mxu0
        %v672 = vpop.f32.mrb[0].mxu0
        %v673 = vadd.f32 %v520, %v672
        %v674 = vpop.f32.mrb[0].mxu0
        %675 = vmatprep.mubr.bf16.mxu0 0
        %676 = vmatmul.mubr.bf16.gmra.mrb[0].mxu0 %v335
        %v677 = vpop.f32.mrb[0].mxu0
        %v678 = vadd.f32 %v525, %v677
        %v679 = vpop.f32.mrb[0].mxu0
        %v680 = vpop.f32.mrb[0].mxu0
        %v681 = vadd.f32 %v528, %v680
        %v682 = vpop.f32.mrb[0].mxu0
        %683 = vmatprep.mubr.bf16.mxu0 0
        %684 = vmatmul.mubr.bf16.gmra.mrb[0].mxu0 %v336
        %v685 = vpop.f32.mrb[0].mxu0
        %v686 = vadd.f32 %v533, %v685
        %v687 = vpop.f32.mrb[0].mxu0
        %v688 = vpop.f32.mrb[0].mxu0
        %v689 = vadd.f32 %v536, %v688
        %v690 = vpop.f32.mrb[0].mxu0
        %691 = vmatprep.mubr.bf16.mxu0 0
        %692 = vmatmul.mubr.bf16.gmra.mrb[0].mxu0 %v337
        %v693 = vpop.f32.mrb[0].mxu0
        %v694 = vadd.f32 %v541, %v693
        %v695 = vpop.f32.mrb[0].mxu0
        %v696 = vpop.f32.mrb[0].mxu0
        %v697 = vadd.f32 %v544, %v696
        %v698 = vpop.f32.mrb[0].mxu0
        %699 = vmatprep.mubr.bf16.mxu0 0
        %700 = vmatmul.mubr.bf16.gmra.mrb[0].mxu0 %v338
        %v701 = vpop.f32.mrb[0].mxu0
        %v702 = vadd.f32 %v549, %v701
        %v703 = vpop.f32.mrb[0].mxu0
        %v704 = vpop.f32.mrb[0].mxu0
        %v705 = vadd.f32 %v552, %v704
        %v706 = vpop.f32.mrb[0].mxu0
        %707 = vmatprep.mubr.bf16.mxu0 0
        %708 = vmatmul.mubr.bf16.gmra.mrb[0].mxu0 %v339
        %v709 = vpop.f32.mrb[0].mxu0
        %v710 = vadd.f32 %v557, %v709
        %v711 = vpop.f32.mrb[0].mxu0
        %v712 = vpop.f32.mrb[0].mxu0
        %v713 = vadd.f32 %v560, %v712
        %v714 = vpop.f32.mrb[0].mxu0
        %715 = vdwg.mxu0
        %v716 = vld [vmem:[%s241] sm:$0xe]
        %s717 = scalar_lea.vmem [#allocation4], 128
        %v718 = vld [vmem:[%s717] sm:$0xf]
        %v719 = vld [vmem:[%s717 + $0x4] sm:$0xf]
        %v720 = vld [vmem:[%s717 + $0x8] sm:$0xf]
        %v721 = vld [vmem:[%s717 + $0xc] sm:$0xf]
        %v722 = vld [vmem:[%s717 + $0x10] sm:$0xf]
        %v723 = vld [vmem:[%s717 + $0x14] sm:$0xf]
        %v724 = vld [vmem:[%s717 + $0x18] sm:$0xf]
        %v725 = vld [vmem:[%s717 + $0x1c] sm:$0xf]
        %v726 = vld [vmem:[%s717 + $0x20] sm:$0xf]
        %v727 = vld [vmem:[%s717 + $0x24] sm:$0xf]
        %v728 = vld [vmem:[%s717 + $0x28] sm:$0xf]
        %v729 = vld [vmem:[%s717 + $0x2c] sm:$0xf]
        %v730 = vld [vmem:[%s717 + $0x30] sm:$0xf]
        %v731 = vld [vmem:[%s717 + $0x34] sm:$0xf]
        %v732 = vld [vmem:[%s717 + $0x38] sm:$0xf]
        %v733 = vld [vmem:[%s717 + $0x3c] sm:$0xf]
        %v735 = vunpack.c.l.b16 %v716
        %v736 = vpack.c.b16 %v316, %v735
        %vm737 = vcmask 1046528
        %v738 = vrot.slane %v736, 1
        %v739 = vrot.slane %v333, 1
        %v740 = vsel %vm737, %v738, %v739
        %v741 = vrot.slane %v334, 1
        %v742 = vsel %vm737, %v739, %v741
        %v743 = vrot.slane %v335, 1
        %v744 = vsel %vm737, %v741, %v743
        %v745 = vrot.slane %v336, 1
        %v746 = vsel %vm737, %v743, %v745
        %v747 = vrot.slane %v337, 1
        %v748 = vsel %vm737, %v745, %v747
        %v749 = vrot.slane %v338, 1
        %v750 = vsel %vm737, %v747, %v749
        %v751 = vrot.slane %v339, 1
        %v752 = vsel %vm737, %v749, %v751
        %v753 = vrot.slane %v340, 1
        %v754 = vsel %vm737, %v751, %v753
        %v779 = vunpack.c.l.b16 %v718
        %v780 = vunpack.c.l.b16 %v719
        %v781 = vunpack.c.l.b16 %v720
        %v782 = vunpack.c.l.b16 %v721
        %v783 = vunpack.c.l.b16 %v722
        %v784 = vunpack.c.l.b16 %v723
        %v785 = vunpack.c.l.b16 %v724
        %v786 = vunpack.c.l.b16 %v725
        %v787 = vunpack.c.l.b16 %v726
        %v788 = vunpack.c.l.b16 %v727
        %v789 = vunpack.c.l.b16 %v728
        %v790 = vunpack.c.l.b16 %v729
        %v791 = vunpack.c.l.b16 %v730
        %v792 = vunpack.c.l.b16 %v731
        %v793 = vunpack.c.l.b16 %v732
        %v794 = vunpack.c.l.b16 %v733
        %v795 = vpack.c.b16 %v780, %v779
        %v796 = vpack.c.b16 %v782, %v781
        %v797 = vpack.c.b16 %v784, %v783
        %v798 = vpack.c.b16 %v786, %v785
        %v799 = vpack.c.b16 %v788, %v787
        %v800 = vpack.c.b16 %v790, %v789
        %v801 = vpack.c.b16 %v792, %v791
        %v802 = vpack.c.b16 %v794, %v793
        %811 = vmatprep.subr.bf16.mxu0 0
        %812 = vmatpush1.bf16.msra.mxu0 %v795
        %813 = vmatprep.subr.bf16.mxu0 0
        %814 = vmatpush1.bf16.msra.mxu0 %v796
        %815 = vmatprep.subr.bf16.mxu0 0
        %816 = vmatpush1.bf16.msra.mxu0 %v797
        %817 = vmatprep.subr.bf16.mxu0 0
        %818 = vmatpush1.bf16.msra.mxu0 %v798
        %819 = vmatprep.subr.bf16.mxu0 0
        %820 = vmatpush1.bf16.msra.mxu0 %v799
        %821 = vmatprep.subr.bf16.mxu0 0
        %822 = vmatpush1.bf16.msra.mxu0 %v800
        %823 = vmatprep.subr.bf16.mxu0 0
        %824 = vmatpush1.bf16.msra.mxu0 %v801
        %825 = vmatprep.subr.bf16.mxu0 0
        %826 = vmatpush1.bf16.msra.mxu0 %v802
        %827 = vmatprep.subr.bf16.mxu0 0
        %828 = vmatpush1.bf16.msra.mxu0 0
        %829 = vmatprep.subr.bf16.mxu0 0
        %830 = vmatpush1.bf16.msra.mxu0 0
        %831 = vmatprep.subr.bf16.mxu0 0
        %832 = vmatpush1.bf16.msra.mxu0 0
        %833 = vmatprep.subr.bf16.mxu0 0
        %834 = vmatpush1.bf16.msra.mxu0 0
        %835 = vmatprep.subr.bf16.mxu0 0
        %836 = vmatpush1.bf16.msra.mxu0 0
        %837 = vmatprep.subr.bf16.mxu0 0
        %838 = vmatpush1.bf16.msra.mxu0 0
        %839 = vmatprep.subr.bf16.mxu0 0
        %840 = vmatpush1.bf16.msra.mxu0 0
        %841 = vmatprep.subr.bf16.mxu0 0
        %842 = vmatpush1.bf16.msra.mxu0 0
        %843 = vmatprep.mubr.bf16.mxu0 0
        %844 = vmatmul.mubr.bf16.gmra.mrb[0].mxu0 %v740
        %v845 = vpop.f32.mrb[0].mxu0
        %v846 = vadd.f32 0.0, %v845
        %v847 = vpop.f32.mrb[0].mxu0
        %v848 = vpop.f32.mrb[0].mxu0
        %v849 = vadd.f32 0.0, %v848
        %v850 = vpop.f32.mrb[0].mxu0
        %851 = vmatprep.mubr.bf16.mxu0 0
        %852 = vmatmul.mubr.bf16.gmra.mrb[0].mxu0 %v742
        %v853 = vpop.f32.mrb[0].mxu0
        %v854 = vadd.f32 0.0, %v853
        %v855 = vpop.f32.mrb[0].mxu0
        %v856 = vpop.f32.mrb[0].mxu0
        %v857 = vadd.f32 0.0, %v856
        %v858 = vpop.f32.mrb[0].mxu0
        %859 = vmatprep.mubr.bf16.mxu0 0
        %860 = vmatmul.mubr.bf16.gmra.mrb[0].mxu0 %v744
        %v861 = vpop.f32.mrb[0].mxu0
        %v862 = vadd.f32 0.0, %v861
        %v863 = vpop.f32.mrb[0].mxu0
        %v864 = vpop.f32.mrb[0].mxu0
        %v865 = vadd.f32 0.0, %v864
        %v866 = vpop.f32.mrb[0].mxu0
        %867 = vmatprep.mubr.bf16.mxu0 0
        %868 = vmatmul.mubr.bf16.gmra.mrb[0].mxu0 %v746
        %v869 = vpop.f32.mrb[0].mxu0
        %v870 = vadd.f32 0.0, %v869
        %v871 = vpop.f32.mrb[0].mxu0
        %v872 = vpop.f32.mrb[0].mxu0
        %v873 = vadd.f32 0.0, %v872
        %v874 = vpop.f32.mrb[0].mxu0
        %875 = vmatprep.mubr.bf16.mxu0 0
        %876 = vmatmul.mubr.bf16.gmra.mrb[0].mxu0 %v748
        %v877 = vpop.f32.mrb[0].mxu0
        %v878 = vadd.f32 0.0, %v877
        %v879 = vpop.f32.mrb[0].mxu0
        %v880 = vpop.f32.mrb[0].mxu0
        %v881 = vadd.f32 0.0, %v880
        %v882 = vpop.f32.mrb[0].mxu0
        %883 = vmatprep.mubr.bf16.mxu0 0
        %884 = vmatmul.mubr.bf16.gmra.mrb[0].mxu0 %v750
        %v885 = vpop.f32.mrb[0].mxu0
        %v886 = vadd.f32 0.0, %v885
        %v887 = vpop.f32.mrb[0].mxu0
        %v888 = vpop.f32.mrb[0].mxu0
        %v889 = vadd.f32 0.0, %v888
        %v890 = vpop.f32.mrb[0].mxu0
        %891 = vmatprep.mubr.bf16.mxu0 0
        %892 = vmatmul.mubr.bf16.gmra.mrb[0].mxu0 %v752
        %v893 = vpop.f32.mrb[0].mxu0
        %v894 = vadd.f32 0.0, %v893
        %v895 = vpop.f32.mrb[0].mxu0
        %v896 = vpop.f32.mrb[0].mxu0
        %v897 = vadd.f32 0.0, %v896
        %v898 = vpop.f32.mrb[0].mxu0
        %899 = vmatprep.mubr.bf16.mxu0 0
        %900 = vmatmul.mubr.bf16.gmra.mrb[0].mxu0 %v754
        %v901 = vpop.f32.mrb[0].mxu0
        %v902 = vadd.f32 0.0, %v901
        %v903 = vpop.f32.mrb[0].mxu0
        %v904 = vpop.f32.mrb[0].mxu0
        %v905 = vadd.f32 0.0, %v904
        %v906 = vpop.f32.mrb[0].mxu0
        %907 = vdwg.mxu0
        %v908 = vadd.f32 %v654, %v846
        %v909 = vadd.f32 %v657, %v849
        %v910 = vadd.f32 %v662, %v854
        %v911 = vadd.f32 %v665, %v857
        %v912 = vadd.f32 %v670, %v862
        %v913 = vadd.f32 %v673, %v865
        %v914 = vadd.f32 %v678, %v870
        %v915 = vadd.f32 %v681, %v873
        %v916 = vadd.f32 %v686, %v878
        %v917 = vadd.f32 %v689, %v881
        %v918 = vadd.f32 %v694, %v886
        %v919 = vadd.f32 %v697, %v889
        %v920 = vadd.f32 %v702, %v894
        %v921 = vadd.f32 %v705, %v897
        %v922 = vadd.f32 %v710, %v902
        %v923 = vadd.f32 %v713, %v905
        %v924 = vld [vmem:[%s241 + $0x8] sm:$0xe]
        %v925 = vld [vmem:[%s241 + $0xc] sm:$0xf]
        %v926 = vld [vmem:[%s241 + $0x10] sm:$0xf]
        %v927 = vld [vmem:[%s241 + $0x14] sm:$0xf]
        %v928 = vld [vmem:[%s241 + $0x18] sm:$0xf]
        %v929 = vld [vmem:[%s241 + $0x1c] sm:$0xf]
        %v930 = vld [vmem:[%s241 + $0x20] sm:$0xf]
        %v931 = vld [vmem:[%s241 + $0x24] sm:$0xf]
        %v932 = vld [vmem:[%s241 + $0x28] sm:$0xf]
        %v933 = vld [vmem:[%s241 + $0x2c] sm:$0xf]
        %v934 = vld [vmem:[%s241 + $0x30] sm:$0xf]
        %v935 = vld [vmem:[%s241 + $0x34] sm:$0xf]
        %v936 = vld [vmem:[%s241 + $0x38] sm:$0xf]
        %v937 = vld [vmem:[%s241 + $0x3c] sm:$0xf]
        %v938 = vld [vmem:[%s241 + $0x40] sm:$0xf]
        %v939 = vld [vmem:[%s241 + $0x44] sm:$0xf]
        %v940 = vld [vmem:[%s241 + $0x48] sm:$0x1]
        %s941 = scalar_lea.vmem [#allocation4], 192
        %v942 = vld [vmem:[%s941] sm:$0xf]
        %v943 = vld [vmem:[%s941 + $0x4] sm:$0xf]
        %v944 = vld [vmem:[%s941 + $0x8] sm:$0xf]
        %v945 = vld [vmem:[%s941 + $0xc] sm:$0xf]
        %v946 = vld [vmem:[%s941 + $0x10] sm:$0xf]
        %v947 = vld [vmem:[%s941 + $0x14] sm:$0xf]
        %v948 = vld [vmem:[%s941 + $0x18] sm:$0xf]
        %v949 = vld [vmem:[%s941 + $0x1c] sm:$0xf]
        %v950 = vld [vmem:[%s941 + $0x20] sm:$0xf]
        %v951 = vld [vmem:[%s941 + $0x24] sm:$0xf]
        %v952 = vld [vmem:[%s941 + $0x28] sm:$0xf]
        %v953 = vld [vmem:[%s941 + $0x2c] sm:$0xf]
        %v954 = vld [vmem:[%s941 + $0x30] sm:$0xf]
        %v955 = vld [vmem:[%s941 + $0x34] sm:$0xf]
        %v956 = vld [vmem:[%s941 + $0x38] sm:$0xf]
        %v957 = vld [vmem:[%s941 + $0x3c] sm:$0xf]
        %v975 = vunpack.c.l.b16 %v924
        %v976 = vunpack.c.l.b16 %v925
        %v977 = vunpack.c.l.b16 %v926
        %v978 = vunpack.c.l.b16 %v927
        %v979 = vunpack.c.l.b16 %v928
        %v980 = vunpack.c.l.b16 %v929
        %v981 = vunpack.c.l.b16 %v930
        %v982 = vunpack.c.l.b16 %v931
        %v983 = vunpack.c.l.b16 %v932
        %v984 = vunpack.c.l.b16 %v933
        %v985 = vunpack.c.l.b16 %v934
        %v986 = vunpack.c.l.b16 %v935
        %v987 = vunpack.c.l.b16 %v936
        %v988 = vunpack.c.l.b16 %v937
        %v989 = vunpack.c.l.b16 %v938
        %v990 = vunpack.c.l.b16 %v939
        %v991 = vunpack.c.l.b16 %v940
        %v992 = vpack.c.b16 %v976, %v975
        %v993 = vpack.c.b16 %v978, %v977
        %v994 = vpack.c.b16 %v980, %v979
        %v995 = vpack.c.b16 %v982, %v981
        %v996 = vpack.c.b16 %v984, %v983
        %v997 = vpack.c.b16 %v986, %v985
        %v998 = vpack.c.b16 %v988, %v987
        %v999 = vpack.c.b16 %v990, %v989
        %v1000 = vpack.c.b16 %v991, %v991
        %v1001 = vrot.slane %v992, 1
        %v1002 = vrot.slane %v993, 1
        %v1003 = vsel %vm737, %v1001, %v1002
        %v1004 = vrot.slane %v994, 1
        %v1005 = vsel %vm737, %v1002, %v1004
        %v1006 = vrot.slane %v995, 1
        %v1007 = vsel %vm737, %v1004, %v1006
        %v1008 = vrot.slane %v996, 1
        %v1009 = vsel %vm737, %v1006, %v1008
        %v1010 = vrot.slane %v997, 1
        %v1011 = vsel %vm737, %v1008, %v1010
        %v1012 = vrot.slane %v998, 1
        %v1013 = vsel %vm737, %v1010, %v1012
        %v1014 = vrot.slane %v999, 1
        %v1015 = vsel %vm737, %v1012, %v1014
        %v1016 = vrot.slane %v1000, 1
        %v1017 = vsel %vm737, %v1014, %v1016
        %v1042 = vunpack.c.l.b16 %v942
        %v1043 = vunpack.c.l.b16 %v943
        %v1044 = vunpack.c.l.b16 %v944
        %v1045 = vunpack.c.l.b16 %v945
        %v1046 = vunpack.c.l.b16 %v946
        %v1047 = vunpack.c.l.b16 %v947
        %v1048 = vunpack.c.l.b16 %v948
        %v1049 = vunpack.c.l.b16 %v949
        %v1050 = vunpack.c.l.b16 %v950
        %v1051 = vunpack.c.l.b16 %v951
        %v1052 = vunpack.c.l.b16 %v952
        %v1053 = vunpack.c.l.b16 %v953
        %v1054 = vunpack.c.l.b16 %v954
        %v1055 = vunpack.c.l.b16 %v955
        %v1056 = vunpack.c.l.b16 %v956
        %v1057 = vunpack.c.l.b16 %v957
        %v1058 = vpack.c.b16 %v1043, %v1042
        %v1059 = vpack.c.b16 %v1045, %v1044
        %v1060 = vpack.c.b16 %v1047, %v1046
        %v1061 = vpack.c.b16 %v1049, %v1048
        %v1062 = vpack.c.b16 %v1051, %v1050
        %v1063 = vpack.c.b16 %v1053, %v1052
        %v1064 = vpack.c.b16 %v1055, %v1054
        %v1065 = vpack.c.b16 %v1057, %v1056
        %1074 = vmatprep.subr.bf16.mxu0 0
        %1075 = vmatpush1.bf16.msra.mxu0 %v1058
        %1076 = vmatprep.subr.bf16.mxu0 0
        %1077 = vmatpush1.bf16.msra.mxu0 %v1059
        %1078 = vmatprep.subr.bf16.mxu0 0
        %1079 = vmatpush1.bf16.msra.mxu0 %v1060
        %1080 = vmatprep.subr.bf16.mxu0 0
        %1081 = vmatpush1.bf16.msra.mxu0 %v1061
        %1082 = vmatprep.subr.bf16.mxu0 0
        %1083 = vmatpush1.bf16.msra.mxu0 %v1062
        %1084 = vmatprep.subr.bf16.mxu0 0
        %1085 = vmatpush1.bf16.msra.mxu0 %v1063
        %1086 = vmatprep.subr.bf16.mxu0 0
        %1087 = vmatpush1.bf16.msra.mxu0 %v1064
        %1088 = vmatprep.subr.bf16.mxu0 0
        %1089 = vmatpush1.bf16.msra.mxu0 %v1065
        %1090 = vmatprep.subr.bf16.mxu0 0
        %1091 = vmatpush1.bf16.msra.mxu0 0
        %1092 = vmatprep.subr.bf16.mxu0 0
        %1093 = vmatpush1.bf16.msra.mxu0 0
        %1094 = vmatprep.subr.bf16.mxu0 0
        %1095 = vmatpush1.bf16.msra.mxu0 0
        %1096 = vmatprep.subr.bf16.mxu0 0
        %1097 = vmatpush1.bf16.msra.mxu0 0
        %1098 = vmatprep.subr.bf16.mxu0 0
        %1099 = vmatpush1.bf16.msra.mxu0 0
        %1100 = vmatprep.subr.bf16.mxu0 0
        %1101 = vmatpush1.bf16.msra.mxu0 0
        %1102 = vmatprep.subr.bf16.mxu0 0
        %1103 = vmatpush1.bf16.msra.mxu0 0
        %1104 = vmatprep.subr.bf16.mxu0 0
        %1105 = vmatpush1.bf16.msra.mxu0 0
        %1106 = vmatprep.mubr.bf16.mxu0 0
        %1107 = vmatmul.mubr.bf16.gmra.mrb[0].mxu0 %v1003
        %v1108 = vpop.f32.mrb[0].mxu0
        %v1109 = vadd.f32 0.0, %v1108
        %v1110 = vpop.f32.mrb[0].mxu0
        %v1111 = vpop.f32.mrb[0].mxu0
        %v1112 = vadd.f32 0.0, %v1111
        %v1113 = vpop.f32.mrb[0].mxu0
        %1114 = vmatprep.mubr.bf16.mxu0 0
        %1115 = vmatmul.mubr.bf16.gmra.mrb[0].mxu0 %v1005
        %v1116 = vpop.f32.mrb[0].mxu0
        %v1117 = vadd.f32 0.0, %v1116
        %v1118 = vpop.f32.mrb[0].mxu0
        %v1119 = vpop.f32.mrb[0].mxu0
        %v1120 = vadd.f32 0.0, %v1119
        %v1121 = vpop.f32.mrb[0].mxu0
        %1122 = vmatprep.mubr.bf16.mxu0 0
        %1123 = vmatmul.mubr.bf16.gmra.mrb[0].mxu0 %v1007
        %v1124 = vpop.f32.mrb[0].mxu0
        %v1125 = vadd.f32 0.0, %v1124
        %v1126 = vpop.f32.mrb[0].mxu0
        %v1127 = vpop.f32.mrb[0].mxu0
        %v1128 = vadd.f32 0.0, %v1127
        %v1129 = vpop.f32.mrb[0].mxu0
        %1130 = vmatprep.mubr.bf16.mxu0 0
        %1131 = vmatmul.mubr.bf16.gmra.mrb[0].mxu0 %v1009
        %v1132 = vpop.f32.mrb[0].mxu0
        %v1133 = vadd.f32 0.0, %v1132
        %v1134 = vpop.f32.mrb[0].mxu0
        %v1135 = vpop.f32.mrb[0].mxu0
        %v1136 = vadd.f32 0.0, %v1135
        %v1137 = vpop.f32.mrb[0].mxu0
        %1138 = vmatprep.mubr.bf16.mxu0 0
        %1139 = vmatmul.mubr.bf16.gmra.mrb[0].mxu0 %v1011
        %v1140 = vpop.f32.mrb[0].mxu0
        %v1141 = vadd.f32 0.0, %v1140
        %v1142 = vpop.f32.mrb[0].mxu0
        %v1143 = vpop.f32.mrb[0].mxu0
        %v1144 = vadd.f32 0.0, %v1143
        %v1145 = vpop.f32.mrb[0].mxu0
        %1146 = vmatprep.mubr.bf16.mxu0 0
        %1147 = vmatmul.mubr.bf16.gmra.mrb[0].mxu0 %v1013
        %v1148 = vpop.f32.mrb[0].mxu0
        %v1149 = vadd.f32 0.0, %v1148
        %v1150 = vpop.f32.mrb[0].mxu0
        %v1151 = vpop.f32.mrb[0].mxu0
        %v1152 = vadd.f32 0.0, %v1151
        %v1153 = vpop.f32.mrb[0].mxu0
        %1154 = vmatprep.mubr.bf16.mxu0 0
        %1155 = vmatmul.mubr.bf16.gmra.mrb[0].mxu0 %v1015
        %v1156 = vpop.f32.mrb[0].mxu0
        %v1157 = vadd.f32 0.0, %v1156
        %v1158 = vpop.f32.mrb[0].mxu0
        %v1159 = vpop.f32.mrb[0].mxu0
        %v1160 = vadd.f32 0.0, %v1159
        %v1161 = vpop.f32.mrb[0].mxu0
        %1162 = vmatprep.mubr.bf16.mxu0 0
        %1163 = vmatmul.mubr.bf16.gmra.mrb[0].mxu0 %v1017
        %v1164 = vpop.f32.mrb[0].mxu0
        %v1165 = vadd.f32 0.0, %v1164
        %v1166 = vpop.f32.mrb[0].mxu0
        %v1167 = vpop.f32.mrb[0].mxu0
        %v1168 = vadd.f32 0.0, %v1167
        %v1169 = vpop.f32.mrb[0].mxu0
        %1170 = vdwg.mxu0
        %v1171 = vadd.f32 %v908, %v1109
        %v1172 = vadd.f32 %v909, %v1112
        %v1173 = vadd.f32 %v910, %v1117
        %v1174 = vadd.f32 %v911, %v1120
        %v1175 = vadd.f32 %v912, %v1125
        %v1176 = vadd.f32 %v913, %v1128
        %v1177 = vadd.f32 %v914, %v1133
        %v1178 = vadd.f32 %v915, %v1136
        %v1179 = vadd.f32 %v916, %v1141
        %v1180 = vadd.f32 %v917, %v1144
        %v1181 = vadd.f32 %v918, %v1149
        %v1182 = vadd.f32 %v919, %v1152
        %v1183 = vadd.f32 %v920, %v1157
        %v1184 = vadd.f32 %v921, %v1160
        %v1185 = vadd.f32 %v922, %v1165
        %v1186 = vadd.f32 %v923, %v1168
        %v1187 = vld [vmem:[%s241 + $0x48] sm:$0x3]
        %s1188 = scalar_lea.vmem [#allocation4], 256
        %v1189 = vld [vmem:[%s1188] sm:$0xf]
        %v1190 = vld [vmem:[%s1188 + $0x4] sm:$0xf]
        %v1191 = vld [vmem:[%s1188 + $0x8] sm:$0xf]
        %v1192 = vld [vmem:[%s1188 + $0xc] sm:$0xf]
        %v1193 = vld [vmem:[%s1188 + $0x10] sm:$0xf]
        %v1194 = vld [vmem:[%s1188 + $0x14] sm:$0xf]
        %v1195 = vld [vmem:[%s1188 + $0x18] sm:$0xf]
        %v1196 = vld [vmem:[%s1188 + $0x1c] sm:$0xf]
        %v1197 = vld [vmem:[%s1188 + $0x20] sm:$0xf]
        %v1198 = vld [vmem:[%s1188 + $0x24] sm:$0xf]
        %v1199 = vld [vmem:[%s1188 + $0x28] sm:$0xf]
        %v1200 = vld [vmem:[%s1188 + $0x2c] sm:$0xf]
        %v1201 = vld [vmem:[%s1188 + $0x30] sm:$0xf]
        %v1202 = vld [vmem:[%s1188 + $0x34] sm:$0xf]
        %v1203 = vld [vmem:[%s1188 + $0x38] sm:$0xf]
        %v1204 = vld [vmem:[%s1188 + $0x3c] sm:$0xf]
        %v1206 = vunpack.c.l.b16 %v1187
        %v1207 = vpack.c.b16 %v1206, %v1206
        %vm1208 = vsmask.f32 6400
        %v1210 = vshrl.u32 %v992, 16
        %v1212 = vrot.slane %v1210, 1
        %v1213 = vshll.u32 %v992, 16
        %v1215 = vrot.slane %v1213, 2
        %v1216 = vor.u32 %v1212, %v1215
        %v1218 = vshrl.u32 %v993, 16
        %v1220 = vrot.slane %v1218, 1
        %v1221 = vshll.u32 %v993, 16
        %v1223 = vrot.slane %v1221, 2
        %v1224 = vor.u32 %v1220, %v1223
        %v1225 = vsel %vm1208, %v1216, %v1224
        %v1227 = vshrl.u32 %v994, 16
        %v1229 = vrot.slane %v1227, 1
        %v1230 = vshll.u32 %v994, 16
        %v1232 = vrot.slane %v1230, 2
        %v1233 = vor.u32 %v1229, %v1232
        %v1234 = vsel %vm1208, %v1224, %v1233
        %v1236 = vshrl.u32 %v995, 16
        %v1238 = vrot.slane %v1236, 1
        %v1239 = vshll.u32 %v995, 16
        %v1241 = vrot.slane %v1239, 2
        %v1242 = vor.u32 %v1238, %v1241
        %v1243 = vsel %vm1208, %v1233, %v1242
        %v1245 = vshrl.u32 %v996, 16
        %v1247 = vrot.slane %v1245, 1
        %v1248 = vshll.u32 %v996, 16
        %v1250 = vrot.slane %v1248, 2
        %v1251 = vor.u32 %v1247, %v1250
        %v1252 = vsel %vm1208, %v1242, %v1251
        %v1254 = vshrl.u32 %v997, 16
        %v1256 = vrot.slane %v1254, 1
        %v1257 = vshll.u32 %v997, 16
        %v1259 = vrot.slane %v1257, 2
        %v1260 = vor.u32 %v1256, %v1259
        %v1261 = vsel %vm1208, %v1251, %v1260
        %v1263 = vshrl.u32 %v998, 16
        %v1265 = vrot.slane %v1263, 1
        %v1266 = vshll.u32 %v998, 16
        %v1268 = vrot.slane %v1266, 2
        %v1269 = vor.u32 %v1265, %v1268
        %v1270 = vsel %vm1208, %v1260, %v1269
        %v1272 = vshrl.u32 %v999, 16
        %v1274 = vrot.slane %v1272, 1
        %v1275 = vshll.u32 %v999, 16
        %v1277 = vrot.slane %v1275, 2
        %v1278 = vor.u32 %v1274, %v1277
        %v1279 = vsel %vm1208, %v1269, %v1278
        %v1281 = vshrl.u32 %v1207, 16
        %v1283 = vrot.slane %v1281, 1
        %v1284 = vshll.u32 %v1207, 16
        %v1286 = vrot.slane %v1284, 2
        %v1287 = vor.u32 %v1283, %v1286
        %v1288 = vsel %vm1208, %v1278, %v1287
        %v1313 = vunpack.c.l.b16 %v1189
        %v1314 = vunpack.c.l.b16 %v1190
        %v1315 = vunpack.c.l.b16 %v1191
        %v1316 = vunpack.c.l.b16 %v1192
        %v1317 = vunpack.c.l.b16 %v1193
        %v1318 = vunpack.c.l.b16 %v1194
        %v1319 = vunpack.c.l.b16 %v1195
        %v1320 = vunpack.c.l.b16 %v1196
        %v1321 = vunpack.c.l.b16 %v1197
        %v1322 = vunpack.c.l.b16 %v1198
        %v1323 = vunpack.c.l.b16 %v1199
        %v1324 = vunpack.c.l.b16 %v1200
        %v1325 = vunpack.c.l.b16 %v1201
        %v1326 = vunpack.c.l.b16 %v1202
        %v1327 = vunpack.c.l.b16 %v1203
        %v1328 = vunpack.c.l.b16 %v1204
        %v1329 = vpack.c.b16 %v1314, %v1313
        %v1330 = vpack.c.b16 %v1316, %v1315
        %v1331 = vpack.c.b16 %v1318, %v1317
        %v1332 = vpack.c.b16 %v1320, %v1319
        %v1333 = vpack.c.b16 %v1322, %v1321
        %v1334 = vpack.c.b16 %v1324, %v1323
        %v1335 = vpack.c.b16 %v1326, %v1325
        %v1336 = vpack.c.b16 %v1328, %v1327
        %1345 = vmatprep.subr.bf16.mxu0 0
        %1346 = vmatpush1.bf16.msra.mxu0 %v1329
        %1347 = vmatprep.subr.bf16.mxu0 0
        %1348 = vmatpush1.bf16.msra.mxu0 %v1330
        %1349 = vmatprep.subr.bf16.mxu0 0
        %1350 = vmatpush1.bf16.msra.mxu0 %v1331
        %1351 = vmatprep.subr.bf16.mxu0 0
        %1352 = vmatpush1.bf16.msra.mxu0 %v1332
        %1353 = vmatprep.subr.bf16.mxu0 0
        %1354 = vmatpush1.bf16.msra.mxu0 %v1333
        %1355 = vmatprep.subr.bf16.mxu0 0
        %1356 = vmatpush1.bf16.msra.mxu0 %v1334
        %1357 = vmatprep.subr.bf16.mxu0 0
        %1358 = vmatpush1.bf16.msra.mxu0 %v1335
        %1359 = vmatprep.subr.bf16.mxu0 0
        %1360 = vmatpush1.bf16.msra.mxu0 %v1336
        %1361 = vmatprep.subr.bf16.mxu0 0
        %1362 = vmatpush1.bf16.msra.mxu0 0
        %1363 = vmatprep.subr.bf16.mxu0 0
        %1364 = vmatpush1.bf16.msra.mxu0 0
        %1365 = vmatprep.subr.bf16.mxu0 0
        %1366 = vmatpush1.bf16.msra.mxu0 0
        %1367 = vmatprep.subr.bf16.mxu0 0
        %1368 = vmatpush1.bf16.msra.mxu0 0
        %1369 = vmatprep.subr.bf16.mxu0 0
        %1370 = vmatpush1.bf16.msra.mxu0 0
        %1371 = vmatprep.subr.bf16.mxu0 0
        %1372 = vmatpush1.bf16.msra.mxu0 0
        %1373 = vmatprep.subr.bf16.mxu0 0
        %1374 = vmatpush1.bf16.msra.mxu0 0
        %1375 = vmatprep.subr.bf16.mxu0 0
        %1376 = vmatpush1.bf16.msra.mxu0 0
        %1377 = vmatprep.mubr.bf16.mxu0 0
        %1378 = vmatmul.mubr.bf16.gmra.mrb[0].mxu0 %v1225
        %v1379 = vpop.f32.mrb[0].mxu0
        %v1380 = vadd.f32 0.0, %v1379
        %v1381 = vpop.f32.mrb[0].mxu0
        %v1382 = vpop.f32.mrb[0].mxu0
        %v1383 = vadd.f32 0.0, %v1382
        %v1384 = vpop.f32.mrb[0].mxu0
        %1385 = vmatprep.mubr.bf16.mxu0 0
        %1386 = vmatmul.mubr.bf16.gmra.mrb[0].mxu0 %v1234
        %v1387 = vpop.f32.mrb[0].mxu0
        %v1388 = vadd.f32 0.0, %v1387
        %v1389 = vpop.f32.mrb[0].mxu0
        %v1390 = vpop.f32.mrb[0].mxu0
        %v1391 = vadd.f32 0.0, %v1390
        %v1392 = vpop.f32.mrb[0].mxu0
        %1393 = vmatprep.mubr.bf16.mxu0 0
        %1394 = vmatmul.mubr.bf16.gmra.mrb[0].mxu0 %v1243
        %v1395 = vpop.f32.mrb[0].mxu0
        %v1396 = vadd.f32 0.0, %v1395
        %v1397 = vpop.f32.mrb[0].mxu0
        %v1398 = vpop.f32.mrb[0].mxu0
        %v1399 = vadd.f32 0.0, %v1398
        %v1400 = vpop.f32.mrb[0].mxu0
        %1401 = vmatprep.mubr.bf16.mxu0 0
        %1402 = vmatmul.mubr.bf16.gmra.mrb[0].mxu0 %v1252
        %v1403 = vpop.f32.mrb[0].mxu0
        %v1404 = vadd.f32 0.0, %v1403
        %v1405 = vpop.f32.mrb[0].mxu0
        %v1406 = vpop.f32.mrb[0].mxu0
        %v1407 = vadd.f32 0.0, %v1406
        %v1408 = vpop.f32.mrb[0].mxu0
        %1409 = vmatprep.mubr.bf16.mxu0 0
        %1410 = vmatmul.mubr.bf16.gmra.mrb[0].mxu0 %v1261
        %v1411 = vpop.f32.mrb[0].mxu0
        %v1412 = vadd.f32 0.0, %v1411
        %v1413 = vpop.f32.mrb[0].mxu0
        %v1414 = vpop.f32.mrb[0].mxu0
        %v1415 = vadd.f32 0.0, %v1414
        %v1416 = vpop.f32.mrb[0].mxu0
        %1417 = vmatprep.mubr.bf16.mxu0 0
        %1418 = vmatmul.mubr.bf16.gmra.mrb[0].mxu0 %v1270
        %v1419 = vpop.f32.mrb[0].mxu0
        %v1420 = vadd.f32 0.0, %v1419
        %v1421 = vpop.f32.mrb[0].mxu0
        %v1422 = vpop.f32.mrb[0].mxu0
        %v1423 = vadd.f32 0.0, %v1422
        %v1424 = vpop.f32.mrb[0].mxu0
        %1425 = vmatprep.mubr.bf16.mxu0 0
        %1426 = vmatmul.mubr.bf16.gmra.mrb[0].mxu0 %v1279
        %v1427 = vpop.f32.mrb[0].mxu0
        %v1428 = vadd.f32 0.0, %v1427
        %v1429 = vpop.f32.mrb[0].mxu0
        %v1430 = vpop.f32.mrb[0].mxu0
        %v1431 = vadd.f32 0.0, %v1430
        %v1432 = vpop.f32.mrb[0].mxu0
        %1433 = vmatprep.mubr.bf16.mxu0 0
        %1434 = vmatmul.mubr.bf16.gmra.mrb[0].mxu0 %v1288
        %v1435 = vpop.f32.mrb[0].mxu0
        %v1436 = vadd.f32 0.0, %v1435
        %v1437 = vpop.f32.mrb[0].mxu0
        %v1438 = vpop.f32.mrb[0].mxu0
        %v1439 = vadd.f32 0.0, %v1438
        %v1440 = vpop.f32.mrb[0].mxu0
        %1441 = vdwg.mxu0
        %v1442 = vadd.f32 %v1171, %v1380
        %v1443 = vadd.f32 %v1172, %v1383
        %v1444 = vadd.f32 %v1173, %v1388
        %v1445 = vadd.f32 %v1174, %v1391
        %v1446 = vadd.f32 %v1175, %v1396
        %v1447 = vadd.f32 %v1176, %v1399
        %v1448 = vadd.f32 %v1177, %v1404
        %v1449 = vadd.f32 %v1178, %v1407
        %v1450 = vadd.f32 %v1179, %v1412
        %v1451 = vadd.f32 %v1180, %v1415
        %v1452 = vadd.f32 %v1181, %v1420
        %v1453 = vadd.f32 %v1182, %v1423
        %v1454 = vadd.f32 %v1183, %v1428
        %v1455 = vadd.f32 %v1184, %v1431
        %v1456 = vadd.f32 %v1185, %v1436
        %v1457 = vadd.f32 %v1186, %v1439
        %v1458 = vld [vmem:[%s241 + $0x8] sm:$0xc]
        %s1459 = scalar_lea.vmem [#allocation4], 320
        %v1460 = vld [vmem:[%s1459] sm:$0xf]
        %v1461 = vld [vmem:[%s1459 + $0x4] sm:$0xf]
        %v1462 = vld [vmem:[%s1459 + $0x8] sm:$0xf]
        %v1463 = vld [vmem:[%s1459 + $0xc] sm:$0xf]
        %v1464 = vld [vmem:[%s1459 + $0x10] sm:$0xf]
        %v1465 = vld [vmem:[%s1459 + $0x14] sm:$0xf]
        %v1466 = vld [vmem:[%s1459 + $0x18] sm:$0xf]
        %v1467 = vld [vmem:[%s1459 + $0x1c] sm:$0xf]
        %v1468 = vld [vmem:[%s1459 + $0x20] sm:$0xf]
        %v1469 = vld [vmem:[%s1459 + $0x24] sm:$0xf]
        %v1470 = vld [vmem:[%s1459 + $0x28] sm:$0xf]
        %v1471 = vld [vmem:[%s1459 + $0x2c] sm:$0xf]
        %v1472 = vld [vmem:[%s1459 + $0x30] sm:$0xf]
        %v1473 = vld [vmem:[%s1459 + $0x34] sm:$0xf]
        %v1474 = vld [vmem:[%s1459 + $0x38] sm:$0xf]
        %v1475 = vld [vmem:[%s1459 + $0x3c] sm:$0xf]
        %v1477 = vunpack.c.l.b16 %v1458
        %v1478 = vpack.c.b16 %v976, %v1477
        %vm1479 = vcmask 1045504
        %v1480 = vrot.slane %v1478, 2
        %v1481 = vrot.slane %v993, 2
        %v1482 = vsel %vm1479, %v1480, %v1481
        %v1483 = vrot.slane %v994, 2
        %v1484 = vsel %vm1479, %v1481, %v1483
        %v1485 = vrot.slane %v995, 2
        %v1486 = vsel %vm1479, %v1483, %v1485
        %v1487 = vrot.slane %v996, 2
        %v1488 = vsel %vm1479, %v1485, %v1487
        %v1489 = vrot.slane %v997, 2
        %v1490 = vsel %vm1479, %v1487, %v1489
        %v1491 = vrot.slane %v998, 2
        %v1492 = vsel %vm1479, %v1489, %v1491
        %v1493 = vrot.slane %v999, 2
        %v1494 = vsel %vm1479, %v1491, %v1493
        %v1495 = vrot.slane %v1207, 2
        %v1496 = vsel %vm1479, %v1493, %v1495
        %v1521 = vunpack.c.l.b16 %v1460
        %v1522 = vunpack.c.l.b16 %v1461
        %v1523 = vunpack.c.l.b16 %v1462
        %v1524 = vunpack.c.l.b16 %v1463
        %v1525 = vunpack.c.l.b16 %v1464
        %v1526 = vunpack.c.l.b16 %v1465
        %v1527 = vunpack.c.l.b16 %v1466
        %v1528 = vunpack.c.l.b16 %v1467
        %v1529 = vunpack.c.l.b16 %v1468
        %v1530 = vunpack.c.l.b16 %v1469
        %v1531 = vunpack.c.l.b16 %v1470
        %v1532 = vunpack.c.l.b16 %v1471
        %v1533 = vunpack.c.l.b16 %v1472
        %v1534 = vunpack.c.l.b16 %v1473
        %v1535 = vunpack.c.l.b16 %v1474
        %v1536 = vunpack.c.l.b16 %v1475
        %v1537 = vpack.c.b16 %v1522, %v1521
        %v1538 = vpack.c.b16 %v1524, %v1523
        %v1539 = vpack.c.b16 %v1526, %v1525
        %v1540 = vpack.c.b16 %v1528, %v1527
        %v1541 = vpack.c.b16 %v1530, %v1529
        %v1542 = vpack.c.b16 %v1532, %v1531
        %v1543 = vpack.c.b16 %v1534, %v1533
        %v1544 = vpack.c.b16 %v1536, %v1535
        %1553 = vmatprep.subr.bf16.mxu0 0
        %1554 = vmatpush1.bf16.msra.mxu0 %v1537
        %1555 = vmatprep.subr.bf16.mxu0 0
        %1556 = vmatpush1.bf16.msra.mxu0 %v1538
        %1557 = vmatprep.subr.bf16.mxu0 0
        %1558 = vmatpush1.bf16.msra.mxu0 %v1539
        %1559 = vmatprep.subr.bf16.mxu0 0
        %1560 = vmatpush1.bf16.msra.mxu0 %v1540
        %1561 = vmatprep.subr.bf16.mxu0 0
        %1562 = vmatpush1.bf16.msra.mxu0 %v1541
        %1563 = vmatprep.subr.bf16.mxu0 0
        %1564 = vmatpush1.bf16.msra.mxu0 %v1542
        %1565 = vmatprep.subr.bf16.mxu0 0
        %1566 = vmatpush1.bf16.msra.mxu0 %v1543
        %1567 = vmatprep.subr.bf16.mxu0 0
        %1568 = vmatpush1.bf16.msra.mxu0 %v1544
        %1569 = vmatprep.subr.bf16.mxu0 0
        %1570 = vmatpush1.bf16.msra.mxu0 0
        %1571 = vmatprep.subr.bf16.mxu0 0
        %1572 = vmatpush1.bf16.msra.mxu0 0
        %1573 = vmatprep.subr.bf16.mxu0 0
        %1574 = vmatpush1.bf16.msra.mxu0 0
        %1575 = vmatprep.subr.bf16.mxu0 0
        %1576 = vmatpush1.bf16.msra.mxu0 0
        %1577 = vmatprep.subr.bf16.mxu0 0
        %1578 = vmatpush1.bf16.msra.mxu0 0
        %1579 = vmatprep.subr.bf16.mxu0 0
        %1580 = vmatpush1.bf16.msra.mxu0 0
        %1581 = vmatprep.subr.bf16.mxu0 0
        %1582 = vmatpush1.bf16.msra.mxu0 0
        %1583 = vmatprep.subr.bf16.mxu0 0
        %1584 = vmatpush1.bf16.msra.mxu0 0
        %1585 = vmatprep.mubr.bf16.mxu0 0
        %1586 = vmatmul.mubr.bf16.gmra.mrb[0].mxu0 %v1482
        %v1587 = vpop.f32.mrb[0].mxu0
        %v1588 = vadd.f32 0.0, %v1587
        %v1589 = vpop.f32.mrb[0].mxu0
        %v1590 = vpop.f32.mrb[0].mxu0
        %v1591 = vadd.f32 0.0, %v1590
        %v1592 = vpop.f32.mrb[0].mxu0
        %1593 = vmatprep.mubr.bf16.mxu0 0
        %1594 = vmatmul.mubr.bf16.gmra.mrb[0].mxu0 %v1484
        %v1595 = vpop.f32.mrb[0].mxu0
        %v1596 = vadd.f32 0.0, %v1595
        %v1597 = vpop.f32.mrb[0].mxu0
        %v1598 = vpop.f32.mrb[0].mxu0
        %v1599 = vadd.f32 0.0, %v1598
        %v1600 = vpop.f32.mrb[0].mxu0
        %1601 = vmatprep.mubr.bf16.mxu0 0
        %1602 = vmatmul.mubr.bf16.gmra.mrb[0].mxu0 %v1486
        %v1603 = vpop.f32.mrb[0].mxu0
        %v1604 = vadd.f32 0.0, %v1603
        %v1605 = vpop.f32.mrb[0].mxu0
        %v1606 = vpop.f32.mrb[0].mxu0
        %v1607 = vadd.f32 0.0, %v1606
        %v1608 = vpop.f32.mrb[0].mxu0
        %1609 = vmatprep.mubr.bf16.mxu0 0
        %1610 = vmatmul.mubr.bf16.gmra.mrb[0].mxu0 %v1488
        %v1611 = vpop.f32.mrb[0].mxu0
        %v1612 = vadd.f32 0.0, %v1611
        %v1613 = vpop.f32.mrb[0].mxu0
        %v1614 = vpop.f32.mrb[0].mxu0
        %v1615 = vadd.f32 0.0, %v1614
        %v1616 = vpop.f32.mrb[0].mxu0
        %1617 = vmatprep.mubr.bf16.mxu0 0
        %1618 = vmatmul.mubr.bf16.gmra.mrb[0].mxu0 %v1490
        %v1619 = vpop.f32.mrb[0].mxu0
        %v1620 = vadd.f32 0.0, %v1619
        %v1621 = vpop.f32.mrb[0].mxu0
        %v1622 = vpop.f32.mrb[0].mxu0
        %v1623 = vadd.f32 0.0, %v1622
        %v1624 = vpop.f32.mrb[0].mxu0
        %1625 = vmatprep.mubr.bf16.mxu0 0
        %1626 = vmatmul.mubr.bf16.gmra.mrb[0].mxu0 %v1492
        %v1627 = vpop.f32.mrb[0].mxu0
        %v1628 = vadd.f32 0.0, %v1627
        %v1629 = vpop.f32.mrb[0].mxu0
        %v1630 = vpop.f32.mrb[0].mxu0
        %v1631 = vadd.f32 0.0, %v1630
        %v1632 = vpop.f32.mrb[0].mxu0
        %1633 = vmatprep.mubr.bf16.mxu0 0
        %1634 = vmatmul.mubr.bf16.gmra.mrb[0].mxu0 %v1494
        %v1635 = vpop.f32.mrb[0].mxu0
        %v1636 = vadd.f32 0.0, %v1635
        %v1637 = vpop.f32.mrb[0].mxu0
        %v1638 = vpop.f32.mrb[0].mxu0
        %v1639 = vadd.f32 0.0, %v1638
        %v1640 = vpop.f32.mrb[0].mxu0
        %1641 = vmatprep.mubr.bf16.mxu0 0
        %1642 = vmatmul.mubr.bf16.gmra.mrb[0].mxu0 %v1496
        %v1643 = vpop.f32.mrb[0].mxu0
        %v1644 = vadd.f32 0.0, %v1643
        %v1645 = vpop.f32.mrb[0].mxu0
        %v1646 = vpop.f32.mrb[0].mxu0
        %v1647 = vadd.f32 0.0, %v1646
        %v1648 = vpop.f32.mrb[0].mxu0
        %1649 = vdwg.mxu0
        %v1650 = vadd.f32 %v1442, %v1588
        %v1651 = vadd.f32 %v1443, %v1591
        %v1652 = vadd.f32 %v1444, %v1596
        %v1653 = vadd.f32 %v1445, %v1599
        %v1654 = vadd.f32 %v1446, %v1604
        %v1655 = vadd.f32 %v1447, %v1607
        %v1656 = vadd.f32 %v1448, %v1612
        %v1657 = vadd.f32 %v1449, %v1615
        %v1658 = vadd.f32 %v1450, %v1620
        %v1659 = vadd.f32 %v1451, %v1623
        %v1660 = vadd.f32 %v1452, %v1628
        %v1661 = vadd.f32 %v1453, %v1631
        %v1662 = vadd.f32 %v1454, %v1636
        %v1663 = vadd.f32 %v1455, %v1639
        %v1664 = vadd.f32 %v1456, %v1644
        %v1665 = vadd.f32 %v1457, %v1647
        %v1666 = vld [vmem:[%s241 + $0x10] sm:$0xc]
        %v1667 = vld [vmem:[%s241 + $0x14] sm:$0xf]
        %v1668 = vld [vmem:[%s241 + $0x18] sm:$0xf]
        %v1669 = vld [vmem:[%s241 + $0x1c] sm:$0xf]
        %v1670 = vld [vmem:[%s241 + $0x20] sm:$0xf]
        %v1671 = vld [vmem:[%s241 + $0x24] sm:$0xf]
        %v1672 = vld [vmem:[%s241 + $0x28] sm:$0xf]
        %v1673 = vld [vmem:[%s241 + $0x2c] sm:$0xf]
        %v1674 = vld [vmem:[%s241 + $0x30] sm:$0xf]
        %v1675 = vld [vmem:[%s241 + $0x34] sm:$0xf]
        %v1676 = vld [vmem:[%s241 + $0x38] sm:$0xf]
        %v1677 = vld [vmem:[%s241 + $0x3c] sm:$0xf]
        %v1678 = vld [vmem:[%s241 + $0x40] sm:$0xf]
        %v1679 = vld [vmem:[%s241 + $0x44] sm:$0xf]
        %v1680 = vld [vmem:[%s241 + $0x48] sm:$0xf]
        %v1681 = vld [vmem:[%s241 + $0x4c] sm:$0xf]
        %v1682 = vld [vmem:[%s241 + $0x50] sm:$0x3]
        %s1683 = scalar_lea.vmem [#allocation4], 384
        %v1684 = vld [vmem:[%s1683] sm:$0xf]
        %v1685 = vld [vmem:[%s1683 + $0x4] sm:$0xf]
        %v1686 = vld [vmem:[%s1683 + $0x8] sm:$0xf]
        %v1687 = vld [vmem:[%s1683 + $0xc] sm:$0xf]
        %v1688 = vld [vmem:[%s1683 + $0x10] sm:$0xf]
        %v1689 = vld [vmem:[%s1683 + $0x14] sm:$0xf]
        %v1690 = vld [vmem:[%s1683 + $0x18] sm:$0xf]
        %v1691 = vld [vmem:[%s1683 + $0x1c] sm:$0xf]
        %v1692 = vld [vmem:[%s1683 + $0x20] sm:$0xf]
        %v1693 = vld [vmem:[%s1683 + $0x24] sm:$0xf]
        %v1694 = vld [vmem:[%s1683 + $0x28] sm:$0xf]
        %v1695 = vld [vmem:[%s1683 + $0x2c] sm:$0xf]
        %v1696 = vld [vmem:[%s1683 + $0x30] sm:$0xf]
        %v1697 = vld [vmem:[%s1683 + $0x34] sm:$0xf]
        %v1698 = vld [vmem:[%s1683 + $0x38] sm:$0xf]
        %v1699 = vld [vmem:[%s1683 + $0x3c] sm:$0xf]
        %v1717 = vunpack.c.l.b16 %v1666
        %v1718 = vunpack.c.l.b16 %v1667
        %v1719 = vunpack.c.l.b16 %v1668
        %v1720 = vunpack.c.l.b16 %v1669
        %v1721 = vunpack.c.l.b16 %v1670
        %v1722 = vunpack.c.l.b16 %v1671
        %v1723 = vunpack.c.l.b16 %v1672
        %v1724 = vunpack.c.l.b16 %v1673
        %v1725 = vunpack.c.l.b16 %v1674
        %v1726 = vunpack.c.l.b16 %v1675
        %v1727 = vunpack.c.l.b16 %v1676
        %v1728 = vunpack.c.l.b16 %v1677
        %v1729 = vunpack.c.l.b16 %v1678
        %v1730 = vunpack.c.l.b16 %v1679
        %v1731 = vunpack.c.l.b16 %v1680
        %v1732 = vunpack.c.l.b16 %v1681
        %v1733 = vunpack.c.l.b16 %v1682
        %v1734 = vpack.c.b16 %v1718, %v1717
        %v1735 = vpack.c.b16 %v1720, %v1719
        %v1736 = vpack.c.b16 %v1722, %v1721
        %v1737 = vpack.c.b16 %v1724, %v1723
        %v1738 = vpack.c.b16 %v1726, %v1725
        %v1739 = vpack.c.b16 %v1728, %v1727
        %v1740 = vpack.c.b16 %v1730, %v1729
        %v1741 = vpack.c.b16 %v1732, %v1731
        %v1742 = vpack.c.b16 %v1733, %v1733
        %v1743 = vrot.slane %v1734, 2
        %v1744 = vrot.slane %v1735, 2
        %v1745 = vsel %vm1479, %v1743, %v1744
        %v1746 = vrot.slane %v1736, 2
        %v1747 = vsel %vm1479, %v1744, %v1746
        %v1748 = vrot.slane %v1737, 2
        %v1749 = vsel %vm1479, %v1746, %v1748
        %v1750 = vrot.slane %v1738, 2
        %v1751 = vsel %vm1479, %v1748, %v1750
        %v1752 = vrot.slane %v1739, 2
        %v1753 = vsel %vm1479, %v1750, %v1752
        %v1754 = vrot.slane %v1740, 2
        %v1755 = vsel %vm1479, %v1752, %v1754
        %v1756 = vrot.slane %v1741, 2
        %v1757 = vsel %vm1479, %v1754, %v1756
        %v1758 = vrot.slane %v1742, 2
        %v1759 = vsel %vm1479, %v1756, %v1758
        %v1784 = vunpack.c.l.b16 %v1684
        %v1785 = vunpack.c.l.b16 %v1685
        %v1786 = vunpack.c.l.b16 %v1686
        %v1787 = vunpack.c.l.b16 %v1687
        %v1788 = vunpack.c.l.b16 %v1688
        %v1789 = vunpack.c.l.b16 %v1689
        %v1790 = vunpack.c.l.b16 %v1690
        %v1791 = vunpack.c.l.b16 %v1691
        %v1792 = vunpack.c.l.b16 %v1692
        %v1793 = vunpack.c.l.b16 %v1693
        %v1794 = vunpack.c.l.b16 %v1694
        %v1795 = vunpack.c.l.b16 %v1695
        %v1796 = vunpack.c.l.b16 %v1696
        %v1797 = vunpack.c.l.b16 %v1697
        %v1798 = vunpack.c.l.b16 %v1698
        %v1799 = vunpack.c.l.b16 %v1699
        %v1800 = vpack.c.b16 %v1785, %v1784
        %v1801 = vpack.c.b16 %v1787, %v1786
        %v1802 = vpack.c.b16 %v1789, %v1788
        %v1803 = vpack.c.b16 %v1791, %v1790
        %v1804 = vpack.c.b16 %v1793, %v1792
        %v1805 = vpack.c.b16 %v1795, %v1794
        %v1806 = vpack.c.b16 %v1797, %v1796
        %v1807 = vpack.c.b16 %v1799, %v1798
        %1816 = vmatprep.subr.bf16.mxu0 0
        %1817 = vmatpush1.bf16.msra.mxu0 %v1800
        %1818 = vmatprep.subr.bf16.mxu0 0
        %1819 = vmatpush1.bf16.msra.mxu0 %v1801
        %1820 = vmatprep.subr.bf16.mxu0 0
        %1821 = vmatpush1.bf16.msra.mxu0 %v1802
        %1822 = vmatprep.subr.bf16.mxu0 0
        %1823 = vmatpush1.bf16.msra.mxu0 %v1803
        %1824 = vmatprep.subr.bf16.mxu0 0
        %1825 = vmatpush1.bf16.msra.mxu0 %v1804
        %1826 = vmatprep.subr.bf16.mxu0 0
        %1827 = vmatpush1.bf16.msra.mxu0 %v1805
        %1828 = vmatprep.subr.bf16.mxu0 0
        %1829 = vmatpush1.bf16.msra.mxu0 %v1806
        %1830 = vmatprep.subr.bf16.mxu0 0
        %1831 = vmatpush1.bf16.msra.mxu0 %v1807
        %1832 = vmatprep.subr.bf16.mxu0 0
        %1833 = vmatpush1.bf16.msra.mxu0 0
        %1834 = vmatprep.subr.bf16.mxu0 0
        %1835 = vmatpush1.bf16.msra.mxu0 0
        %1836 = vmatprep.subr.bf16.mxu0 0
        %1837 = vmatpush1.bf16.msra.mxu0 0
        %1838 = vmatprep.subr.bf16.mxu0 0
        %1839 = vmatpush1.bf16.msra.mxu0 0
        %1840 = vmatprep.subr.bf16.mxu0 0
        %1841 = vmatpush1.bf16.msra.mxu0 0
        %1842 = vmatprep.subr.bf16.mxu0 0
        %1843 = vmatpush1.bf16.msra.mxu0 0
        %1844 = vmatprep.subr.bf16.mxu0 0
        %1845 = vmatpush1.bf16.msra.mxu0 0
        %1846 = vmatprep.subr.bf16.mxu0 0
        %1847 = vmatpush1.bf16.msra.mxu0 0
        %1848 = vmatprep.mubr.bf16.mxu0 0
        %1849 = vmatmul.mubr.bf16.gmra.mrb[0].mxu0 %v1745
        %v1850 = vpop.f32.mrb[0].mxu0
        %v1851 = vadd.f32 0.0, %v1850
        %v1852 = vpop.f32.mrb[0].mxu0
        %v1853 = vpop.f32.mrb[0].mxu0
        %v1854 = vadd.f32 0.0, %v1853
        %v1855 = vpop.f32.mrb[0].mxu0
        %1856 = vmatprep.mubr.bf16.mxu0 0
        %1857 = vmatmul.mubr.bf16.gmra.mrb[0].mxu0 %v1747
        %v1858 = vpop.f32.mrb[0].mxu0
        %v1859 = vadd.f32 0.0, %v1858
        %v1860 = vpop.f32.mrb[0].mxu0
        %v1861 = vpop.f32.mrb[0].mxu0
        %v1862 = vadd.f32 0.0, %v1861
        %v1863 = vpop.f32.mrb[0].mxu0
        %1864 = vmatprep.mubr.bf16.mxu0 0
        %1865 = vmatmul.mubr.bf16.gmra.mrb[0].mxu0 %v1749
        %v1866 = vpop.f32.mrb[0].mxu0
        %v1867 = vadd.f32 0.0, %v1866
        %v1868 = vpop.f32.mrb[0].mxu0
        %v1869 = vpop.f32.mrb[0].mxu0
        %v1870 = vadd.f32 0.0, %v1869
        %v1871 = vpop.f32.mrb[0].mxu0
        %1872 = vmatprep.mubr.bf16.mxu0 0
        %1873 = vmatmul.mubr.bf16.gmra.mrb[0].mxu0 %v1751
        %v1874 = vpop.f32.mrb[0].mxu0
        %v1875 = vadd.f32 0.0, %v1874
        %v1876 = vpop.f32.mrb[0].mxu0
        %v1877 = vpop.f32.mrb[0].mxu0
        %v1878 = vadd.f32 0.0, %v1877
        %v1879 = vpop.f32.mrb[0].mxu0
        %1880 = vmatprep.mubr.bf16.mxu0 0
        %1881 = vmatmul.mubr.bf16.gmra.mrb[0].mxu0 %v1753
        %v1882 = vpop.f32.mrb[0].mxu0
        %v1883 = vadd.f32 0.0, %v1882
        %v1884 = vpop.f32.mrb[0].mxu0
        %v1885 = vpop.f32.mrb[0].mxu0
        %v1886 = vadd.f32 0.0, %v1885
        %v1887 = vpop.f32.mrb[0].mxu0
        %1888 = vmatprep.mubr.bf16.mxu0 0
        %1889 = vmatmul.mubr.bf16.gmra.mrb[0].mxu0 %v1755
        %v1890 = vpop.f32.mrb[0].mxu0
        %v1891 = vadd.f32 0.0, %v1890
        %v1892 = vpop.f32.mrb[0].mxu0
        %v1893 = vpop.f32.mrb[0].mxu0
        %v1894 = vadd.f32 0.0, %v1893
        %v1895 = vpop.f32.mrb[0].mxu0
        %1896 = vmatprep.mubr.bf16.mxu0 0
        %1897 = vmatmul.mubr.bf16.gmra.mrb[0].mxu0 %v1757
        %v1898 = vpop.f32.mrb[0].mxu0
        %v1899 = vadd.f32 0.0, %v1898
        %v1900 = vpop.f32.mrb[0].mxu0
        %v1901 = vpop.f32.mrb[0].mxu0
        %v1902 = vadd.f32 0.0, %v1901
        %v1903 = vpop.f32.mrb[0].mxu0
        %1904 = vmatprep.mubr.bf16.mxu0 0
        %1905 = vmatmul.mubr.bf16.gmra.mrb[0].mxu0 %v1759
        %v1906 = vpop.f32.mrb[0].mxu0
        %v1907 = vadd.f32 0.0, %v1906
        %v1908 = vpop.f32.mrb[0].mxu0
        %v1909 = vpop.f32.mrb[0].mxu0
        %v1910 = vadd.f32 0.0, %v1909
        %v1911 = vpop.f32.mrb[0].mxu0
        %1912 = vdwg.mxu0
        %v1913 = vadd.f32 %v1650, %v1851
        %v1914 = vadd.f32 %v1651, %v1854
        %v1915 = vadd.f32 %v1652, %v1859
        %v1916 = vadd.f32 %v1653, %v1862
        %v1917 = vadd.f32 %v1654, %v1867
        %v1918 = vadd.f32 %v1655, %v1870
        %v1919 = vadd.f32 %v1656, %v1875
        %v1920 = vadd.f32 %v1657, %v1878
        %v1921 = vadd.f32 %v1658, %v1883
        %v1922 = vadd.f32 %v1659, %v1886
        %v1923 = vadd.f32 %v1660, %v1891
        %v1924 = vadd.f32 %v1661, %v1894
        %v1925 = vadd.f32 %v1662, %v1899
        %v1926 = vadd.f32 %v1663, %v1902
        %v1927 = vadd.f32 %v1664, %v1907
        %v1928 = vadd.f32 %v1665, %v1910
        %v1929 = vld [vmem:[%s241 + $0x50] sm:$0x7]
        %s1930 = scalar_lea.vmem [#allocation4], 448
        %v1931 = vld [vmem:[%s1930] sm:$0xf]
        %v1932 = vld [vmem:[%s1930 + $0x4] sm:$0xf]
        %v1933 = vld [vmem:[%s1930 + $0x8] sm:$0xf]
        %v1934 = vld [vmem:[%s1930 + $0xc] sm:$0xf]
        %v1935 = vld [vmem:[%s1930 + $0x10] sm:$0xf]
        %v1936 = vld [vmem:[%s1930 + $0x14] sm:$0xf]
        %v1937 = vld [vmem:[%s1930 + $0x18] sm:$0xf]
        %v1938 = vld [vmem:[%s1930 + $0x1c] sm:$0xf]
        %v1939 = vld [vmem:[%s1930 + $0x20] sm:$0xf]
        %v1940 = vld [vmem:[%s1930 + $0x24] sm:$0xf]
        %v1941 = vld [vmem:[%s1930 + $0x28] sm:$0xf]
        %v1942 = vld [vmem:[%s1930 + $0x2c] sm:$0xf]
        %v1943 = vld [vmem:[%s1930 + $0x30] sm:$0xf]
        %v1944 = vld [vmem:[%s1930 + $0x34] sm:$0xf]
        %v1945 = vld [vmem:[%s1930 + $0x38] sm:$0xf]
        %v1946 = vld [vmem:[%s1930 + $0x3c] sm:$0xf]
        %v1948 = vunpack.c.l.b16 %v1929
        %v1949 = vpack.c.b16 %v1948, %v1948
        %vm1950 = vsmask.f32 5376
        %v1952 = vshrl.u32 %v1734, 16
        %v1954 = vrot.slane %v1952, 2
        %v1955 = vshll.u32 %v1734, 16
        %v1957 = vrot.slane %v1955, 3
        %v1958 = vor.u32 %v1954, %v1957
        %v1960 = vshrl.u32 %v1735, 16
        %v1962 = vrot.slane %v1960, 2
        %v1963 = vshll.u32 %v1735, 16
        %v1965 = vrot.slane %v1963, 3
        %v1966 = vor.u32 %v1962, %v1965
        %v1967 = vsel %vm1950, %v1958, %v1966
        %v1969 = vshrl.u32 %v1736, 16
        %v1971 = vrot.slane %v1969, 2
        %v1972 = vshll.u32 %v1736, 16
        %v1974 = vrot.slane %v1972, 3
        %v1975 = vor.u32 %v1971, %v1974
        %v1976 = vsel %vm1950, %v1966, %v1975
        %v1978 = vshrl.u32 %v1737, 16
        %v1980 = vrot.slane %v1978, 2
        %v1981 = vshll.u32 %v1737, 16
        %v1983 = vrot.slane %v1981, 3
        %v1984 = vor.u32 %v1980, %v1983
        %v1985 = vsel %vm1950, %v1975, %v1984
        %v1987 = vshrl.u32 %v1738, 16
        %v1989 = vrot.slane %v1987, 2
        %v1990 = vshll.u32 %v1738, 16
        %v1992 = vrot.slane %v1990, 3
        %v1993 = vor.u32 %v1989, %v1992
        %v1994 = vsel %vm1950, %v1984, %v1993
        %v1996 = vshrl.u32 %v1739, 16
        %v1998 = vrot.slane %v1996, 2
        %v1999 = vshll.u32 %v1739, 16
        %v2001 = vrot.slane %v1999, 3
        %v2002 = vor.u32 %v1998, %v2001
        %v2003 = vsel %vm1950, %v1993, %v2002
        %v2005 = vshrl.u32 %v1740, 16
        %v2007 = vrot.slane %v2005, 2
        %v2008 = vshll.u32 %v1740, 16
        %v2010 = vrot.slane %v2008, 3
        %v2011 = vor.u32 %v2007, %v2010
        %v2012 = vsel %vm1950, %v2002, %v2011
        %v2014 = vshrl.u32 %v1741, 16
        %v2016 = vrot.slane %v2014, 2
        %v2017 = vshll.u32 %v1741, 16
        %v2019 = vrot.slane %v2017, 3
        %v2020 = vor.u32 %v2016, %v2019
        %v2021 = vsel %vm1950, %v2011, %v2020
        %v2023 = vshrl.u32 %v1949, 16
        %v2025 = vrot.slane %v2023, 2
        %v2026 = vshll.u32 %v1949, 16
        %v2028 = vrot.slane %v2026, 3
        %v2029 = vor.u32 %v2025, %v2028
        %v2030 = vsel %vm1950, %v2020, %v2029
        %v2055 = vunpack.c.l.b16 %v1931
        %v2056 = vunpack.c.l.b16 %v1932
        %v2057 = vunpack.c.l.b16 %v1933
        %v2058 = vunpack.c.l.b16 %v1934
        %v2059 = vunpack.c.l.b16 %v1935
        %v2060 = vunpack.c.l.b16 %v1936
        %v2061 = vunpack.c.l.b16 %v1937
        %v2062 = vunpack.c.l.b16 %v1938
        %v2063 = vunpack.c.l.b16 %v1939
        %v2064 = vunpack.c.l.b16 %v1940
        %v2065 = vunpack.c.l.b16 %v1941
        %v2066 = vunpack.c.l.b16 %v1942
        %v2067 = vunpack.c.l.b16 %v1943
        %v2068 = vunpack.c.l.b16 %v1944
        %v2069 = vunpack.c.l.b16 %v1945
        %v2070 = vunpack.c.l.b16 %v1946
        %v2071 = vpack.c.b16 %v2056, %v2055
        %v2072 = vpack.c.b16 %v2058, %v2057
        %v2073 = vpack.c.b16 %v2060, %v2059
        %v2074 = vpack.c.b16 %v2062, %v2061
        %v2075 = vpack.c.b16 %v2064, %v2063
        %v2076 = vpack.c.b16 %v2066, %v2065
        %v2077 = vpack.c.b16 %v2068, %v2067
        %v2078 = vpack.c.b16 %v2070, %v2069
        %2087 = vmatprep.subr.bf16.mxu0 0
        %2088 = vmatpush1.bf16.msra.mxu0 %v2071
        %2089 = vmatprep.subr.bf16.mxu0 0
        %2090 = vmatpush1.bf16.msra.mxu0 %v2072
        %2091 = vmatprep.subr.bf16.mxu0 0
        %2092 = vmatpush1.bf16.msra.mxu0 %v2073
        %2093 = vmatprep.subr.bf16.mxu0 0
        %2094 = vmatpush1.bf16.msra.mxu0 %v2074
        %2095 = vmatprep.subr.bf16.mxu0 0
        %2096 = vmatpush1.bf16.msra.mxu0 %v2075
        %2097 = vmatprep.subr.bf16.mxu0 0
        %2098 = vmatpush1.bf16.msra.mxu0 %v2076
        %2099 = vmatprep.subr.bf16.mxu0 0
        %2100 = vmatpush1.bf16.msra.mxu0 %v2077
        %2101 = vmatprep.subr.bf16.mxu0 0
        %2102 = vmatpush1.bf16.msra.mxu0 %v2078
        %2103 = vmatprep.subr.bf16.mxu0 0
        %2104 = vmatpush1.bf16.msra.mxu0 0
        %2105 = vmatprep.subr.bf16.mxu0 0
        %2106 = vmatpush1.bf16.msra.mxu0 0
        %2107 = vmatprep.subr.bf16.mxu0 0
        %2108 = vmatpush1.bf16.msra.mxu0 0
        %2109 = vmatprep.subr.bf16.mxu0 0
        %2110 = vmatpush1.bf16.msra.mxu0 0
        %2111 = vmatprep.subr.bf16.mxu0 0
        %2112 = vmatpush1.bf16.msra.mxu0 0
        %2113 = vmatprep.subr.bf16.mxu0 0
        %2114 = vmatpush1.bf16.msra.mxu0 0
        %2115 = vmatprep.subr.bf16.mxu0 0
        %2116 = vmatpush1.bf16.msra.mxu0 0
        %2117 = vmatprep.subr.bf16.mxu0 0
        %2118 = vmatpush1.bf16.msra.mxu0 0
        %2119 = vmatprep.mubr.bf16.mxu0 0
        %2120 = vmatmul.mubr.bf16.gmra.mrb[0].mxu0 %v1967
        %v2121 = vpop.f32.mrb[0].mxu0
        %v2122 = vadd.f32 0.0, %v2121
        %v2123 = vpop.f32.mrb[0].mxu0
        %v2124 = vpop.f32.mrb[0].mxu0
        %v2125 = vadd.f32 0.0, %v2124
        %v2126 = vpop.f32.mrb[0].mxu0
        %2127 = vmatprep.mubr.bf16.mxu0 0
        %2128 = vmatmul.mubr.bf16.gmra.mrb[0].mxu0 %v1976
        %v2129 = vpop.f32.mrb[0].mxu0
        %v2130 = vadd.f32 0.0, %v2129
        %v2131 = vpop.f32.mrb[0].mxu0
        %v2132 = vpop.f32.mrb[0].mxu0
        %v2133 = vadd.f32 0.0, %v2132
        %v2134 = vpop.f32.mrb[0].mxu0
        %2135 = vmatprep.mubr.bf16.mxu0 0
        %2136 = vmatmul.mubr.bf16.gmra.mrb[0].mxu0 %v1985
        %v2137 = vpop.f32.mrb[0].mxu0
        %v2138 = vadd.f32 0.0, %v2137
        %v2139 = vpop.f32.mrb[0].mxu0
        %v2140 = vpop.f32.mrb[0].mxu0
        %v2141 = vadd.f32 0.0, %v2140
        %v2142 = vpop.f32.mrb[0].mxu0
        %2143 = vmatprep.mubr.bf16.mxu0 0
        %2144 = vmatmul.mubr.bf16.gmra.mrb[0].mxu0 %v1994
        %v2145 = vpop.f32.mrb[0].mxu0
        %v2146 = vadd.f32 0.0, %v2145
        %v2147 = vpop.f32.mrb[0].mxu0
        %v2148 = vpop.f32.mrb[0].mxu0
        %v2149 = vadd.f32 0.0, %v2148
        %v2150 = vpop.f32.mrb[0].mxu0
        %2151 = vmatprep.mubr.bf16.mxu0 0
        %2152 = vmatmul.mubr.bf16.gmra.mrb[0].mxu0 %v2003
        %v2153 = vpop.f32.mrb[0].mxu0
        %v2154 = vadd.f32 0.0, %v2153
        %v2155 = vpop.f32.mrb[0].mxu0
        %v2156 = vpop.f32.mrb[0].mxu0
        %v2157 = vadd.f32 0.0, %v2156
        %v2158 = vpop.f32.mrb[0].mxu0
        %2159 = vmatprep.mubr.bf16.mxu0 0
        %2160 = vmatmul.mubr.bf16.gmra.mrb[0].mxu0 %v2012
        %v2161 = vpop.f32.mrb[0].mxu0
        %v2162 = vadd.f32 0.0, %v2161
        %v2163 = vpop.f32.mrb[0].mxu0
        %v2164 = vpop.f32.mrb[0].mxu0
        %v2165 = vadd.f32 0.0, %v2164
        %v2166 = vpop.f32.mrb[0].mxu0
        %2167 = vmatprep.mubr.bf16.mxu0 0
        %2168 = vmatmul.mubr.bf16.gmra.mrb[0].mxu0 %v2021
        %v2169 = vpop.f32.mrb[0].mxu0
        %v2170 = vadd.f32 0.0, %v2169
        %v2171 = vpop.f32.mrb[0].mxu0
        %v2172 = vpop.f32.mrb[0].mxu0
        %v2173 = vadd.f32 0.0, %v2172
        %v2174 = vpop.f32.mrb[0].mxu0
        %2175 = vmatprep.mubr.bf16.mxu0 0
        %2176 = vmatmul.mubr.bf16.gmra.mrb[0].mxu0 %v2030
        %v2177 = vpop.f32.mrb[0].mxu0
        %v2178 = vadd.f32 0.0, %v2177
        %v2179 = vpop.f32.mrb[0].mxu0
        %v2180 = vpop.f32.mrb[0].mxu0
        %v2181 = vadd.f32 0.0, %v2180
        %v2182 = vpop.f32.mrb[0].mxu0
        %2183 = vdwg.mxu0
        %v2184 = vadd.f32 %v1913, %v2122
        %v2185 = vadd.f32 %v1914, %v2125
        %v2186 = vadd.f32 %v1915, %v2130
        %v2187 = vadd.f32 %v1916, %v2133
        %v2188 = vadd.f32 %v1917, %v2138
        %v2189 = vadd.f32 %v1918, %v2141
        %v2190 = vadd.f32 %v1919, %v2146
        %v2191 = vadd.f32 %v1920, %v2149
        %v2192 = vadd.f32 %v1921, %v2154
        %v2193 = vadd.f32 %v1922, %v2157
        %v2194 = vadd.f32 %v1923, %v2162
        %v2195 = vadd.f32 %v1924, %v2165
        %v2196 = vadd.f32 %v1925, %v2170
        %v2197 = vadd.f32 %v1926, %v2173
        %v2198 = vadd.f32 %v1927, %v2178
        %v2199 = vadd.f32 %v1928, %v2181
        %v2200 = vld [vmem:[%s241 + $0x10] sm:$0x8]
        %s2201 = scalar_lea.vmem [#allocation4], 512
        %v2202 = vld [vmem:[%s2201] sm:$0xf]
        %v2203 = vld [vmem:[%s2201 + $0x4] sm:$0xf]
        %v2204 = vld [vmem:[%s2201 + $0x8] sm:$0xf]
        %v2205 = vld [vmem:[%s2201 + $0xc] sm:$0xf]
        %v2206 = vld [vmem:[%s2201 + $0x10] sm:$0xf]
        %v2207 = vld [vmem:[%s2201 + $0x14] sm:$0xf]
        %v2208 = vld [vmem:[%s2201 + $0x18] sm:$0xf]
        %v2209 = vld [vmem:[%s2201 + $0x1c] sm:$0xf]
        %v2210 = vld [vmem:[%s2201 + $0x20] sm:$0xf]
        %v2211 = vld [vmem:[%s2201 + $0x24] sm:$0xf]
        %v2212 = vld [vmem:[%s2201 + $0x28] sm:$0xf]
        %v2213 = vld [vmem:[%s2201 + $0x2c] sm:$0xf]
        %v2214 = vld [vmem:[%s2201 + $0x30] sm:$0xf]
        %v2215 = vld [vmem:[%s2201 + $0x34] sm:$0xf]
        %v2216 = vld [vmem:[%s2201 + $0x38] sm:$0xf]
        %v2217 = vld [vmem:[%s2201 + $0x3c] sm:$0xf]
        %v2219 = vunpack.c.l.b16 %v2200
        %v2220 = vpack.c.b16 %v1718, %v2219
        %vm2221 = vcmask 1044480
        %v2222 = vrot.slane %v2220, 3
        %v2223 = vrot.slane %v1735, 3
        %v2224 = vsel %vm2221, %v2222, %v2223
        %v2225 = vrot.slane %v1736, 3
        %v2226 = vsel %vm2221, %v2223, %v2225
        %v2227 = vrot.slane %v1737, 3
        %v2228 = vsel %vm2221, %v2225, %v2227
        %v2229 = vrot.slane %v1738, 3
        %v2230 = vsel %vm2221, %v2227, %v2229
        %v2231 = vrot.slane %v1739, 3
        %v2232 = vsel %vm2221, %v2229, %v2231
        %v2233 = vrot.slane %v1740, 3
        %v2234 = vsel %vm2221, %v2231, %v2233
        %v2235 = vrot.slane %v1741, 3
        %v2236 = vsel %vm2221, %v2233, %v2235
        %v2237 = vrot.slane %v1949, 3
        %v2238 = vsel %vm2221, %v2235, %v2237
        %v2263 = vunpack.c.l.b16 %v2202
        %v2264 = vunpack.c.l.b16 %v2203
        %v2265 = vunpack.c.l.b16 %v2204
        %v2266 = vunpack.c.l.b16 %v2205
        %v2267 = vunpack.c.l.b16 %v2206
        %v2268 = vunpack.c.l.b16 %v2207
        %v2269 = vunpack.c.l.b16 %v2208
        %v2270 = vunpack.c.l.b16 %v2209
        %v2271 = vunpack.c.l.b16 %v2210
        %v2272 = vunpack.c.l.b16 %v2211
        %v2273 = vunpack.c.l.b16 %v2212
        %v2274 = vunpack.c.l.b16 %v2213
        %v2275 = vunpack.c.l.b16 %v2214
        %v2276 = vunpack.c.l.b16 %v2215
        %v2277 = vunpack.c.l.b16 %v2216
        %v2278 = vunpack.c.l.b16 %v2217
        %v2279 = vpack.c.b16 %v2264, %v2263
        %v2280 = vpack.c.b16 %v2266, %v2265
        %v2281 = vpack.c.b16 %v2268, %v2267
        %v2282 = vpack.c.b16 %v2270, %v2269
        %v2283 = vpack.c.b16 %v2272, %v2271
        %v2284 = vpack.c.b16 %v2274, %v2273
        %v2285 = vpack.c.b16 %v2276, %v2275
        %v2286 = vpack.c.b16 %v2278, %v2277
        %2295 = vmatprep.subr.bf16.mxu0 0
        %2296 = vmatpush1.bf16.msra.mxu0 %v2279
        %2297 = vmatprep.subr.bf16.mxu0 0
        %2298 = vmatpush1.bf16.msra.mxu0 %v2280
        %2299 = vmatprep.subr.bf16.mxu0 0
        %2300 = vmatpush1.bf16.msra.mxu0 %v2281
        %2301 = vmatprep.subr.bf16.mxu0 0
        %2302 = vmatpush1.bf16.msra.mxu0 %v2282
        %2303 = vmatprep.subr.bf16.mxu0 0
        %2304 = vmatpush1.bf16.msra.mxu0 %v2283
        %2305 = vmatprep.subr.bf16.mxu0 0
        %2306 = vmatpush1.bf16.msra.mxu0 %v2284
        %2307 = vmatprep.subr.bf16.mxu0 0
        %2308 = vmatpush1.bf16.msra.mxu0 %v2285
        %2309 = vmatprep.subr.bf16.mxu0 0
        %2310 = vmatpush1.bf16.msra.mxu0 %v2286
        %2311 = vmatprep.subr.bf16.mxu0 0
        %2312 = vmatpush1.bf16.msra.mxu0 0
        %2313 = vmatprep.subr.bf16.mxu0 0
        %2314 = vmatpush1.bf16.msra.mxu0 0
        %2315 = vmatprep.subr.bf16.mxu0 0
        %2316 = vmatpush1.bf16.msra.mxu0 0
        %2317 = vmatprep.subr.bf16.mxu0 0
        %2318 = vmatpush1.bf16.msra.mxu0 0
        %2319 = vmatprep.subr.bf16.mxu0 0
        %2320 = vmatpush1.bf16.msra.mxu0 0
        %2321 = vmatprep.subr.bf16.mxu0 0
        %2322 = vmatpush1.bf16.msra.mxu0 0
        %2323 = vmatprep.subr.bf16.mxu0 0
        %2324 = vmatpush1.bf16.msra.mxu0 0
        %2325 = vmatprep.subr.bf16.mxu0 0
        %2326 = vmatpush1.bf16.msra.mxu0 0
        %2327 = vmatprep.mubr.bf16.mxu0 0
        %2328 = vmatmul.mubr.bf16.gmra.mrb[0].mxu0 %v2224
        %v2329 = vpop.f32.mrb[0].mxu0
        %v2330 = vadd.f32 0.0, %v2329
        %v2331 = vpop.f32.mrb[0].mxu0
        %v2332 = vpop.f32.mrb[0].mxu0
        %v2333 = vadd.f32 0.0, %v2332
        %v2334 = vpop.f32.mrb[0].mxu0
        %2335 = vmatprep.mubr.bf16.mxu0 0
        %2336 = vmatmul.mubr.bf16.gmra.mrb[0].mxu0 %v2226
        %v2337 = vpop.f32.mrb[0].mxu0
        %v2338 = vadd.f32 0.0, %v2337
        %v2339 = vpop.f32.mrb[0].mxu0
        %v2340 = vpop.f32.mrb[0].mxu0
        %v2341 = vadd.f32 0.0, %v2340
        %v2342 = vpop.f32.mrb[0].mxu0
        %2343 = vmatprep.mubr.bf16.mxu0 0
        %2344 = vmatmul.mubr.bf16.gmra.mrb[0].mxu0 %v2228
        %v2345 = vpop.f32.mrb[0].mxu0
        %v2346 = vadd.f32 0.0, %v2345
        %v2347 = vpop.f32.mrb[0].mxu0
        %v2348 = vpop.f32.mrb[0].mxu0
        %v2349 = vadd.f32 0.0, %v2348
        %v2350 = vpop.f32.mrb[0].mxu0
        %2351 = vmatprep.mubr.bf16.mxu0 0
        %2352 = vmatmul.mubr.bf16.gmra.mrb[0].mxu0 %v2230
        %v2353 = vpop.f32.mrb[0].mxu0
        %v2354 = vadd.f32 0.0, %v2353
        %v2355 = vpop.f32.mrb[0].mxu0
        %v2356 = vpop.f32.mrb[0].mxu0
        %v2357 = vadd.f32 0.0, %v2356
        %v2358 = vpop.f32.mrb[0].mxu0
        %2359 = vmatprep.mubr.bf16.mxu0 0
        %2360 = vmatmul.mubr.bf16.gmra.mrb[0].mxu0 %v2232
        %v2361 = vpop.f32.mrb[0].mxu0
        %v2362 = vadd.f32 0.0, %v2361
        %v2363 = vpop.f32.mrb[0].mxu0
        %v2364 = vpop.f32.mrb[0].mxu0
        %v2365 = vadd.f32 0.0, %v2364
        %v2366 = vpop.f32.mrb[0].mxu0
        %2367 = vmatprep.mubr.bf16.mxu0 0
        %2368 = vmatmul.mubr.bf16.gmra.mrb[0].mxu0 %v2234
        %v2369 = vpop.f32.mrb[0].mxu0
        %v2370 = vadd.f32 0.0, %v2369
        %v2371 = vpop.f32.mrb[0].mxu0
        %v2372 = vpop.f32.mrb[0].mxu0
        %v2373 = vadd.f32 0.0, %v2372
        %v2374 = vpop.f32.mrb[0].mxu0
        %2375 = vmatprep.mubr.bf16.mxu0 0
        %2376 = vmatmul.mubr.bf16.gmra.mrb[0].mxu0 %v2236
        %v2377 = vpop.f32.mrb[0].mxu0
        %v2378 = vadd.f32 0.0, %v2377
        %v2379 = vpop.f32.mrb[0].mxu0
        %v2380 = vpop.f32.mrb[0].mxu0
        %v2381 = vadd.f32 0.0, %v2380
        %v2382 = vpop.f32.mrb[0].mxu0
        %2383 = vmatprep.mubr.bf16.mxu0 0
        %2384 = vmatmul.mubr.bf16.gmra.mrb[0].mxu0 %v2238
        %v2385 = vpop.f32.mrb[0].mxu0
        %v2386 = vadd.f32 0.0, %v2385
        %v2387 = vpop.f32.mrb[0].mxu0
        %v2388 = vpop.f32.mrb[0].mxu0
        %v2389 = vadd.f32 0.0, %v2388
        %v2390 = vpop.f32.mrb[0].mxu0
        %2391 = vdwg.mxu0
        %v2392 = vadd.f32 %v2184, %v2330
        %v2393 = vadd.f32 %v2185, %v2333
        %v2394 = vadd.f32 %v2186, %v2338
        %v2395 = vadd.f32 %v2187, %v2341
        %v2396 = vadd.f32 %v2188, %v2346
        %v2397 = vadd.f32 %v2189, %v2349
        %v2398 = vadd.f32 %v2190, %v2354
        %v2399 = vadd.f32 %v2191, %v2357
        %v2400 = vadd.f32 %v2192, %v2362
        %v2401 = vadd.f32 %v2193, %v2365
        %v2402 = vadd.f32 %v2194, %v2370
        %v2403 = vadd.f32 %v2195, %v2373
        %v2404 = vadd.f32 %v2196, %v2378
        %v2405 = vadd.f32 %v2197, %v2381
        %v2406 = vadd.f32 %v2198, %v2386
        %v2407 = vadd.f32 %v2199, %v2389
        %v2408 = vld [vmem:[%s2] sm:$0x1]
        %v2410 = vlaneseq
        %v2411 = vshrl.u32 %v2410, 7
        %v2412 = vsub.s32 0, %v2411
        %v2413 = vrot.slane %v2408, %v2412
        %v2415 = vmul.f32 %v2392, %v2413
        %v2416 = vmul.f32 %v2393, %v2413
        %v2417 = vmul.f32 %v2394, %v2413
        %v2418 = vmul.f32 %v2395, %v2413
        %v2419 = vmul.f32 %v2396, %v2413
        %v2420 = vmul.f32 %v2397, %v2413
        %v2421 = vmul.f32 %v2398, %v2413
        %v2422 = vmul.f32 %v2399, %v2413
        %v2423 = vmul.f32 %v2400, %v2413
        %v2424 = vmul.f32 %v2401, %v2413
        %v2425 = vmul.f32 %v2402, %v2413
        %v2426 = vmul.f32 %v2403, %v2413
        %v2427 = vmul.f32 %v2404, %v2413
        %v2428 = vmul.f32 %v2405, %v2413
        %v2429 = vmul.f32 %v2406, %v2413
        %v2430 = vmul.f32 %v2407, %v2413
        %v2431 = vld [vmem:[%s3] sm:$0x1]
        %v2433 = vlaneseq
        %v2434 = vshrl.u32 %v2433, 7
        %v2435 = vsub.s32 0, %v2434
        %v2436 = vrot.slane %v2431, %v2435
        %v2438 = vadd.f32 %v2415, %v2436
        %v2439 = vadd.f32 %v2416, %v2436
        %v2440 = vadd.f32 %v2417, %v2436
        %v2441 = vadd.f32 %v2418, %v2436
        %v2442 = vadd.f32 %v2419, %v2436
        %v2443 = vadd.f32 %v2420, %v2436
        %v2444 = vadd.f32 %v2421, %v2436
        %v2445 = vadd.f32 %v2422, %v2436
        %v2446 = vadd.f32 %v2423, %v2436
        %v2447 = vadd.f32 %v2424, %v2436
        %v2448 = vadd.f32 %v2425, %v2436
        %v2449 = vadd.f32 %v2426, %v2436
        %v2450 = vadd.f32 %v2427, %v2436
        %v2451 = vadd.f32 %v2428, %v2436
        %v2452 = vadd.f32 %v2429, %v2436
        %v2453 = vadd.f32 %v2430, %v2436
        %vm2454 = vcmp.gt.f32.partialorder %v2438, 0.0
        %vm2455 = vcmp.gt.f32.partialorder %v2439, 0.0
        %vm2456 = vcmp.gt.f32.partialorder %v2440, 0.0
        %vm2457 = vcmp.gt.f32.partialorder %v2441, 0.0
        %vm2458 = vcmp.gt.f32.partialorder %v2442, 0.0
        %vm2459 = vcmp.gt.f32.partialorder %v2443, 0.0
        %vm2460 = vcmp.gt.f32.partialorder %v2444, 0.0
        %vm2461 = vcmp.gt.f32.partialorder %v2445, 0.0
        %vm2462 = vcmp.gt.f32.partialorder %v2446, 0.0
        %vm2463 = vcmp.gt.f32.partialorder %v2447, 0.0
        %vm2464 = vcmp.gt.f32.partialorder %v2448, 0.0
        %vm2465 = vcmp.gt.f32.partialorder %v2449, 0.0
        %vm2466 = vcmp.gt.f32.partialorder %v2450, 0.0
        %vm2467 = vcmp.gt.f32.partialorder %v2451, 0.0
        %vm2468 = vcmp.gt.f32.partialorder %v2452, 0.0
        %vm2469 = vcmp.gt.f32.partialorder %v2453, 0.0
        %v2470 = vmul.f32 %v2438, 0.1
        %v2471 = vmul.f32 %v2439, 0.1
        %v2472 = vmul.f32 %v2440, 0.1
        %v2473 = vmul.f32 %v2441, 0.1
        %v2474 = vmul.f32 %v2442, 0.1
        %v2475 = vmul.f32 %v2443, 0.1
        %v2476 = vmul.f32 %v2444, 0.1
        %v2477 = vmul.f32 %v2445, 0.1
        %v2478 = vmul.f32 %v2446, 0.1
        %v2479 = vmul.f32 %v2447, 0.1
        %v2480 = vmul.f32 %v2448, 0.1
        %v2481 = vmul.f32 %v2449, 0.1
        %v2482 = vmul.f32 %v2450, 0.1
        %v2483 = vmul.f32 %v2451, 0.1
        %v2484 = vmul.f32 %v2452, 0.1
        %v2485 = vmul.f32 %v2453, 0.1
        %v2486 = vsel %vm2454, %v2438, %v2470
        %v2487 = vsel %vm2455, %v2439, %v2471
        %v2488 = vsel %vm2456, %v2440, %v2472
        %v2489 = vsel %vm2457, %v2441, %v2473
        %v2490 = vsel %vm2458, %v2442, %v2474
        %v2491 = vsel %vm2459, %v2443, %v2475
        %v2492 = vsel %vm2460, %v2444, %v2476
        %v2493 = vsel %vm2461, %v2445, %v2477
        %v2494 = vsel %vm2462, %v2446, %v2478
        %v2495 = vsel %vm2463, %v2447, %v2479
        %v2496 = vsel %vm2464, %v2448, %v2480
        %v2497 = vsel %vm2465, %v2449, %v2481
        %v2498 = vsel %vm2466, %v2450, %v2482
        %v2499 = vsel %vm2467, %v2451, %v2483
        %v2500 = vsel %vm2468, %v2452, %v2484
        %v2501 = vsel %vm2469, %v2453, %v2485
        %v2502 = vpack.c.bf16 %v2487, %v2486
        %v2503 = vpack.c.bf16 %v2489, %v2488
        %v2504 = vpack.c.bf16 %v2491, %v2490
        %v2505 = vpack.c.bf16 %v2493, %v2492
        %v2506 = vpack.c.bf16 %v2495, %v2494
        %v2507 = vpack.c.bf16 %v2497, %v2496
        %v2508 = vpack.c.bf16 %v2499, %v2498
        %v2509 = vpack.c.bf16 %v2501, %v2500
        %v2518 = vunpack.c.l.b16 %v2502
        %v2519 = vunpack.c.h.b16 %v2502
        %v2520 = vunpack.c.l.b16 %v2503
        %v2521 = vunpack.c.h.b16 %v2503
        %v2522 = vunpack.c.l.b16 %v2504
        %v2523 = vunpack.c.h.b16 %v2504
        %v2524 = vunpack.c.l.b16 %v2505
        %v2525 = vunpack.c.h.b16 %v2505
        %v2526 = vunpack.c.l.b16 %v2506
        %v2527 = vunpack.c.h.b16 %v2506
        %v2528 = vunpack.c.l.b16 %v2507
        %v2529 = vunpack.c.h.b16 %v2507
        %v2530 = vunpack.c.l.b16 %v2508
        %v2531 = vunpack.c.h.b16 %v2508
        %v2532 = vunpack.c.l.b16 %v2509
        %v2533 = vunpack.c.h.b16 %v2509
        %v2534 = vpack.c.b16 %v2518, %v2518
        %v2535 = vpack.c.b16 %v2519, %v2519
        %v2536 = vpack.c.b16 %v2520, %v2520
        %v2537 = vpack.c.b16 %v2521, %v2521
        %v2538 = vpack.c.b16 %v2522, %v2522
        %v2539 = vpack.c.b16 %v2523, %v2523
        %v2540 = vpack.c.b16 %v2524, %v2524
        %v2541 = vpack.c.b16 %v2525, %v2525
        %v2542 = vpack.c.b16 %v2526, %v2526
        %v2543 = vpack.c.b16 %v2527, %v2527
        %v2544 = vpack.c.b16 %v2528, %v2528
        %v2545 = vpack.c.b16 %v2529, %v2529
        %v2546 = vpack.c.b16 %v2530, %v2530
        %v2547 = vpack.c.b16 %v2531, %v2531
        %v2548 = vpack.c.b16 %v2532, %v2532
        %v2549 = vpack.c.b16 %v2533, %v2533
        %2566 = vst [vmem:[%s178] sm:$0xf] %v2534
        %2567 = vst [vmem:[%s178 + $0x4] sm:$0xf] %v2535
        %2568 = vst [vmem:[%s178 + $0x8] sm:$0xf] %v2536
        %2569 = vst [vmem:[%s178 + $0xc] sm:$0xf] %v2537
        %2570 = vst [vmem:[%s178 + $0x10] sm:$0xf] %v2538
        %2571 = vst [vmem:[%s178 + $0x14] sm:$0xf] %v2539
        %2572 = vst [vmem:[%s178 + $0x18] sm:$0xf] %v2540
        %2573 = vst [vmem:[%s178 + $0x1c] sm:$0xf] %v2541
        %2574 = vst [vmem:[%s178 + $0x20] sm:$0xf] %v2542
        %2575 = vst [vmem:[%s178 + $0x24] sm:$0xf] %v2543
        %2576 = vst [vmem:[%s178 + $0x28] sm:$0xf] %v2544
        %2577 = vst [vmem:[%s178 + $0x2c] sm:$0xf] %v2545
        %2578 = vst [vmem:[%s178 + $0x30] sm:$0xf] %v2546
        %2579 = vst [vmem:[%s178 + $0x34] sm:$0xf] %v2547
        %2580 = vst [vmem:[%s178 + $0x38] sm:$0xf] %v2548
        %2581 = vst [vmem:[%s178 + $0x3c] sm:$0xf] %v2549
        %s2582 = sand.u32 %s104, 1
        %s2583 = scalar_lea.sflag [#allocation6], %s2582
        %s2584 = sand.u32 %s104, 1
        %s2585 = smul.addr %s2584, 64
        %s2586 = scalar_lea.vmem [#allocation7], %s2585
        // Predicated region
        $region53: #{tpu_custom_call.1} parent=31 // pred_check
          %p2587 = pneg %p114
        $region54: #{tpu_custom_call.1} parent=31 // pred_check_branch
          %2589 = sbr.rel (%p2587) target = $region56
        $region55: #{tpu_custom_call.1} parent=31 // pred_region
          %s2590 = smul.u32 16, %s24
          %s2592 = ssub.s32 1024, 1024
          %2593 = vsyncadd %s2583, %s2592
          %s2594 = smul.addr %s23, 48
          %s2595 = sadd.s32 %s2590, %s2594
          %s2596 = smul.addr %s2595, 64
          %s2597 = scalar_lea.hbm %s4, %s2596
          %s2598 = sshll.u32 %s2586, 4
          %s2599 = int_to_ptr.vmem [resolvable:$true] %s2598
          %2604 = dma.vmem_to_hbm [thread:$0]  %s2599, 1024, %s2597, %s2583, 64, 64, 4
        $region56: #{tpu_custom_call.1} parent=31 // pred_fallthru
          _
      $region32: #{tpu_custom_call.1} parent=5 // pred_fallthru
        _
      %p2605 = scmp.le.s32.totalorder 2, %s14
      // Predicated region
      $region57: #{tpu_custom_call.1} parent=5 // pred_check
        %p2606 = pneg %p2605
      $region58: #{tpu_custom_call.1} parent=5 // pred_check_branch
        %2608 = sbr.rel (%p2606) target = $region60
      $region59: #{tpu_custom_call.1} parent=5 // pred_region
        %s2609 = ssub.s32 %s14, 2
        // Predicated region
        $region61: #{tpu_custom_call.1} parent=59 // pred_check
          %p2610 = pneg %p120
        $region62: #{tpu_custom_call.1} parent=59 // pred_check_branch
          %2612 = sbr.rel (%p2610) target = $region64
        $region63: #{tpu_custom_call.1} parent=59 // pred_region
          %s2613 = sand.u32 %s105, 1
          %s2614 = scalar_lea.sflag [#allocation6], %s2613
          %s2615 = sand.u32 %s105, 1
          %s2616 = smul.addr %s2615, 64
          %s2617 = scalar_lea.vmem [#allocation7], %s2616
          %2618 = dma.done %s2614, 1024
        $region64: #{tpu_custom_call.1} parent=59 // pred_fallthru
          _
      $region60: #{tpu_custom_call.1} parent=5 // pred_fallthru
        _
    $region6: #{tpu_custom_call.1} parent=1 // loop_footer
      %s18 = sadd.s32 1, %s14
    $region7: #{tpu_custom_call.1} parent=1 // loop_footer_branch
      %13 = sbr.rel target = $region3
    $region8: #{tpu_custom_call.1} parent=1 // loop_exit
      _
    %2619 = vsyncpa [#allocation5], 1
    %s2620 = scalar_lea.sflag [#allocation5], 1
    %2621 = vsyncpa %s2620, 1
    %2622 = vsyncpa [#allocation6], 1
    %s2623 = scalar_lea.sflag [#allocation6], 1
    %2624 = vsyncpa %s2623, 1
  %2625 = vsyncmov [#allocation3]
  %s2626 = vpop.sfrf %2625
  %p2627 = scmp.eq.s32.totalorder %s2626, 0
  %p2628 = pneg %p2627
  %2630 = shalt.err (%p2628)
  %s2631 = scalar_lea.sflag [#allocation3], 1
  %2632 = vsyncmov %s2631
  %s2633 = vpop.sfrf %2632
  %p2634 = scmp.eq.s32.totalorder %s2633, 0
  %p2635 = pneg %p2634
  %2637 = shalt.err (%p2635)

</llo_original>
